<compile_context>
chip_gen: v7x
topology: tpu7x:2x2x1
jax: 0.10.0
libtpu: 0.0.40
codegen_flags: <defaults>
</compile_context>

<pallas_src>
import functools

import jax
import jax.numpy as jnp
from jax.experimental import pallas as pl
from jax.experimental.pallas import tpu as pltpu

LANE = 128
SUBLANE = 8


def _round_up(n, m):
    return ((n + m - 1) // m) * m


# ----------------------------------------------------------------------------
# Kernel: one (batch_block, TT-timestep) chunk per grid step
# ----------------------------------------------------------------------------
def gru_chunk_kernel(
    x_ref, h0_ref,                       # activations
    ln_x_ref, ln_h_ref,                  # packed LayerNorm params: row0=gamma, row1=beta
    w_h_ir_ref, w_x_irc_ref, b_irc_ref,  # fused gate weights / biases
    w_h_c_ref,                           # candidate h-part weight
    wy_ref, by_ref,                      # output projection
    y_ref, h_out_ref,                    # outputs (h_out is the resident carry)
    h_hist_ref,                          # VMEM scratch: per-step h for deferred y-proj
    *, in_dim, hidden_dim, seq_len, tt,
):
    tc = pl.program_id(1)
    bb, hp = h_out_ref.shape
    ip = x_ref.shape[-1]
    op = y_ref.shape[-1]
    eps = jnp.float32(1e-5)

    # Hidden state lives in the resident h output block (constant block index
    # over the time axis): init once, read at chunk start, store at chunk end.
    @pl.when(tc == 0)
    def _():
        h_out_ref[...] = h0_ref[...]

    h = h_out_ref[...]

    # Hoist weight / LN-param reads out of the per-step loop.
    g_x, b_x = ln_x_ref[0:1], ln_x_ref[1:2]
    g_h, b_h = ln_h_ref[0:1], ln_h_ref[1:2]
    w_ir = w_h_ir_ref[...]
    w_c = w_h_c_ref[...]

    # ---- chunk-hoisted input-side work (not on the recurrence chain) --------
    # One-pass LN stats (var = E[x^2] - mu^2); padded lanes of x and of
    # gamma/beta are zero so dividing by the true width is exact.
    inv_in = jnp.float32(1.0 / in_dim)
    x2 = x_ref[...].reshape(tt * bb, ip)
    mu_x = jnp.sum(x2, axis=-1, keepdims=True) * inv_in
    var_x = jnp.sum(x2 * x2, axis=-1, keepdims=True) * inv_in - mu_x * mu_x
    xn = (x2 - mu_x) * jax.lax.rsqrt(var_x + eps) * g_x + b_x
    xg_all = (jnp.dot(xn.astype(jnp.bfloat16), w_x_irc_ref[...],
                      preferred_element_type=jnp.float32) + b_irc_ref[...])

    inv_hd = jnp.float32(1.0 / hidden_dim)
    ragged = (seq_len % tt) != 0   # trace-time: only emit tail masking if needed

    for s in range(tt):
        xg = xg_all[s * bb:(s + 1) * bb]

        # LayerNorm of the carried state (padded lanes of h stay zero).
        mu_h = jnp.sum(h, axis=-1, keepdims=True) * inv_hd
        var_h = jnp.sum(h * h, axis=-1, keepdims=True) * inv_hd - mu_h * mu_h
        hn = (h - mu_h) * jax.lax.rsqrt(var_h + eps) * g_h + b_h

        # Recurrent matmuls (bf16 operands, f32 MXU accumulation).
        ir = jnp.dot(hn.astype(jnp.bfloat16), w_ir,
                     preferred_element_type=jnp.float32)
        i = jax.nn.sigmoid(xg[:, :hp] + ir[:, :hp])
        r = jax.nn.sigmoid(xg[:, hp:2 * hp] + ir[:, hp:2 * hp])

        c_pre = (jnp.dot((r * hn).astype(jnp.bfloat16), w_c,
                         preferred_element_type=jnp.float32) + xg[:, 2 * hp:])
        h_cand = jnp.tanh(c_pre)

        # h = (1-i)*hn + i*h_cand, rewritten to save one VALU op per element.
        h_new = hn + i * (h_cand - hn)
        if ragged:
            valid = (tc * tt + s) < seq_len      # freeze state past the real T
            h_new = jnp.where(valid, h_new, h)

        h_hist_ref[pl.ds(s * bb, bb), :] = h_new
        h = h_new

    h_out_ref[...] = h   # one state store per chunk (not per step)

    # ---- chunk-hoisted output projection over TT*bb rows ---------------------
    y_all = (jnp.dot(h_hist_ref[...].astype(jnp.bfloat16), wy_ref[...],
                     preferred_element_type=jnp.float32) + by_ref[...])
    y_ref[...] = y_all.reshape(tt, bb, op).astype(y_ref.dtype)


# ----------------------------------------------------------------------------
# Parameter packing (fuse gate weights, pad to lane-dense shapes, bf16 weights)
# ----------------------------------------------------------------------------
def pack_params(params, in_dim, hidden_dim, out_dim):
    ip = _round_up(in_dim, LANE)
    hp = _round_up(hidden_dim, LANE)
    op = _round_up(out_dim, LANE)

    def pad2(w, rows, cols):
        out = jnp.zeros((rows, cols), w.dtype)
        return out.at[: w.shape[0], : w.shape[1]].set(w)

    packed = {
        "ln_x": jnp.concatenate(
            [pad2(params["g_x"], 1, ip), pad2(params["b_x"], 1, ip)], axis=0),
        "ln_h": jnp.concatenate(
            [pad2(params["g_h"], 1, hp), pad2(params["b_h"], 1, hp)], axis=0),
        "w_h_ir": jnp.concatenate(
            [pad2(params["wi_h"], hp, hp), pad2(params["wr_h"], hp, hp)],
            axis=1).astype(jnp.bfloat16),
        "w_x_irc": jnp.concatenate(
            [pad2(params["wi_x"], ip, hp), pad2(params["wr_x"], ip, hp),
             pad2(params["wc_x"], ip, hp)], axis=1).astype(jnp.bfloat16),
        "b_irc": jnp.concatenate(
            [pad2(params["bi"], 1, hp), pad2(params["br"], 1, hp),
             pad2(params["bc"], 1, hp)], axis=1),
        "w_h_c": pad2(params["wc_h"], hp, hp).astype(jnp.bfloat16),
        "wy": pad2(params["wy"], hp, op).astype(jnp.bfloat16),
        "by": pad2(params["by"], 1, op),
    }
    return packed, (ip, hp, op)


# ----------------------------------------------------------------------------
# Wrapper: run the whole sequence in one pallas_call
# ----------------------------------------------------------------------------
def basic_gru_forward_seq(xs, h0, params, *, batch_block=None, time_block=8):
    """xs: (T, B, in_dim) f32, h0: (B, hidden_dim) f32 -> (ys (T,B,out), h_T)."""
    T, B, in_dim = xs.shape
    hidden_dim = h0.shape[1]
    out_dim = params["wy"].shape[1]

    packed, (ip, hp, op) = pack_params(params, in_dim, hidden_dim, out_dim)

    if batch_block is None:
        # Split the batch into >=2 blocks when possible so the "parallel" grid
        # axis can cover both TensorCores on v7x (no effect on 1-TC v5e/v6e).
        batch_block = _round_up(pl.cdiv(B, 2), SUBLANE) if B <= 128 else 128
    batch_block = max(SUBLANE, _round_up(batch_block, SUBLANE))
    bp = _round_up(B, batch_block)
    nb = bp // batch_block

    tt = max(1, min(time_block, T))
    tp = _round_up(T, tt)          # ragged tail handled by in-kernel masking
    ntc = tp // tt

    # zero-pad activations to sublane/lane-aligned shapes
    xs_p = jnp.zeros((tp, bp, ip), jnp.float32).at[:T, :B, :in_dim].set(xs)
    h0_p = jnp.zeros((bp, hp), jnp.float32).at[:B, :hidden_dim].set(h0)

    kernel = functools.partial(gru_chunk_kernel, in_dim=in_dim,
                               hidden_dim=hidden_dim, seq_len=T, tt=tt)

    def wspec(shape):
        # weights/biases: same block for every grid point -> VMEM-resident
        return pl.BlockSpec(shape, lambda b, t: (0,) * len(shape))

    # --- VMEM budget (conservatively assume double-buffering everywhere) -----
    f32 = 4
    weight_bytes = sum(int(v.size) * v.dtype.itemsize for v in packed.values())
    tile_bytes = (2 * tt * batch_block * ip * f32        # x tiles
                  + 2 * tt * batch_block * op * f32      # y tiles
                  + 2 * 2 * batch_block * hp * f32       # h0 in + h_out out
                  + tt * batch_block * hp * f32)         # h_hist scratch
    interm_bytes = (tt * batch_block * (3 * hp + ip + op) * f32 * 2
                    + 8 * batch_block * hp * f32)
    vmem_needed = 2 * weight_bytes + tile_bytes + interm_bytes
    vmem_limit = int(min(max(vmem_needed * 5 // 4, 32 << 20), 100 << 20))

    flops = 2 * bp * tp * (hp * 2 * hp + hp * hp + ip * 3 * hp + hp * op)
    transcendentals = bp * tp * 3 * hp
    bytes_accessed = (xs_p.size * 4 + h0_p.size * 4 + tp * bp * op * 4
                      + bp * hp * 4 + weight_bytes)

    y_p, h_p = pl.pallas_call(
        kernel,
        out_shape=(
            jax.ShapeDtypeStruct((tp, bp, op), jnp.float32),
            jax.ShapeDtypeStruct((bp, hp), jnp.float32),
        ),
        grid_spec=pltpu.PrefetchScalarGridSpec(
            num_scalar_prefetch=0,
            grid=(nb, ntc),
            in_specs=[
                pl.BlockSpec((tt, batch_block, ip), lambda b, t: (t, b, 0)),  # x chunk
                pl.BlockSpec((batch_block, hp), lambda b, t: (b, 0)),          # h0
                wspec((2, ip)),            # ln_x (gamma/beta)
                wspec((2, hp)),            # ln_h (gamma/beta)
                wspec((hp, 2 * hp)),       # w_h_ir
                wspec((ip, 3 * hp)),       # w_x_irc
                wspec((1, 3 * hp)),        # b_irc
                wspec((hp, hp)),           # w_h_c
                wspec((hp, op)),           # wy
                wspec((1, op)),            # by
            ],
            out_specs=(
                pl.BlockSpec((tt, batch_block, op), lambda b, t: (t, b, 0)),   # y chunk
                pl.BlockSpec((batch_block, hp), lambda b, t: (b, 0)),          # h carry
            ),
            scratch_shapes=[pltpu.VMEM((tt * batch_block, hp), jnp.float32)],
        ),
        compiler_params=pltpu.CompilerParams(
            dimension_semantics=("parallel", "arbitrary"),
            vmem_limit_bytes=vmem_limit,
        ),
        cost_estimate=pl.CostEstimate(
            flops=flops, transcendentals=transcendentals,
            bytes_accessed=bytes_accessed),
    )(xs_p, h0_p, packed["ln_x"], packed["ln_h"], packed["w_h_ir"],
      packed["w_x_irc"], packed["b_irc"], packed["w_h_c"],
      packed["wy"], packed["by"])

    return y_p[:T, :B, :out_dim], h_p[:B, :hidden_dim]


# ----------------------------------------------------------------------------
# Synthetic parameters (nn.Linear / nn.LayerNorm shapes) and pure-JAX reference
# ----------------------------------------------------------------------------
def make_params(key, in_dim, hidden_dim, out_dim):
    z_dim = in_dim + hidden_dim
    ks = jax.random.split(key, 8)

    def linear(k, fan_in, fan_out):
        # PyTorch nn.Linear stores (out, in); we keep the (in, out) transpose.
        bound = 1.0 / (fan_in ** 0.5)
        kw, kb = jax.random.split(k)
        w = jax.random.uniform(kw, (fan_in, fan_out), jnp.float32, -bound, bound)
        b = jax.random.uniform(kb, (1, fan_out), jnp.float32, -bound, bound)
        return w, b

    wi, bi = linear(ks[0], z_dim, hidden_dim)
    wr, br = linear(ks[1], z_dim, hidden_dim)
    wc, bc = linear(ks[2], z_dim, hidden_dim)
    wy, by = linear(ks[3], hidden_dim, out_dim)

    return {
        "g_x": 1.0 + 0.1 * jax.random.normal(ks[4], (1, in_dim), jnp.float32),
        "b_x": 0.1 * jax.random.normal(ks[5], (1, in_dim), jnp.float32),
        "g_h": 1.0 + 0.1 * jax.random.normal(ks[6], (1, hidden_dim), jnp.float32),
        "b_h": 0.1 * jax.random.normal(ks[7], (1, hidden_dim), jnp.float32),
        # z = cat(h_prev, x): rows [0, hidden) -> h part, rows [hidden, ...) -> x part
        "wi_h": wi[:hidden_dim], "wi_x": wi[hidden_dim:], "bi": bi,
        "wr_h": wr[:hidden_dim], "wr_x": wr[hidden_dim:], "br": br,
        "wc_h": wc[:hidden_dim], "wc_x": wc[hidden_dim:], "bc": bc,
        "wy": wy, "by": by,
    }


def reference_forward_seq(xs, h0, params, *, mxu_dtype=jnp.float32, eps=1e-5):
    """Pure-JAX reference mirroring the PyTorch module, looped over time.

    mxu_dtype=bfloat16 mimics the kernel's bf16-operand / f32-accumulate matmuls.
    """
    def mm(a, w):
        return jnp.dot(a.astype(mxu_dtype), w.astype(mxu_dtype),
                       preferred_element_type=jnp.float32)

    def ln(v, g, b):
        mu = jnp.mean(v, axis=-1, keepdims=True)
        var = jnp.mean(v * v, axis=-1, keepdims=True) - mu * mu
        return (v - mu) * jax.lax.rsqrt(var + eps) * g + b

    def step(h, x):
        xn = ln(x, params["g_x"], params["b_x"])
        hn = ln(h, params["g_h"], params["b_h"])
        i = jax.nn.sigmoid(mm(hn, params["wi_h"]) + mm(xn, params["wi_x"]) + params["bi"])
        r = jax.nn.sigmoid(mm(hn, params["wr_h"]) + mm(xn, params["wr_x"]) + params["br"])
        h_cand = jnp.tanh(mm(r * hn, params["wc_h"]) + mm(xn, params["wc_x"]) + params["bc"])
        h_new = (1.0 - i) * hn + i * h_cand
        y = mm(h_new, params["wy"]) + params["by"]
        return h_new, y

    h_last, ys = jax.lax.scan(step, h0, xs)
    return ys, h_last


# TODO(synk): nn.Dropout branches (input/recurrent) are identity at prob=0 and
# are not implemented in the kernel.

if __name__ == "__main__":
    # T=10 with time_block=8 exercises both the multi-chunk path and the ragged
    # tail masking; B=16 exercises the 2-block batch split (v7x megacore path).
    T, B, in_dim, hidden_dim, out_dim = 10, 16, 16, 32, 16

    key = jax.random.PRNGKey(0)
    kx, kh, kp = jax.random.split(key, 3)
    xs = jax.random.normal(kx, (T, B, in_dim), jnp.float32)
    h0 = jax.random.normal(kh, (B, hidden_dim), jnp.float32)
    params = make_params(kp, in_dim, hidden_dim, out_dim)

    y, h = basic_gru_forward_seq(xs, h0, params, time_block=8)
    jax.block_until_ready((y, h))

    # Tight check against a reference using the same bf16-operand MXU math.
    y_bf, h_bf = reference_forward_seq(xs, h0, params, mxu_dtype=jnp.bfloat16)
    assert jnp.allclose(y, y_bf, atol=1e-2, rtol=1e-2), "y mismatch vs bf16-matmul reference"
    assert jnp.allclose(h, h_bf, atol=1e-2, rtol=1e-2), "h mismatch vs bf16-matmul reference"

    # Looser sanity check against the pure-f32 reference (bf16 MXU operands are
    # the only deviation from the PyTorch-exact math).
    y_f32, h_f32 = reference_forward_seq(xs, h0, params, mxu_dtype=jnp.float32)
    assert jnp.allclose(y, y_f32, atol=5e-2, rtol=5e-2), "y drifted vs f32 reference"
    assert jnp.allclose(h, h_f32, atol=5e-2, rtol=5e-2), "h drifted vs f32 reference"

    print("KERNEL_OK")
</pallas_src>

<mosaic_0001>
module attributes {stable_mosaic.version = 11 : i64} {
  func.func @gru_chunk_kernel(%arg0: i32, %arg1: i32, %arg2: memref<8x8x128xf32, #tpu.memory_space<vmem>>, %arg3: memref<8x128xf32, #tpu.memory_space<vmem>>, %arg4: memref<2x128xf32, #tpu.memory_space<vmem>>, %arg5: memref<2x128xf32, #tpu.memory_space<vmem>>, %arg6: memref<128x256xbf16, #tpu.memory_space<vmem>>, %arg7: memref<128x384xbf16, #tpu.memory_space<vmem>>, %arg8: memref<1x384xf32, #tpu.memory_space<vmem>>, %arg9: memref<128x128xbf16, #tpu.memory_space<vmem>>, %arg10: memref<128x128xbf16, #tpu.memory_space<vmem>>, %arg11: memref<1x128xf32, #tpu.memory_space<vmem>>, %arg12: memref<8x8x128xf32, #tpu.memory_space<vmem>>, %arg13: memref<8x128xf32, #tpu.memory_space<vmem>>, %arg14: memref<64x128xf32, #tpu.memory_space<vmem>>) attributes {dimension_semantics = [#tpu.dimension_semantics<parallel>, #tpu.dimension_semantics<arbitrary>], iteration_bounds = array<i64: 2, 2>, scalar_prefetch = 0 : i64, scratch_operands = 1 : i64, tpu.core_type = #tpu.core_type<tc>, window_params = [{transform_indices = @transform_0, window_bounds = array<i64: 8, 8, 128>}, {transform_indices = @transform_1, window_bounds = array<i64: 8, 128>}, {pipeline_mode = #tpu.pipeline_mode<synchronous>, transform_indices = @transform_2, window_bounds = array<i64: 2, 128>}, {pipeline_mode = #tpu.pipeline_mode<synchronous>, transform_indices = @transform_3, window_bounds = array<i64: 2, 128>}, {pipeline_mode = #tpu.pipeline_mode<synchronous>, transform_indices = @transform_4, window_bounds = array<i64: 128, 256>}, {pipeline_mode = #tpu.pipeline_mode<synchronous>, transform_indices = @transform_5, window_bounds = array<i64: 128, 384>}, {pipeline_mode = #tpu.pipeline_mode<synchronous>, transform_indices = @transform_6, window_bounds = array<i64: 1, 384>}, {pipeline_mode = #tpu.pipeline_mode<synchronous>, transform_indices = @transform_7, window_bounds = array<i64: 128, 128>}, {pipeline_mode = #tpu.pipeline_mode<synchronous>, transform_indices = @transform_8, window_bounds = array<i64: 128, 128>}, {pipeline_mode = #tpu.pipeline_mode<synchronous>, transform_indices = @transform_9, window_bounds = array<i64: 1, 128>}, {transform_indices = @transform_10, window_bounds = array<i64: 8, 8, 128>}, {transform_indices = @transform_11, window_bounds = array<i64: 8, 128>}]} {
    %c0_i32 = arith.constant 0 : i32
    %0 = arith.cmpi eq, %arg1, %c0_i32 : i32
    %1 = arith.extui %0 : i1 to i32
    %c0_i32_0 = arith.constant 0 : i32
    %2 = arith.cmpi ne, %1, %c0_i32_0 : i32
    scf.if %2 {
      %c0_133 = arith.constant 0 : index
      %c0_134 = arith.constant 0 : index
      %490 = vector.load %arg3[%c0_133, %c0_134] : memref<8x128xf32, #tpu.memory_space<vmem>>, vector<8x128xf32>
      %c0_135 = arith.constant 0 : index
      %c0_136 = arith.constant 0 : index
      %491 = vector.load %arg13[%c0_135, %c0_136] : memref<8x128xf32, #tpu.memory_space<vmem>>, vector<8x128xf32>
      tpu.vector_store %arg13[%c0_135, %c0_136], %490 {strides = array<i32>} : memref<8x128xf32, #tpu.memory_space<vmem>>, vector<8x128xf32>,
    } else {
    }
    %c0 = arith.constant 0 : index
    %c0_1 = arith.constant 0 : index
    %3 = vector.load %arg13[%c0, %c0_1] : memref<8x128xf32, #tpu.memory_space<vmem>>, vector<8x128xf32>
    %c0_2 = arith.constant 0 : index
    %c0_3 = arith.constant 0 : index
    %4 = vector.load %arg4[%c0_2, %c0_3] : memref<2x128xf32, #tpu.memory_space<vmem>>, vector<1x128xf32>
    %c1 = arith.constant 1 : index
    %c0_4 = arith.constant 0 : index
    %5 = vector.load %arg4[%c1, %c0_4] : memref<2x128xf32, #tpu.memory_space<vmem>>, vector<1x128xf32>
    %c0_5 = arith.constant 0 : index
    %c0_6 = arith.constant 0 : index
    %6 = vector.load %arg5[%c0_5, %c0_6] : memref<2x128xf32, #tpu.memory_space<vmem>>, vector<1x128xf32>
    %c1_7 = arith.constant 1 : index
    %c0_8 = arith.constant 0 : index
    %7 = vector.load %arg5[%c1_7, %c0_8] : memref<2x128xf32, #tpu.memory_space<vmem>>, vector<1x128xf32>
    %c0_9 = arith.constant 0 : index
    %c0_10 = arith.constant 0 : index
    %8 = vector.load %arg6[%c0_9, %c0_10] : memref<128x256xbf16, #tpu.memory_space<vmem>>, vector<128x256xbf16>
    %c0_11 = arith.constant 0 : index
    %c0_12 = arith.constant 0 : index
    %9 = vector.load %arg9[%c0_11, %c0_12] : memref<128x128xbf16, #tpu.memory_space<vmem>>, vector<128x128xbf16>
    %c0_13 = arith.constant 0 : index
    %c0_14 = arith.constant 0 : index
    %c0_15 = arith.constant 0 : index
    %10 = vector.load %arg2[%c0_13, %c0_14, %c0_15] : memref<8x8x128xf32, #tpu.memory_space<vmem>>, vector<8x8x128xf32>
    %11 = vector.shape_cast %10 : vector<8x8x128xf32> to vector<64x128xf32>
    %cst = arith.constant dense<0.000000e+00> : vector<64xf32>
    %12 = vector.multi_reduction <add>, %11, %cst [1] : vector<64x128xf32> to vector<64xf32>
    %13 = vector.shape_cast %12 : vector<64xf32> to vector<64x1xf32>
    %cst_16 = arith.constant 6.250000e-02 : f32
    %14 = vector.broadcast %cst_16 : f32 to vector<64x1xf32>
    %15 = arith.mulf %13, %14 : vector<64x1xf32>
    %16 = arith.mulf %11, %11 : vector<64x128xf32>
    %cst_17 = arith.constant dense<0.000000e+00> : vector<64xf32>
    %17 = vector.multi_reduction <add>, %16, %cst_17 [1] : vector<64x128xf32> to vector<64xf32>
    %18 = vector.shape_cast %17 : vector<64xf32> to vector<64x1xf32>
    %cst_18 = arith.constant 6.250000e-02 : f32
    %19 = vector.broadcast %cst_18 : f32 to vector<64x1xf32>
    %20 = arith.mulf %18, %19 : vector<64x1xf32>
    %21 = arith.mulf %15, %15 : vector<64x1xf32>
    %22 = arith.subf %20, %21 : vector<64x1xf32>
    %23 = vector.broadcast %15 : vector<64x1xf32> to vector<64x128xf32>
    %24 = arith.subf %11, %23 : vector<64x128xf32>
    %cst_19 = arith.constant 9.99999974E-6 : f32
    %25 = vector.broadcast %cst_19 : f32 to vector<64x1xf32>
    %26 = arith.addf %22, %25 : vector<64x1xf32>
    %27 = math.rsqrt %26 : vector<64x1xf32>
    %28 = vector.broadcast %27 : vector<64x1xf32> to vector<64x128xf32>
    %29 = arith.mulf %24, %28 : vector<64x128xf32>
    %30 = vector.broadcast %4 : vector<1x128xf32> to vector<64x128xf32>
    %31 = arith.mulf %29, %30 : vector<64x128xf32>
    %32 = vector.broadcast %5 : vector<1x128xf32> to vector<64x128xf32>
    %33 = arith.addf %31, %32 : vector<64x128xf32>
    %34 = arith.truncf %33 : vector<64x128xf32> to vector<64x128xbf16>
    %c0_20 = arith.constant 0 : index
    %c0_21 = arith.constant 0 : index
    %35 = vector.load %arg7[%c0_20, %c0_21] : memref<128x384xbf16, #tpu.memory_space<vmem>>, vector<128x384xbf16>
    %cst_22 = arith.constant dense<0.000000e+00> : vector<64x384xf32>
    %36 = tpu.matmul %34, %35, %cst_22 {dimension_numbers = #tpu.dot_dimension_numbers<[1], [0], [0], [1], [0, 0, 1, 1], [], []>} : vector<64x128xbf16>, vector<128x384xbf16>, vector<64x384xf32> -> vector<64x384xf32>
    %c0_23 = arith.constant 0 : index
    %c0_24 = arith.constant 0 : index
    %37 = vector.load %arg8[%c0_23, %c0_24] : memref<1x384xf32, #tpu.memory_space<vmem>>, vector<1x384xf32>
    %38 = vector.broadcast %37 : vector<1x384xf32> to vector<64x384xf32>
    %39 = arith.addf %36, %38 : vector<64x384xf32>
    %40 = vector.extract_strided_slice %39 {offsets = [0, 0], sizes = [8, 384], strides = [1, 1]} : vector<64x384xf32> to vector<8x384xf32>
    %cst_25 = arith.constant dense<0.000000e+00> : vector<8xf32>
    %41 = vector.multi_reduction <add>, %3, %cst_25 [1] : vector<8x128xf32> to vector<8xf32>
    %42 = vector.shape_cast %41 : vector<8xf32> to vector<8x1xf32>
    %cst_26 = arith.constant 3.125000e-02 : f32
    %43 = vector.broadcast %cst_26 : f32 to vector<8x1xf32>
    %44 = arith.mulf %42, %43 : vector<8x1xf32>
    %45 = arith.mulf %3, %3 : vector<8x128xf32>
    %cst_27 = arith.constant dense<0.000000e+00> : vector<8xf32>
    %46 = vector.multi_reduction <add>, %45, %cst_27 [1] : vector<8x128xf32> to vector<8xf32>
    %47 = vector.shape_cast %46 : vector<8xf32> to vector<8x1xf32>
    %cst_28 = arith.constant 3.125000e-02 : f32
    %48 = vector.broadcast %cst_28 : f32 to vector<8x1xf32>
    %49 = arith.mulf %47, %48 : vector<8x1xf32>
    %50 = arith.mulf %44, %44 : vector<8x1xf32>
    %51 = arith.subf %49, %50 : vector<8x1xf32>
    %52 = vector.broadcast %44 : vector<8x1xf32> to vector<8x128xf32>
    %53 = arith.subf %3, %52 : vector<8x128xf32>
    %cst_29 = arith.constant 9.99999974E-6 : f32
    %54 = vector.broadcast %cst_29 : f32 to vector<8x1xf32>
    %55 = arith.addf %51, %54 : vector<8x1xf32>
    %56 = math.rsqrt %55 : vector<8x1xf32>
    %57 = vector.broadcast %56 : vector<8x1xf32> to vector<8x128xf32>
    %58 = arith.mulf %53, %57 : vector<8x128xf32>
    %59 = vector.broadcast %6 : vector<1x128xf32> to vector<8x128xf32>
    %60 = arith.mulf %58, %59 : vector<8x128xf32>
    %61 = vector.broadcast %7 : vector<1x128xf32> to vector<8x128xf32>
    %62 = arith.addf %60, %61 : vector<8x128xf32>
    %63 = arith.truncf %62 : vector<8x128xf32> to vector<8x128xbf16>
    %cst_30 = arith.constant dense<0.000000e+00> : vector<8x256xf32>
    %64 = tpu.matmul %63, %8, %cst_30 {dimension_numbers = #tpu.dot_dimension_numbers<[1], [0], [0], [1], [0, 0, 1, 1], [], []>} : vector<8x128xbf16>, vector<128x256xbf16>, vector<8x256xf32> -> vector<8x256xf32>
    %65 = vector.extract_strided_slice %40 {offsets = [0, 0], sizes = [8, 128], strides = [1, 1]} : vector<8x384xf32> to vector<8x128xf32>
    %66 = vector.extract_strided_slice %64 {offsets = [0, 0], sizes = [8, 128], strides = [1, 1]} : vector<8x256xf32> to vector<8x128xf32>
    %67 = arith.addf %65, %66 : vector<8x128xf32>
    %68 = arith.negf %67 : vector<8x128xf32>
    %69 = math.exp %68 : vector<8x128xf32>
    %cst_31 = arith.constant 1.000000e+00 : f32
    %70 = vector.broadcast %cst_31 : f32 to vector<8x128xf32>
    %71 = arith.addf %70, %69 : vector<8x128xf32>
    %72 = arith.divf %70, %71 : vector<8x128xf32>
    %73 = vector.extract_strided_slice %40 {offsets = [0, 128], sizes = [8, 128], strides = [1, 1]} : vector<8x384xf32> to vector<8x128xf32>
    %74 = vector.extract_strided_slice %64 {offsets = [0, 128], sizes = [8, 128], strides = [1, 1]} : vector<8x256xf32> to vector<8x128xf32>
    %75 = arith.addf %73, %74 : vector<8x128xf32>
    %76 = arith.negf %75 : vector<8x128xf32>
    %77 = math.exp %76 : vector<8x128xf32>
    %cst_32 = arith.constant 1.000000e+00 : f32
    %78 = vector.broadcast %cst_32 : f32 to vector<8x128xf32>
    %79 = arith.addf %78, %77 : vector<8x128xf32>
    %80 = arith.divf %78, %79 : vector<8x128xf32>
    %81 = arith.mulf %80, %62 : vector<8x128xf32>
    %82 = arith.truncf %81 : vector<8x128xf32> to vector<8x128xbf16>
    %cst_33 = arith.constant dense<0.000000e+00> : vector<8x128xf32>
    %83 = tpu.matmul %82, %9, %cst_33 {dimension_numbers = #tpu.dot_dimension_numbers<[1], [0], [0], [1], [0, 0, 1, 1], [], []>} : vector<8x128xbf16>, vector<128x128xbf16>, vector<8x128xf32> -> vector<8x128xf32>
    %84 = vector.extract_strided_slice %40 {offsets = [0, 256], sizes = [8, 128], strides = [1, 1]} : vector<8x384xf32> to vector<8x128xf32>
    %85 = arith.addf %83, %84 : vector<8x128xf32>
    %86 = math.tanh %85 : vector<8x128xf32>
    %87 = arith.subf %86, %62 : vector<8x128xf32>
    %88 = arith.mulf %72, %87 : vector<8x128xf32>
    %89 = arith.addf %62, %88 : vector<8x128xf32>
    %c8_i32 = arith.constant 8 : i32
    %90 = arith.muli %arg1, %c8_i32 : i32
    %c0_i32_34 = arith.constant 0 : i32
    %91 = arith.addi %90, %c0_i32_34 : i32
    %c10_i32 = arith.constant 10 : i32
    %92 = arith.cmpi slt, %91, %c10_i32 : i32
    %93 = arith.select %92, %89, %3 : vector<8x128xf32>
    %c0_35 = arith.constant 0 : index
    %c0_36 = arith.constant 0 : index
    %94 = vector.load %arg14[%c0_35, %c0_36] : memref<64x128xf32, #tpu.memory_space<vmem>>, vector<8x128xf32>
    tpu.vector_store %arg14[%c0_35, %c0_36], %93 {strides = array<i32>} : memref<64x128xf32, #tpu.memory_space<vmem>>, vector<8x128xf32>,
    %95 = vector.extract_strided_slice %39 {offsets = [8, 0], sizes = [8, 384], strides = [1, 1]} : vector<64x384xf32> to vector<8x384xf32>
    %cst_37 = arith.constant dense<0.000000e+00> : vector<8xf32>
    %96 = vector.multi_reduction <add>, %93, %cst_37 [1] : vector<8x128xf32> to vector<8xf32>
    %97 = vector.shape_cast %96 : vector<8xf32> to vector<8x1xf32>
    %cst_38 = arith.constant 3.125000e-02 : f32
    %98 = vector.broadcast %cst_38 : f32 to vector<8x1xf32>
    %99 = arith.mulf %97, %98 : vector<8x1xf32>
    %100 = arith.mulf %93, %93 : vector<8x128xf32>
    %cst_39 = arith.constant dense<0.000000e+00> : vector<8xf32>
    %101 = vector.multi_reduction <add>, %100, %cst_39 [1] : vector<8x128xf32> to vector<8xf32>
    %102 = vector.shape_cast %101 : vector<8xf32> to vector<8x1xf32>
    %cst_40 = arith.constant 3.125000e-02 : f32
    %103 = vector.broadcast %cst_40 : f32 to vector<8x1xf32>
    %104 = arith.mulf %102, %103 : vector<8x1xf32>
    %105 = arith.mulf %99, %99 : vector<8x1xf32>
    %106 = arith.subf %104, %105 : vector<8x1xf32>
    %107 = vector.broadcast %99 : vector<8x1xf32> to vector<8x128xf32>
    %108 = arith.subf %93, %107 : vector<8x128xf32>
    %cst_41 = arith.constant 9.99999974E-6 : f32
    %109 = vector.broadcast %cst_41 : f32 to vector<8x1xf32>
    %110 = arith.addf %106, %109 : vector<8x1xf32>
    %111 = math.rsqrt %110 : vector<8x1xf32>
    %112 = vector.broadcast %111 : vector<8x1xf32> to vector<8x128xf32>
    %113 = arith.mulf %108, %112 : vector<8x128xf32>
    %114 = vector.broadcast %6 : vector<1x128xf32> to vector<8x128xf32>
    %115 = arith.mulf %113, %114 : vector<8x128xf32>
    %116 = vector.broadcast %7 : vector<1x128xf32> to vector<8x128xf32>
    %117 = arith.addf %115, %116 : vector<8x128xf32>
    %118 = arith.truncf %117 : vector<8x128xf32> to vector<8x128xbf16>
    %cst_42 = arith.constant dense<0.000000e+00> : vector<8x256xf32>
    %119 = tpu.matmul %118, %8, %cst_42 {dimension_numbers = #tpu.dot_dimension_numbers<[1], [0], [0], [1], [0, 0, 1, 1], [], []>} : vector<8x128xbf16>, vector<128x256xbf16>, vector<8x256xf32> -> vector<8x256xf32>
    %120 = vector.extract_strided_slice %95 {offsets = [0, 0], sizes = [8, 128], strides = [1, 1]} : vector<8x384xf32> to vector<8x128xf32>
    %121 = vector.extract_strided_slice %119 {offsets = [0, 0], sizes = [8, 128], strides = [1, 1]} : vector<8x256xf32> to vector<8x128xf32>
    %122 = arith.addf %120, %121 : vector<8x128xf32>
    %123 = arith.negf %122 : vector<8x128xf32>
    %124 = math.exp %123 : vector<8x128xf32>
    %cst_43 = arith.constant 1.000000e+00 : f32
    %125 = vector.broadcast %cst_43 : f32 to vector<8x128xf32>
    %126 = arith.addf %125, %124 : vector<8x128xf32>
    %127 = arith.divf %125, %126 : vector<8x128xf32>
    %128 = vector.extract_strided_slice %95 {offsets = [0, 128], sizes = [8, 128], strides = [1, 1]} : vector<8x384xf32> to vector<8x128xf32>
    %129 = vector.extract_strided_slice %119 {offsets = [0, 128], sizes = [8, 128], strides = [1, 1]} : vector<8x256xf32> to vector<8x128xf32>
    %130 = arith.addf %128, %129 : vector<8x128xf32>
    %131 = arith.negf %130 : vector<8x128xf32>
    %132 = math.exp %131 : vector<8x128xf32>
    %cst_44 = arith.constant 1.000000e+00 : f32
    %133 = vector.broadcast %cst_44 : f32 to vector<8x128xf32>
    %134 = arith.addf %133, %132 : vector<8x128xf32>
    %135 = arith.divf %133, %134 : vector<8x128xf32>
    %136 = arith.mulf %135, %117 : vector<8x128xf32>
    %137 = arith.truncf %136 : vector<8x128xf32> to vector<8x128xbf16>
    %cst_45 = arith.constant dense<0.000000e+00> : vector<8x128xf32>
    %138 = tpu.matmul %137, %9, %cst_45 {dimension_numbers = #tpu.dot_dimension_numbers<[1], [0], [0], [1], [0, 0, 1, 1], [], []>} : vector<8x128xbf16>, vector<128x128xbf16>, vector<8x128xf32> -> vector<8x128xf32>
    %139 = vector.extract_strided_slice %95 {offsets = [0, 256], sizes = [8, 128], strides = [1, 1]} : vector<8x384xf32> to vector<8x128xf32>
    %140 = arith.addf %138, %139 : vector<8x128xf32>
    %141 = math.tanh %140 : vector<8x128xf32>
    %142 = arith.subf %141, %117 : vector<8x128xf32>
    %143 = arith.mulf %127, %142 : vector<8x128xf32>
    %144 = arith.addf %117, %143 : vector<8x128xf32>
    %c8_i32_46 = arith.constant 8 : i32
    %145 = arith.muli %arg1, %c8_i32_46 : i32
    %c1_i32 = arith.constant 1 : i32
    %146 = arith.addi %145, %c1_i32 : i32
    %c10_i32_47 = arith.constant 10 : i32
    %147 = arith.cmpi slt, %146, %c10_i32_47 : i32
    %148 = arith.select %147, %144, %93 : vector<8x128xf32>
    %c8 = arith.constant 8 : index
    %c0_48 = arith.constant 0 : index
    %149 = vector.load %arg14[%c8, %c0_48] : memref<64x128xf32, #tpu.memory_space<vmem>>, vector<8x128xf32>
    tpu.vector_store %arg14[%c8, %c0_48], %148 {strides = array<i32>} : memref<64x128xf32, #tpu.memory_space<vmem>>, vector<8x128xf32>,
    %150 = vector.extract_strided_slice %39 {offsets = [16, 0], sizes = [8, 384], strides = [1, 1]} : vector<64x384xf32> to vector<8x384xf32>
    %cst_49 = arith.constant dense<0.000000e+00> : vector<8xf32>
    %151 = vector.multi_reduction <add>, %148, %cst_49 [1] : vector<8x128xf32> to vector<8xf32>
    %152 = vector.shape_cast %151 : vector<8xf32> to vector<8x1xf32>
    %cst_50 = arith.constant 3.125000e-02 : f32
    %153 = vector.broadcast %cst_50 : f32 to vector<8x1xf32>
    %154 = arith.mulf %152, %153 : vector<8x1xf32>
    %155 = arith.mulf %148, %148 : vector<8x128xf32>
    %cst_51 = arith.constant dense<0.000000e+00> : vector<8xf32>
    %156 = vector.multi_reduction <add>, %155, %cst_51 [1] : vector<8x128xf32> to vector<8xf32>
    %157 = vector.shape_cast %156 : vector<8xf32> to vector<8x1xf32>
    %cst_52 = arith.constant 3.125000e-02 : f32
    %158 = vector.broadcast %cst_52 : f32 to vector<8x1xf32>
    %159 = arith.mulf %157, %158 : vector<8x1xf32>
    %160 = arith.mulf %154, %154 : vector<8x1xf32>
    %161 = arith.subf %159, %160 : vector<8x1xf32>
    %162 = vector.broadcast %154 : vector<8x1xf32> to vector<8x128xf32>
    %163 = arith.subf %148, %162 : vector<8x128xf32>
    %cst_53 = arith.constant 9.99999974E-6 : f32
    %164 = vector.broadcast %cst_53 : f32 to vector<8x1xf32>
    %165 = arith.addf %161, %164 : vector<8x1xf32>
    %166 = math.rsqrt %165 : vector<8x1xf32>
    %167 = vector.broadcast %166 : vector<8x1xf32> to vector<8x128xf32>
    %168 = arith.mulf %163, %167 : vector<8x128xf32>
    %169 = vector.broadcast %6 : vector<1x128xf32> to vector<8x128xf32>
    %170 = arith.mulf %168, %169 : vector<8x128xf32>
    %171 = vector.broadcast %7 : vector<1x128xf32> to vector<8x128xf32>
    %172 = arith.addf %170, %171 : vector<8x128xf32>
    %173 = arith.truncf %172 : vector<8x128xf32> to vector<8x128xbf16>
    %cst_54 = arith.constant dense<0.000000e+00> : vector<8x256xf32>
    %174 = tpu.matmul %173, %8, %cst_54 {dimension_numbers = #tpu.dot_dimension_numbers<[1], [0], [0], [1], [0, 0, 1, 1], [], []>} : vector<8x128xbf16>, vector<128x256xbf16>, vector<8x256xf32> -> vector<8x256xf32>
    %175 = vector.extract_strided_slice %150 {offsets = [0, 0], sizes = [8, 128], strides = [1, 1]} : vector<8x384xf32> to vector<8x128xf32>
    %176 = vector.extract_strided_slice %174 {offsets = [0, 0], sizes = [8, 128], strides = [1, 1]} : vector<8x256xf32> to vector<8x128xf32>
    %177 = arith.addf %175, %176 : vector<8x128xf32>
    %178 = arith.negf %177 : vector<8x128xf32>
    %179 = math.exp %178 : vector<8x128xf32>
    %cst_55 = arith.constant 1.000000e+00 : f32
    %180 = vector.broadcast %cst_55 : f32 to vector<8x128xf32>
    %181 = arith.addf %180, %179 : vector<8x128xf32>
    %182 = arith.divf %180, %181 : vector<8x128xf32>
    %183 = vector.extract_strided_slice %150 {offsets = [0, 128], sizes = [8, 128], strides = [1, 1]} : vector<8x384xf32> to vector<8x128xf32>
    %184 = vector.extract_strided_slice %174 {offsets = [0, 128], sizes = [8, 128], strides = [1, 1]} : vector<8x256xf32> to vector<8x128xf32>
    %185 = arith.addf %183, %184 : vector<8x128xf32>
    %186 = arith.negf %185 : vector<8x128xf32>
    %187 = math.exp %186 : vector<8x128xf32>
    %cst_56 = arith.constant 1.000000e+00 : f32
    %188 = vector.broadcast %cst_56 : f32 to vector<8x128xf32>
    %189 = arith.addf %188, %187 : vector<8x128xf32>
    %190 = arith.divf %188, %189 : vector<8x128xf32>
    %191 = arith.mulf %190, %172 : vector<8x128xf32>
    %192 = arith.truncf %191 : vector<8x128xf32> to vector<8x128xbf16>
    %cst_57 = arith.constant dense<0.000000e+00> : vector<8x128xf32>
    %193 = tpu.matmul %192, %9, %cst_57 {dimension_numbers = #tpu.dot_dimension_numbers<[1], [0], [0], [1], [0, 0, 1, 1], [], []>} : vector<8x128xbf16>, vector<128x128xbf16>, vector<8x128xf32> -> vector<8x128xf32>
    %194 = vector.extract_strided_slice %150 {offsets = [0, 256], sizes = [8, 128], strides = [1, 1]} : vector<8x384xf32> to vector<8x128xf32>
    %195 = arith.addf %193, %194 : vector<8x128xf32>
    %196 = math.tanh %195 : vector<8x128xf32>
    %197 = arith.subf %196, %172 : vector<8x128xf32>
    %198 = arith.mulf %182, %197 : vector<8x128xf32>
    %199 = arith.addf %172, %198 : vector<8x128xf32>
    %c8_i32_58 = arith.constant 8 : i32
    %200 = arith.muli %arg1, %c8_i32_58 : i32
    %c2_i32 = arith.constant 2 : i32
    %201 = arith.addi %200, %c2_i32 : i32
    %c10_i32_59 = arith.constant 10 : i32
    %202 = arith.cmpi slt, %201, %c10_i32_59 : i32
    %203 = arith.select %202, %199, %148 : vector<8x128xf32>
    %c16 = arith.constant 16 : index
    %c0_60 = arith.constant 0 : index
    %204 = vector.load %arg14[%c16, %c0_60] : memref<64x128xf32, #tpu.memory_space<vmem>>, vector<8x128xf32>
    tpu.vector_store %arg14[%c16, %c0_60], %203 {strides = array<i32>} : memref<64x128xf32, #tpu.memory_space<vmem>>, vector<8x128xf32>,
    %205 = vector.extract_strided_slice %39 {offsets = [24, 0], sizes = [8, 384], strides = [1, 1]} : vector<64x384xf32> to vector<8x384xf32>
    %cst_61 = arith.constant dense<0.000000e+00> : vector<8xf32>
    %206 = vector.multi_reduction <add>, %203, %cst_61 [1] : vector<8x128xf32> to vector<8xf32>
    %207 = vector.shape_cast %206 : vector<8xf32> to vector<8x1xf32>
    %cst_62 = arith.constant 3.125000e-02 : f32
    %208 = vector.broadcast %cst_62 : f32 to vector<8x1xf32>
    %209 = arith.mulf %207, %208 : vector<8x1xf32>
    %210 = arith.mulf %203, %203 : vector<8x128xf32>
    %cst_63 = arith.constant dense<0.000000e+00> : vector<8xf32>
    %211 = vector.multi_reduction <add>, %210, %cst_63 [1] : vector<8x128xf32> to vector<8xf32>
    %212 = vector.shape_cast %211 : vector<8xf32> to vector<8x1xf32>
    %cst_64 = arith.constant 3.125000e-02 : f32
    %213 = vector.broadcast %cst_64 : f32 to vector<8x1xf32>
    %214 = arith.mulf %212, %213 : vector<8x1xf32>
    %215 = arith.mulf %209, %209 : vector<8x1xf32>
    %216 = arith.subf %214, %215 : vector<8x1xf32>
    %217 = vector.broadcast %209 : vector<8x1xf32> to vector<8x128xf32>
    %218 = arith.subf %203, %217 : vector<8x128xf32>
    %cst_65 = arith.constant 9.99999974E-6 : f32
    %219 = vector.broadcast %cst_65 : f32 to vector<8x1xf32>
    %220 = arith.addf %216, %219 : vector<8x1xf32>
    %221 = math.rsqrt %220 : vector<8x1xf32>
    %222 = vector.broadcast %221 : vector<8x1xf32> to vector<8x128xf32>
    %223 = arith.mulf %218, %222 : vector<8x128xf32>
    %224 = vector.broadcast %6 : vector<1x128xf32> to vector<8x128xf32>
    %225 = arith.mulf %223, %224 : vector<8x128xf32>
    %226 = vector.broadcast %7 : vector<1x128xf32> to vector<8x128xf32>
    %227 = arith.addf %225, %226 : vector<8x128xf32>
    %228 = arith.truncf %227 : vector<8x128xf32> to vector<8x128xbf16>
    %cst_66 = arith.constant dense<0.000000e+00> : vector<8x256xf32>
    %229 = tpu.matmul %228, %8, %cst_66 {dimension_numbers = #tpu.dot_dimension_numbers<[1], [0], [0], [1], [0, 0, 1, 1], [], []>} : vector<8x128xbf16>, vector<128x256xbf16>, vector<8x256xf32> -> vector<8x256xf32>
    %230 = vector.extract_strided_slice %205 {offsets = [0, 0], sizes = [8, 128], strides = [1, 1]} : vector<8x384xf32> to vector<8x128xf32>
    %231 = vector.extract_strided_slice %229 {offsets = [0, 0], sizes = [8, 128], strides = [1, 1]} : vector<8x256xf32> to vector<8x128xf32>
    %232 = arith.addf %230, %231 : vector<8x128xf32>
    %233 = arith.negf %232 : vector<8x128xf32>
    %234 = math.exp %233 : vector<8x128xf32>
    %cst_67 = arith.constant 1.000000e+00 : f32
    %235 = vector.broadcast %cst_67 : f32 to vector<8x128xf32>
    %236 = arith.addf %235, %234 : vector<8x128xf32>
    %237 = arith.divf %235, %236 : vector<8x128xf32>
    %238 = vector.extract_strided_slice %205 {offsets = [0, 128], sizes = [8, 128], strides = [1, 1]} : vector<8x384xf32> to vector<8x128xf32>
    %239 = vector.extract_strided_slice %229 {offsets = [0, 128], sizes = [8, 128], strides = [1, 1]} : vector<8x256xf32> to vector<8x128xf32>
    %240 = arith.addf %238, %239 : vector<8x128xf32>
    %241 = arith.negf %240 : vector<8x128xf32>
    %242 = math.exp %241 : vector<8x128xf32>
    %cst_68 = arith.constant 1.000000e+00 : f32
    %243 = vector.broadcast %cst_68 : f32 to vector<8x128xf32>
    %244 = arith.addf %243, %242 : vector<8x128xf32>
    %245 = arith.divf %243, %244 : vector<8x128xf32>
    %246 = arith.mulf %245, %227 : vector<8x128xf32>
    %247 = arith.truncf %246 : vector<8x128xf32> to vector<8x128xbf16>
    %cst_69 = arith.constant dense<0.000000e+00> : vector<8x128xf32>
    %248 = tpu.matmul %247, %9, %cst_69 {dimension_numbers = #tpu.dot_dimension_numbers<[1], [0], [0], [1], [0, 0, 1, 1], [], []>} : vector<8x128xbf16>, vector<128x128xbf16>, vector<8x128xf32> -> vector<8x128xf32>
    %249 = vector.extract_strided_slice %205 {offsets = [0, 256], sizes = [8, 128], strides = [1, 1]} : vector<8x384xf32> to vector<8x128xf32>
    %250 = arith.addf %248, %249 : vector<8x128xf32>
    %251 = math.tanh %250 : vector<8x128xf32>
    %252 = arith.subf %251, %227 : vector<8x128xf32>
    %253 = arith.mulf %237, %252 : vector<8x128xf32>
    %254 = arith.addf %227, %253 : vector<8x128xf32>
    %c8_i32_70 = arith.constant 8 : i32
    %255 = arith.muli %arg1, %c8_i32_70 : i32
    %c3_i32 = arith.constant 3 : i32
    %256 = arith.addi %255, %c3_i32 : i32
    %c10_i32_71 = arith.constant 10 : i32
    %257 = arith.cmpi slt, %256, %c10_i32_71 : i32
    %258 = arith.select %257, %254, %203 : vector<8x128xf32>
    %c24 = arith.constant 24 : index
    %c0_72 = arith.constant 0 : index
    %259 = vector.load %arg14[%c24, %c0_72] : memref<64x128xf32, #tpu.memory_space<vmem>>, vector<8x128xf32>
    tpu.vector_store %arg14[%c24, %c0_72], %258 {strides = array<i32>} : memref<64x128xf32, #tpu.memory_space<vmem>>, vector<8x128xf32>,
    %260 = vector.extract_strided_slice %39 {offsets = [32, 0], sizes = [8, 384], strides = [1, 1]} : vector<64x384xf32> to vector<8x384xf32>
    %cst_73 = arith.constant dense<0.000000e+00> : vector<8xf32>
    %261 = vector.multi_reduction <add>, %258, %cst_73 [1] : vector<8x128xf32> to vector<8xf32>
    %262 = vector.shape_cast %261 : vector<8xf32> to vector<8x1xf32>
    %cst_74 = arith.constant 3.125000e-02 : f32
    %263 = vector.broadcast %cst_74 : f32 to vector<8x1xf32>
    %264 = arith.mulf %262, %263 : vector<8x1xf32>
    %265 = arith.mulf %258, %258 : vector<8x128xf32>
    %cst_75 = arith.constant dense<0.000000e+00> : vector<8xf32>
    %266 = vector.multi_reduction <add>, %265, %cst_75 [1] : vector<8x128xf32> to vector<8xf32>
    %267 = vector.shape_cast %266 : vector<8xf32> to vector<8x1xf32>
    %cst_76 = arith.constant 3.125000e-02 : f32
    %268 = vector.broadcast %cst_76 : f32 to vector<8x1xf32>
    %269 = arith.mulf %267, %268 : vector<8x1xf32>
    %270 = arith.mulf %264, %264 : vector<8x1xf32>
    %271 = arith.subf %269, %270 : vector<8x1xf32>
    %272 = vector.broadcast %264 : vector<8x1xf32> to vector<8x128xf32>
    %273 = arith.subf %258, %272 : vector<8x128xf32>
    %cst_77 = arith.constant 9.99999974E-6 : f32
    %274 = vector.broadcast %cst_77 : f32 to vector<8x1xf32>
    %275 = arith.addf %271, %274 : vector<8x1xf32>
    %276 = math.rsqrt %275 : vector<8x1xf32>
    %277 = vector.broadcast %276 : vector<8x1xf32> to vector<8x128xf32>
    %278 = arith.mulf %273, %277 : vector<8x128xf32>
    %279 = vector.broadcast %6 : vector<1x128xf32> to vector<8x128xf32>
    %280 = arith.mulf %278, %279 : vector<8x128xf32>
    %281 = vector.broadcast %7 : vector<1x128xf32> to vector<8x128xf32>
    %282 = arith.addf %280, %281 : vector<8x128xf32>
    %283 = arith.truncf %282 : vector<8x128xf32> to vector<8x128xbf16>
    %cst_78 = arith.constant dense<0.000000e+00> : vector<8x256xf32>
    %284 = tpu.matmul %283, %8, %cst_78 {dimension_numbers = #tpu.dot_dimension_numbers<[1], [0], [0], [1], [0, 0, 1, 1], [], []>} : vector<8x128xbf16>, vector<128x256xbf16>, vector<8x256xf32> -> vector<8x256xf32>
    %285 = vector.extract_strided_slice %260 {offsets = [0, 0], sizes = [8, 128], strides = [1, 1]} : vector<8x384xf32> to vector<8x128xf32>
    %286 = vector.extract_strided_slice %284 {offsets = [0, 0], sizes = [8, 128], strides = [1, 1]} : vector<8x256xf32> to vector<8x128xf32>
    %287 = arith.addf %285, %286 : vector<8x128xf32>
    %288 = arith.negf %287 : vector<8x128xf32>
    %289 = math.exp %288 : vector<8x128xf32>
    %cst_79 = arith.constant 1.000000e+00 : f32
    %290 = vector.broadcast %cst_79 : f32 to vector<8x128xf32>
    %291 = arith.addf %290, %289 : vector<8x128xf32>
    %292 = arith.divf %290, %291 : vector<8x128xf32>
    %293 = vector.extract_strided_slice %260 {offsets = [0, 128], sizes = [8, 128], strides = [1, 1]} : vector<8x384xf32> to vector<8x128xf32>
    %294 = vector.extract_strided_slice %284 {offsets = [0, 128], sizes = [8, 128], strides = [1, 1]} : vector<8x256xf32> to vector<8x128xf32>
    %295 = arith.addf %293, %294 : vector<8x128xf32>
    %296 = arith.negf %295 : vector<8x128xf32>
    %297 = math.exp %296 : vector<8x128xf32>
    %cst_80 = arith.constant 1.000000e+00 : f32
    %298 = vector.broadcast %cst_80 : f32 to vector<8x128xf32>
    %299 = arith.addf %298, %297 : vector<8x128xf32>
    %300 = arith.divf %298, %299 : vector<8x128xf32>
    %301 = arith.mulf %300, %282 : vector<8x128xf32>
    %302 = arith.truncf %301 : vector<8x128xf32> to vector<8x128xbf16>
    %cst_81 = arith.constant dense<0.000000e+00> : vector<8x128xf32>
    %303 = tpu.matmul %302, %9, %cst_81 {dimension_numbers = #tpu.dot_dimension_numbers<[1], [0], [0], [1], [0, 0, 1, 1], [], []>} : vector<8x128xbf16>, vector<128x128xbf16>, vector<8x128xf32> -> vector<8x128xf32>
    %304 = vector.extract_strided_slice %260 {offsets = [0, 256], sizes = [8, 128], strides = [1, 1]} : vector<8x384xf32> to vector<8x128xf32>
    %305 = arith.addf %303, %304 : vector<8x128xf32>
    %306 = math.tanh %305 : vector<8x128xf32>
    %307 = arith.subf %306, %282 : vector<8x128xf32>
    %308 = arith.mulf %292, %307 : vector<8x128xf32>
    %309 = arith.addf %282, %308 : vector<8x128xf32>
    %c8_i32_82 = arith.constant 8 : i32
    %310 = arith.muli %arg1, %c8_i32_82 : i32
    %c4_i32 = arith.constant 4 : i32
    %311 = arith.addi %310, %c4_i32 : i32
    %c10_i32_83 = arith.constant 10 : i32
    %312 = arith.cmpi slt, %311, %c10_i32_83 : i32
    %313 = arith.select %312, %309, %258 : vector<8x128xf32>
    %c32 = arith.constant 32 : index
    %c0_84 = arith.constant 0 : index
    %314 = vector.load %arg14[%c32, %c0_84] : memref<64x128xf32, #tpu.memory_space<vmem>>, vector<8x128xf32>
    tpu.vector_store %arg14[%c32, %c0_84], %313 {strides = array<i32>} : memref<64x128xf32, #tpu.memory_space<vmem>>, vector<8x128xf32>,
    %315 = vector.extract_strided_slice %39 {offsets = [40, 0], sizes = [8, 384], strides = [1, 1]} : vector<64x384xf32> to vector<8x384xf32>
    %cst_85 = arith.constant dense<0.000000e+00> : vector<8xf32>
    %316 = vector.multi_reduction <add>, %313, %cst_85 [1] : vector<8x128xf32> to vector<8xf32>
    %317 = vector.shape_cast %316 : vector<8xf32> to vector<8x1xf32>
    %cst_86 = arith.constant 3.125000e-02 : f32
    %318 = vector.broadcast %cst_86 : f32 to vector<8x1xf32>
    %319 = arith.mulf %317, %318 : vector<8x1xf32>
    %320 = arith.mulf %313, %313 : vector<8x128xf32>
    %cst_87 = arith.constant dense<0.000000e+00> : vector<8xf32>
    %321 = vector.multi_reduction <add>, %320, %cst_87 [1] : vector<8x128xf32> to vector<8xf32>
    %322 = vector.shape_cast %321 : vector<8xf32> to vector<8x1xf32>
    %cst_88 = arith.constant 3.125000e-02 : f32
    %323 = vector.broadcast %cst_88 : f32 to vector<8x1xf32>
    %324 = arith.mulf %322, %323 : vector<8x1xf32>
    %325 = arith.mulf %319, %319 : vector<8x1xf32>
    %326 = arith.subf %324, %325 : vector<8x1xf32>
    %327 = vector.broadcast %319 : vector<8x1xf32> to vector<8x128xf32>
    %328 = arith.subf %313, %327 : vector<8x128xf32>
    %cst_89 = arith.constant 9.99999974E-6 : f32
    %329 = vector.broadcast %cst_89 : f32 to vector<8x1xf32>
    %330 = arith.addf %326, %329 : vector<8x1xf32>
    %331 = math.rsqrt %330 : vector<8x1xf32>
    %332 = vector.broadcast %331 : vector<8x1xf32> to vector<8x128xf32>
    %333 = arith.mulf %328, %332 : vector<8x128xf32>
    %334 = vector.broadcast %6 : vector<1x128xf32> to vector<8x128xf32>
    %335 = arith.mulf %333, %334 : vector<8x128xf32>
    %336 = vector.broadcast %7 : vector<1x128xf32> to vector<8x128xf32>
    %337 = arith.addf %335, %336 : vector<8x128xf32>
    %338 = arith.truncf %337 : vector<8x128xf32> to vector<8x128xbf16>
    %cst_90 = arith.constant dense<0.000000e+00> : vector<8x256xf32>
    %339 = tpu.matmul %338, %8, %cst_90 {dimension_numbers = #tpu.dot_dimension_numbers<[1], [0], [0], [1], [0, 0, 1, 1], [], []>} : vector<8x128xbf16>, vector<128x256xbf16>, vector<8x256xf32> -> vector<8x256xf32>
    %340 = vector.extract_strided_slice %315 {offsets = [0, 0], sizes = [8, 128], strides = [1, 1]} : vector<8x384xf32> to vector<8x128xf32>
    %341 = vector.extract_strided_slice %339 {offsets = [0, 0], sizes = [8, 128], strides = [1, 1]} : vector<8x256xf32> to vector<8x128xf32>
    %342 = arith.addf %340, %341 : vector<8x128xf32>
    %343 = arith.negf %342 : vector<8x128xf32>
    %344 = math.exp %343 : vector<8x128xf32>
    %cst_91 = arith.constant 1.000000e+00 : f32
    %345 = vector.broadcast %cst_91 : f32 to vector<8x128xf32>
    %346 = arith.addf %345, %344 : vector<8x128xf32>
    %347 = arith.divf %345, %346 : vector<8x128xf32>
    %348 = vector.extract_strided_slice %315 {offsets = [0, 128], sizes = [8, 128], strides = [1, 1]} : vector<8x384xf32> to vector<8x128xf32>
    %349 = vector.extract_strided_slice %339 {offsets = [0, 128], sizes = [8, 128], strides = [1, 1]} : vector<8x256xf32> to vector<8x128xf32>
    %350 = arith.addf %348, %349 : vector<8x128xf32>
    %351 = arith.negf %350 : vector<8x128xf32>
    %352 = math.exp %351 : vector<8x128xf32>
    %cst_92 = arith.constant 1.000000e+00 : f32
    %353 = vector.broadcast %cst_92 : f32 to vector<8x128xf32>
    %354 = arith.addf %353, %352 : vector<8x128xf32>
    %355 = arith.divf %353, %354 : vector<8x128xf32>
    %356 = arith.mulf %355, %337 : vector<8x128xf32>
    %357 = arith.truncf %356 : vector<8x128xf32> to vector<8x128xbf16>
    %cst_93 = arith.constant dense<0.000000e+00> : vector<8x128xf32>
    %358 = tpu.matmul %357, %9, %cst_93 {dimension_numbers = #tpu.dot_dimension_numbers<[1], [0], [0], [1], [0, 0, 1, 1], [], []>} : vector<8x128xbf16>, vector<128x128xbf16>, vector<8x128xf32> -> vector<8x128xf32>
    %359 = vector.extract_strided_slice %315 {offsets = [0, 256], sizes = [8, 128], strides = [1, 1]} : vector<8x384xf32> to vector<8x128xf32>
    %360 = arith.addf %358, %359 : vector<8x128xf32>
    %361 = math.tanh %360 : vector<8x128xf32>
    %362 = arith.subf %361, %337 : vector<8x128xf32>
    %363 = arith.mulf %347, %362 : vector<8x128xf32>
    %364 = arith.addf %337, %363 : vector<8x128xf32>
    %c8_i32_94 = arith.constant 8 : i32
    %365 = arith.muli %arg1, %c8_i32_94 : i32
    %c5_i32 = arith.constant 5 : i32
    %366 = arith.addi %365, %c5_i32 : i32
    %c10_i32_95 = arith.constant 10 : i32
    %367 = arith.cmpi slt, %366, %c10_i32_95 : i32
    %368 = arith.select %367, %364, %313 : vector<8x128xf32>
    %c40 = arith.constant 40 : index
    %c0_96 = arith.constant 0 : index
    %369 = vector.load %arg14[%c40, %c0_96] : memref<64x128xf32, #tpu.memory_space<vmem>>, vector<8x128xf32>
    tpu.vector_store %arg14[%c40, %c0_96], %368 {strides = array<i32>} : memref<64x128xf32, #tpu.memory_space<vmem>>, vector<8x128xf32>,
    %370 = vector.extract_strided_slice %39 {offsets = [48, 0], sizes = [8, 384], strides = [1, 1]} : vector<64x384xf32> to vector<8x384xf32>
    %cst_97 = arith.constant dense<0.000000e+00> : vector<8xf32>
    %371 = vector.multi_reduction <add>, %368, %cst_97 [1] : vector<8x128xf32> to vector<8xf32>
    %372 = vector.shape_cast %371 : vector<8xf32> to vector<8x1xf32>
    %cst_98 = arith.constant 3.125000e-02 : f32
    %373 = vector.broadcast %cst_98 : f32 to vector<8x1xf32>
    %374 = arith.mulf %372, %373 : vector<8x1xf32>
    %375 = arith.mulf %368, %368 : vector<8x128xf32>
    %cst_99 = arith.constant dense<0.000000e+00> : vector<8xf32>
    %376 = vector.multi_reduction <add>, %375, %cst_99 [1] : vector<8x128xf32> to vector<8xf32>
    %377 = vector.shape_cast %376 : vector<8xf32> to vector<8x1xf32>
    %cst_100 = arith.constant 3.125000e-02 : f32
    %378 = vector.broadcast %cst_100 : f32 to vector<8x1xf32>
    %379 = arith.mulf %377, %378 : vector<8x1xf32>
    %380 = arith.mulf %374, %374 : vector<8x1xf32>
    %381 = arith.subf %379, %380 : vector<8x1xf32>
    %382 = vector.broadcast %374 : vector<8x1xf32> to vector<8x128xf32>
    %383 = arith.subf %368, %382 : vector<8x128xf32>
    %cst_101 = arith.constant 9.99999974E-6 : f32
    %384 = vector.broadcast %cst_101 : f32 to vector<8x1xf32>
    %385 = arith.addf %381, %384 : vector<8x1xf32>
    %386 = math.rsqrt %385 : vector<8x1xf32>
    %387 = vector.broadcast %386 : vector<8x1xf32> to vector<8x128xf32>
    %388 = arith.mulf %383, %387 : vector<8x128xf32>
    %389 = vector.broadcast %6 : vector<1x128xf32> to vector<8x128xf32>
    %390 = arith.mulf %388, %389 : vector<8x128xf32>
    %391 = vector.broadcast %7 : vector<1x128xf32> to vector<8x128xf32>
    %392 = arith.addf %390, %391 : vector<8x128xf32>
    %393 = arith.truncf %392 : vector<8x128xf32> to vector<8x128xbf16>
    %cst_102 = arith.constant dense<0.000000e+00> : vector<8x256xf32>
    %394 = tpu.matmul %393, %8, %cst_102 {dimension_numbers = #tpu.dot_dimension_numbers<[1], [0], [0], [1], [0, 0, 1, 1], [], []>} : vector<8x128xbf16>, vector<128x256xbf16>, vector<8x256xf32> -> vector<8x256xf32>
    %395 = vector.extract_strided_slice %370 {offsets = [0, 0], sizes = [8, 128], strides = [1, 1]} : vector<8x384xf32> to vector<8x128xf32>
    %396 = vector.extract_strided_slice %394 {offsets = [0, 0], sizes = [8, 128], strides = [1, 1]} : vector<8x256xf32> to vector<8x128xf32>
    %397 = arith.addf %395, %396 : vector<8x128xf32>
    %398 = arith.negf %397 : vector<8x128xf32>
    %399 = math.exp %398 : vector<8x128xf32>
    %cst_103 = arith.constant 1.000000e+00 : f32
    %400 = vector.broadcast %cst_103 : f32 to vector<8x128xf32>
    %401 = arith.addf %400, %399 : vector<8x128xf32>
    %402 = arith.divf %400, %401 : vector<8x128xf32>
    %403 = vector.extract_strided_slice %370 {offsets = [0, 128], sizes = [8, 128], strides = [1, 1]} : vector<8x384xf32> to vector<8x128xf32>
    %404 = vector.extract_strided_slice %394 {offsets = [0, 128], sizes = [8, 128], strides = [1, 1]} : vector<8x256xf32> to vector<8x128xf32>
    %405 = arith.addf %403, %404 : vector<8x128xf32>
    %406 = arith.negf %405 : vector<8x128xf32>
    %407 = math.exp %406 : vector<8x128xf32>
    %cst_104 = arith.constant 1.000000e+00 : f32
    %408 = vector.broadcast %cst_104 : f32 to vector<8x128xf32>
    %409 = arith.addf %408, %407 : vector<8x128xf32>
    %410 = arith.divf %408, %409 : vector<8x128xf32>
    %411 = arith.mulf %410, %392 : vector<8x128xf32>
    %412 = arith.truncf %411 : vector<8x128xf32> to vector<8x128xbf16>
    %cst_105 = arith.constant dense<0.000000e+00> : vector<8x128xf32>
    %413 = tpu.matmul %412, %9, %cst_105 {dimension_numbers = #tpu.dot_dimension_numbers<[1], [0], [0], [1], [0, 0, 1, 1], [], []>} : vector<8x128xbf16>, vector<128x128xbf16>, vector<8x128xf32> -> vector<8x128xf32>
    %414 = vector.extract_strided_slice %370 {offsets = [0, 256], sizes = [8, 128], strides = [1, 1]} : vector<8x384xf32> to vector<8x128xf32>
    %415 = arith.addf %413, %414 : vector<8x128xf32>
    %416 = math.tanh %415 : vector<8x128xf32>
    %417 = arith.subf %416, %392 : vector<8x128xf32>
    %418 = arith.mulf %402, %417 : vector<8x128xf32>
    %419 = arith.addf %392, %418 : vector<8x128xf32>
    %c8_i32_106 = arith.constant 8 : i32
    %420 = arith.muli %arg1, %c8_i32_106 : i32
    %c6_i32 = arith.constant 6 : i32
    %421 = arith.addi %420, %c6_i32 : i32
    %c10_i32_107 = arith.constant 10 : i32
    %422 = arith.cmpi slt, %421, %c10_i32_107 : i32
    %423 = arith.select %422, %419, %368 : vector<8x128xf32>
    %c48 = arith.constant 48 : index
    %c0_108 = arith.constant 0 : index
    %424 = vector.load %arg14[%c48, %c0_108] : memref<64x128xf32, #tpu.memory_space<vmem>>, vector<8x128xf32>
    tpu.vector_store %arg14[%c48, %c0_108], %423 {strides = array<i32>} : memref<64x128xf32, #tpu.memory_space<vmem>>, vector<8x128xf32>,
    %425 = vector.extract_strided_slice %39 {offsets = [56, 0], sizes = [8, 384], strides = [1, 1]} : vector<64x384xf32> to vector<8x384xf32>
    %cst_109 = arith.constant dense<0.000000e+00> : vector<8xf32>
    %426 = vector.multi_reduction <add>, %423, %cst_109 [1] : vector<8x128xf32> to vector<8xf32>
    %427 = vector.shape_cast %426 : vector<8xf32> to vector<8x1xf32>
    %cst_110 = arith.constant 3.125000e-02 : f32
    %428 = vector.broadcast %cst_110 : f32 to vector<8x1xf32>
    %429 = arith.mulf %427, %428 : vector<8x1xf32>
    %430 = arith.mulf %423, %423 : vector<8x128xf32>
    %cst_111 = arith.constant dense<0.000000e+00> : vector<8xf32>
    %431 = vector.multi_reduction <add>, %430, %cst_111 [1] : vector<8x128xf32> to vector<8xf32>
    %432 = vector.shape_cast %431 : vector<8xf32> to vector<8x1xf32>
    %cst_112 = arith.constant 3.125000e-02 : f32
    %433 = vector.broadcast %cst_112 : f32 to vector<8x1xf32>
    %434 = arith.mulf %432, %433 : vector<8x1xf32>
    %435 = arith.mulf %429, %429 : vector<8x1xf32>
    %436 = arith.subf %434, %435 : vector<8x1xf32>
    %437 = vector.broadcast %429 : vector<8x1xf32> to vector<8x128xf32>
    %438 = arith.subf %423, %437 : vector<8x128xf32>
    %cst_113 = arith.constant 9.99999974E-6 : f32
    %439 = vector.broadcast %cst_113 : f32 to vector<8x1xf32>
    %440 = arith.addf %436, %439 : vector<8x1xf32>
    %441 = math.rsqrt %440 : vector<8x1xf32>
    %442 = vector.broadcast %441 : vector<8x1xf32> to vector<8x128xf32>
    %443 = arith.mulf %438, %442 : vector<8x128xf32>
    %444 = vector.broadcast %6 : vector<1x128xf32> to vector<8x128xf32>
    %445 = arith.mulf %443, %444 : vector<8x128xf32>
    %446 = vector.broadcast %7 : vector<1x128xf32> to vector<8x128xf32>
    %447 = arith.addf %445, %446 : vector<8x128xf32>
    %448 = arith.truncf %447 : vector<8x128xf32> to vector<8x128xbf16>
    %cst_114 = arith.constant dense<0.000000e+00> : vector<8x256xf32>
    %449 = tpu.matmul %448, %8, %cst_114 {dimension_numbers = #tpu.dot_dimension_numbers<[1], [0], [0], [1], [0, 0, 1, 1], [], []>} : vector<8x128xbf16>, vector<128x256xbf16>, vector<8x256xf32> -> vector<8x256xf32>
    %450 = vector.extract_strided_slice %425 {offsets = [0, 0], sizes = [8, 128], strides = [1, 1]} : vector<8x384xf32> to vector<8x128xf32>
    %451 = vector.extract_strided_slice %449 {offsets = [0, 0], sizes = [8, 128], strides = [1, 1]} : vector<8x256xf32> to vector<8x128xf32>
    %452 = arith.addf %450, %451 : vector<8x128xf32>
    %453 = arith.negf %452 : vector<8x128xf32>
    %454 = math.exp %453 : vector<8x128xf32>
    %cst_115 = arith.constant 1.000000e+00 : f32
    %455 = vector.broadcast %cst_115 : f32 to vector<8x128xf32>
    %456 = arith.addf %455, %454 : vector<8x128xf32>
    %457 = arith.divf %455, %456 : vector<8x128xf32>
    %458 = vector.extract_strided_slice %425 {offsets = [0, 128], sizes = [8, 128], strides = [1, 1]} : vector<8x384xf32> to vector<8x128xf32>
    %459 = vector.extract_strided_slice %449 {offsets = [0, 128], sizes = [8, 128], strides = [1, 1]} : vector<8x256xf32> to vector<8x128xf32>
    %460 = arith.addf %458, %459 : vector<8x128xf32>
    %461 = arith.negf %460 : vector<8x128xf32>
    %462 = math.exp %461 : vector<8x128xf32>
    %cst_116 = arith.constant 1.000000e+00 : f32
    %463 = vector.broadcast %cst_116 : f32 to vector<8x128xf32>
    %464 = arith.addf %463, %462 : vector<8x128xf32>
    %465 = arith.divf %463, %464 : vector<8x128xf32>
    %466 = arith.mulf %465, %447 : vector<8x128xf32>
    %467 = arith.truncf %466 : vector<8x128xf32> to vector<8x128xbf16>
    %cst_117 = arith.constant dense<0.000000e+00> : vector<8x128xf32>
    %468 = tpu.matmul %467, %9, %cst_117 {dimension_numbers = #tpu.dot_dimension_numbers<[1], [0], [0], [1], [0, 0, 1, 1], [], []>} : vector<8x128xbf16>, vector<128x128xbf16>, vector<8x128xf32> -> vector<8x128xf32>
    %469 = vector.extract_strided_slice %425 {offsets = [0, 256], sizes = [8, 128], strides = [1, 1]} : vector<8x384xf32> to vector<8x128xf32>
    %470 = arith.addf %468, %469 : vector<8x128xf32>
    %471 = math.tanh %470 : vector<8x128xf32>
    %472 = arith.subf %471, %447 : vector<8x128xf32>
    %473 = arith.mulf %457, %472 : vector<8x128xf32>
    %474 = arith.addf %447, %473 : vector<8x128xf32>
    %c8_i32_118 = arith.constant 8 : i32
    %475 = arith.muli %arg1, %c8_i32_118 : i32
    %c7_i32 = arith.constant 7 : i32
    %476 = arith.addi %475, %c7_i32 : i32
    %c10_i32_119 = arith.constant 10 : i32
    %477 = arith.cmpi slt, %476, %c10_i32_119 : i32
    %478 = arith.select %477, %474, %423 : vector<8x128xf32>
    %c56 = arith.constant 56 : index
    %c0_120 = arith.constant 0 : index
    %479 = vector.load %arg14[%c56, %c0_120] : memref<64x128xf32, #tpu.memory_space<vmem>>, vector<8x128xf32>
    tpu.vector_store %arg14[%c56, %c0_120], %478 {strides = array<i32>} : memref<64x128xf32, #tpu.memory_space<vmem>>, vector<8x128xf32>,
    %c0_121 = arith.constant 0 : index
    %c0_122 = arith.constant 0 : index
    %480 = vector.load %arg13[%c0_121, %c0_122] : memref<8x128xf32, #tpu.memory_space<vmem>>, vector<8x128xf32>
    tpu.vector_store %arg13[%c0_121, %c0_122], %478 {strides = array<i32>} : memref<8x128xf32, #tpu.memory_space<vmem>>, vector<8x128xf32>,
    %c0_123 = arith.constant 0 : index
    %c0_124 = arith.constant 0 : index
    %481 = vector.load %arg14[%c0_123, %c0_124] : memref<64x128xf32, #tpu.memory_space<vmem>>, vector<64x128xf32>
    %482 = arith.truncf %481 : vector<64x128xf32> to vector<64x128xbf16>
    %c0_125 = arith.constant 0 : index
    %c0_126 = arith.constant 0 : index
    %483 = vector.load %arg10[%c0_125, %c0_126] : memref<128x128xbf16, #tpu.memory_space<vmem>>, vector<128x128xbf16>
    %cst_127 = arith.constant dense<0.000000e+00> : vector<64x128xf32>
    %484 = tpu.matmul %482, %483, %cst_127 {dimension_numbers = #tpu.dot_dimension_numbers<[1], [0], [0], [1], [0, 0, 1, 1], [], []>} : vector<64x128xbf16>, vector<128x128xbf16>, vector<64x128xf32> -> vector<64x128xf32>
    %c0_128 = arith.constant 0 : index
    %c0_129 = arith.constant 0 : index
    %485 = vector.load %arg11[%c0_128, %c0_129] : memref<1x128xf32, #tpu.memory_space<vmem>>, vector<1x128xf32>
    %486 = vector.broadcast %485 : vector<1x128xf32> to vector<64x128xf32>
    %487 = arith.addf %484, %486 : vector<64x128xf32>
    %488 = vector.shape_cast %487 : vector<64x128xf32> to vector<8x8x128xf32>
    %c0_130 = arith.constant 0 : index
    %c0_131 = arith.constant 0 : index
    %c0_132 = arith.constant 0 : index
    %489 = vector.load %arg12[%c0_130, %c0_131, %c0_132] : memref<8x8x128xf32, #tpu.memory_space<vmem>>, vector<8x8x128xf32>
    tpu.vector_store %arg12[%c0_130, %c0_131, %c0_132], %488 {strides = array<i32>} : memref<8x8x128xf32, #tpu.memory_space<vmem>>, vector<8x8x128xf32>,
    return
  }
  func.func @transform_0(%arg0: i32, %arg1: i32) -> (i32, i32, i32) {
    %c0_i32 = arith.constant 0 : i32
    %c0_i32_0 = arith.constant 0 : i32
    return %arg1, %arg0, %c0_i32 : i32, i32, i32
  }
  func.func @transform_1(%arg0: i32, %arg1: i32) -> (i32, i32) {
    %c0_i32 = arith.constant 0 : i32
    %c0_i32_0 = arith.constant 0 : i32
    return %arg0, %c0_i32 : i32, i32
  }
  func.func @transform_2(%arg0: i32, %arg1: i32) -> (i32, i32) {
    %c0_i32 = arith.constant 0 : i32
    %c0_i32_0 = arith.constant 0 : i32
    %c0_i32_1 = arith.constant 0 : i32
    return %c0_i32, %c0_i32_0 : i32, i32
  }
  func.func @transform_3(%arg0: i32, %arg1: i32) -> (i32, i32) {
    %c0_i32 = arith.constant 0 : i32
    %c0_i32_0 = arith.constant 0 : i32
    %c0_i32_1 = arith.constant 0 : i32
    return %c0_i32, %c0_i32_0 : i32, i32
  }
  func.func @transform_4(%arg0: i32, %arg1: i32) -> (i32, i32) {
    %c0_i32 = arith.constant 0 : i32
    %c0_i32_0 = arith.constant 0 : i32
    %c0_i32_1 = arith.constant 0 : i32
    return %c0_i32, %c0_i32_0 : i32, i32
  }
  func.func @transform_5(%arg0: i32, %arg1: i32) -> (i32, i32) {
    %c0_i32 = arith.constant 0 : i32
    %c0_i32_0 = arith.constant 0 : i32
    %c0_i32_1 = arith.constant 0 : i32
    return %c0_i32, %c0_i32_0 : i32, i32
  }
  func.func @transform_6(%arg0: i32, %arg1: i32) -> (i32, i32) {
    %c0_i32 = arith.constant 0 : i32
    %c0_i32_0 = arith.constant 0 : i32
    %c0_i32_1 = arith.constant 0 : i32
    return %c0_i32, %c0_i32_0 : i32, i32
  }
  func.func @transform_7(%arg0: i32, %arg1: i32) -> (i32, i32) {
    %c0_i32 = arith.constant 0 : i32
    %c0_i32_0 = arith.constant 0 : i32
    %c0_i32_1 = arith.constant 0 : i32
    return %c0_i32, %c0_i32_0 : i32, i32
  }
  func.func @transform_8(%arg0: i32, %arg1: i32) -> (i32, i32) {
    %c0_i32 = arith.constant 0 : i32
    %c0_i32_0 = arith.constant 0 : i32
    %c0_i32_1 = arith.constant 0 : i32
    return %c0_i32, %c0_i32_0 : i32, i32
  }
  func.func @transform_9(%arg0: i32, %arg1: i32) -> (i32, i32) {
    %c0_i32 = arith.constant 0 : i32
    %c0_i32_0 = arith.constant 0 : i32
    %c0_i32_1 = arith.constant 0 : i32
    return %c0_i32, %c0_i32_0 : i32, i32
  }
  func.func @transform_10(%arg0: i32, %arg1: i32) -> (i32, i32, i32) {
    %c0_i32 = arith.constant 0 : i32
    %c0_i32_0 = arith.constant 0 : i32
    return %arg1, %arg0, %c0_i32 : i32, i32, i32
  }
  func.func @transform_11(%arg0: i32, %arg1: i32) -> (i32, i32) {
    %c0_i32 = arith.constant 0 : i32
    %c0_i32_0 = arith.constant 0 : i32
    return %arg0, %c0_i32 : i32, i32
  }
}

</mosaic_0001>

<llo_original>
// kernel: tpu_custom_call.1
$region0: #{tpu_custom_call.1}
  #allocation0 [shape = 'u32[]', space=smem, size = 0x4, offset = 0x4, fixed_abs, tag = 'smem constant byte address 0x4 - core index']
  #allocation1 [shape = 'u32[144,128]{1,0:T(1,128)}', space=vmem, size = 0x12000, scoped, tag = 'internal scratch']
  #allocation2 [shape = 'f32[64,128]{1,0:T(8,128)}', space=vmem, size = 0x8000, scoped, tag = 'scratch operand']
  %s0 = inlined_call_operand.hbm [shape: f32[16,16,128], index: 0, kind: input, shape index: {}]
  %s1 = inlined_call_operand.hbm [shape: f32[16,128], index: 1, kind: input, shape index: {}]
  %s2 = inlined_call_operand.vmem [shape: f32[2,128], index: 2, kind: input, shape index: {}]
  %s3 = inlined_call_operand.vmem [shape: f32[2,128], index: 3, kind: input, shape index: {}]
  %s4 = inlined_call_operand.hbm [shape: bf16[128,256], index: 4, kind: input, shape index: {}]
  %s5 = inlined_call_operand.hbm [shape: bf16[128,384], index: 5, kind: input, shape index: {}]
  %s6 = inlined_call_operand.vmem [shape: f32[1,384], index: 6, kind: input, shape index: {}]
  %s7 = inlined_call_operand.hbm [shape: bf16[128,128], index: 7, kind: input, shape index: {}]
  %s8 = inlined_call_operand.hbm [shape: bf16[128,128], index: 8, kind: input, shape index: {}]
  %s9 = inlined_call_operand.vmem [shape: f32[1,128], index: 9, kind: input, shape index: {}]
  %s10 = inlined_call_operand.hbm [shape: f32[16,16,128], index: 10, kind: output, shape index: {0}]
  %s11 = inlined_call_operand.hbm [shape: f32[16,128], index: 11, kind: output, shape index: {1}]
  %12 = xla_tuple %s10, %s11
  %s13 = sld [smem:[#allocation0]]
  $region109: #{tpu_custom_call.1} parent=0
    _
  %s15 = ssub.s32 1, %s13
  %s16 = scalar_select 0, %s15, %s13
  $region1: #{tpu_custom_call.1} parent=0
    #allocation3 [shape = 'u8[65536]{0}', space=vmem, size = 0x10000, scoped, tag = 'input window, operand 0']
    #allocation4 [shape = 's32[2]{0}', space=sflag, size = 0x8, scoped, tag = 'scoped memory for tpu_custom_call.1']
    #allocation5 [shape = 's32[2]{0}', space=sflag, size = 0x8, scoped, tag = 'scoped memory for tpu_custom_call.1']
    #allocation6 [shape = 'u8[8192]{0}', space=vmem, size = 0x2000, scoped, tag = 'input window, operand 1']
    #allocation7 [shape = 's32[2]{0}', space=sflag, size = 0x8, scoped, tag = 'scoped memory for tpu_custom_call.1']
    #allocation8 [shape = 'u8[65536]{0}', space=vmem, size = 0x10000, scoped, tag = 'input window, operand 4, single buffered']
    #allocation9 [shape = 'u8[98304]{0}', space=vmem, size = 0x18000, scoped, tag = 'input window, operand 5, single buffered']
    #allocation10 [shape = 's32[1]{0}', space=sflag, size = 0x4, scoped, tag = 'scoped memory for tpu_custom_call.1']
    #allocation11 [shape = 'u8[32768]{0}', space=vmem, size = 0x8000, scoped, tag = 'input window, operand 7, single buffered']
    #allocation12 [shape = 'u8[32768]{0}', space=vmem, size = 0x8000, scoped, tag = 'input window, operand 8, single buffered']
    #allocation13 [shape = 's32[1]{0}', space=sflag, size = 0x4, scoped, tag = 'scoped memory for tpu_custom_call.1']
    #allocation14 [shape = 'u8[65536]{0}', space=vmem, size = 0x10000, scoped, tag = 'output window, operand 0']
    #allocation15 [shape = 'u8[8192]{0}', space=vmem, size = 0x2000, scoped, tag = 'output window, operand 1']
    #allocation16 [shape = 's32[2]{0}', space=sflag, size = 0x8, scoped, tag = 'scoped memory for tpu_custom_call.1']
    %17 = vsyncpa [#allocation4], 0
    %s18 = scalar_lea.sflag [#allocation4], 1
    %19 = vsyncpa %s18, 0
    %20 = vsyncpa [#allocation7], 0
    %s21 = scalar_lea.sflag [#allocation7], 1
    %22 = vsyncpa %s21, 0
    %23 = vsyncpa [#allocation10], 0
    %24 = vsyncpa [#allocation13], 0
    %25 = vsyncpa [#allocation5], 0
    %s26 = scalar_lea.sflag [#allocation5], 1
    %27 = vsyncpa %s26, 0
    %28 = vsyncpa [#allocation16], 0
    %s29 = scalar_lea.sflag [#allocation16], 1
    %30 = vsyncpa %s29, 0
    loop: start=0, step=1, limit=6
    $region2: #{tpu_custom_call.1} parent=1 // loop_pre_header
      _
    $region3: #{tpu_custom_call.1} parent=1 // loop_header
      %s32 = sphi 0, %s36
      %p33 = scmp.ge.s32.totalorder %s32, 6
      %s39 = sphi 0, %s51
      %s40 = sphi 0, %s47
      %s41 = sphi 0, %s39
      %s42 = sphi 0, %s40
      %s43 = sphi 0, %s41
      %s44 = sphi 0, %s42
      %s56 = sphi 0, %s58
      %s59 = sphi 0, %s56
      %s60 = sphi 0, %s59
      %s76 = sphi 0, %s60
      %s82 = sphi 0, %s84
      %s85 = sphi 0, %s82
      %s86 = sphi 0, %s85
      %s102 = sphi 0, %s86
      %s106 = sphi 0, %s106
      %s108 = sphi 0, %s106
      %s109 = sphi 0, %s108
      %s123 = sphi 0, %s109
      %s127 = sphi 0, %s127
      %s129 = sphi 0, %s127
      %s130 = sphi 0, %s129
      %s144 = sphi 0, %s130
      %s148 = sphi 0, %s148
      %s150 = sphi 0, %s148
      %s151 = sphi 0, %s150
      %s165 = sphi 0, %s151
      %s169 = sphi 0, %s169
      %s171 = sphi 0, %s169
      %s172 = sphi 0, %s171
      %s186 = sphi 0, %s172
      %s190 = sphi 0, %s190
      %s192 = sphi 0, %s190
      %s193 = sphi 0, %s192
      %s207 = sphi 0, %s193
      %s211 = sphi 0, %s211
      %s213 = sphi 0, %s211
      %s214 = sphi 0, %s213
      %s228 = sphi 0, %s214
      %s232 = sphi 0, %s232
      %s234 = sphi 0, %s232
      %s235 = sphi 0, %s234
      %s249 = sphi 0, %s235
      %s253 = sphi 0, %s253
      %s255 = sphi 0, %s253
      %s256 = sphi 0, %s255
      %s270 = sphi 0, %s256
      %s278 = sphi 0, %s280
      %s281 = sphi 0, %s278
      %s282 = sphi 0, %s281
      %s298 = sphi 0, %s282
      %s304 = sphi 0, %s306
      %s307 = sphi 0, %s304
      %s308 = sphi 0, %s307
      %s324 = sphi 0, %s308
    $region4: #{tpu_custom_call.1} parent=1 // loop_header_branch
      %35 = sbr.rel (%p33) target = $region8
    $region5: #{tpu_custom_call.1} parent=1 // loop_body
      %s37 = ssub.s32 %s32, 1
      %s38 = ssub.s32 %s32, 2
      %s45 = sadd.s32 1, %s40
      %p46 = scmp.ge.s32.totalorder %s45, 2
      %s47 = scalar_select %p46, 0, %s45
      %s48 = sadd.s32 1, %s39
      %s49 = scalar_select %p46, %s48, %s39
      %p50 = scmp.ge.s32.totalorder %s49, 2
      %s51 = scalar_select %p50, 0, %s49
      %s52 = ssub.s32 %s40, %s47
      %s53 = ssub.s32 %s39, %s51
      %s54 = sor.u32 %s52, %s53
      %p55 = scmp.eq.s32.totalorder %s54, 0
      %s57 = sadd.s32 %s56, 1
      %s58 = scalar_select %p55, %s56, %s57
      %p61 = pneg %p55
      %p62 = scmp.eq.s32.totalorder %s32, 3
      %p63 = por %p61, %p62
      %p64 = scmp.ne.s32.totalorder %s56, %s59
      %p65 = scmp.eq.s32.totalorder %s32, 0
      %p66 = por %p64, %p65
      %p67 = scmp.ne.s32.totalorder %s56, %s59
      %p68 = scmp.eq.s32.totalorder %s37, 3
      %p69 = por %p67, %p68
      %p70 = scmp.ne.s32.totalorder %s59, %s60
      %p71 = scmp.eq.s32.totalorder %s37, 0
      %p72 = por %p70, %p71
      %p73 = scmp.ne.s32.totalorder %s59, %s60
      %p74 = scmp.eq.s32.totalorder %s38, 3
      %p75 = por %p73, %p74
      %p77 = scmp.ne.s32.totalorder %s60, %s76
      %p78 = scmp.eq.s32.totalorder %s38, 0
      %p79 = por %p77, %p78
      %s80 = ssub.s32 %s39, %s51
      %p81 = scmp.eq.s32.totalorder %s80, 0
      %s83 = sadd.s32 %s82, 1
      %s84 = scalar_select %p81, %s82, %s83
      %p87 = pneg %p81
      %p88 = scmp.eq.s32.totalorder %s32, 3
      %p89 = por %p87, %p88
      %p90 = scmp.ne.s32.totalorder %s82, %s85
      %p91 = scmp.eq.s32.totalorder %s32, 0
      %p92 = por %p90, %p91
      %p93 = scmp.ne.s32.totalorder %s82, %s85
      %p94 = scmp.eq.s32.totalorder %s37, 3
      %p95 = por %p93, %p94
      %p96 = scmp.ne.s32.totalorder %s85, %s86
      %p97 = scmp.eq.s32.totalorder %s37, 0
      %p98 = por %p96, %p97
      %p99 = scmp.ne.s32.totalorder %s85, %s86
      %p100 = scmp.eq.s32.totalorder %s38, 3
      %p101 = por %p99, %p100
      %p103 = scmp.ne.s32.totalorder %s86, %s102
      %p104 = scmp.eq.s32.totalorder %s38, 0
      %p105 = por %p103, %p104
      %s107 = sadd.s32 %s106, 1
      %p110 = scmp.eq.s32.totalorder %s32, 3
      %p111 = scmp.ne.s32.totalorder %s106, %s108
      %p112 = scmp.eq.s32.totalorder %s32, 0
      %p113 = por %p111, %p112
      %p114 = scmp.ne.s32.totalorder %s106, %s108
      %p115 = scmp.eq.s32.totalorder %s37, 3
      %p116 = por %p114, %p115
      %p117 = scmp.ne.s32.totalorder %s108, %s109
      %p118 = scmp.eq.s32.totalorder %s37, 0
      %p119 = por %p117, %p118
      %p120 = scmp.ne.s32.totalorder %s108, %s109
      %p121 = scmp.eq.s32.totalorder %s38, 3
      %p122 = por %p120, %p121
      %p124 = scmp.ne.s32.totalorder %s109, %s123
      %p125 = scmp.eq.s32.totalorder %s38, 0
      %p126 = por %p124, %p125
      %s128 = sadd.s32 %s127, 1
      %p131 = scmp.eq.s32.totalorder %s32, 3
      %p132 = scmp.ne.s32.totalorder %s127, %s129
      %p133 = scmp.eq.s32.totalorder %s32, 0
      %p134 = por %p132, %p133
      %p135 = scmp.ne.s32.totalorder %s127, %s129
      %p136 = scmp.eq.s32.totalorder %s37, 3
      %p137 = por %p135, %p136
      %p138 = scmp.ne.s32.totalorder %s129, %s130
      %p139 = scmp.eq.s32.totalorder %s37, 0
      %p140 = por %p138, %p139
      %p141 = scmp.ne.s32.totalorder %s129, %s130
      %p142 = scmp.eq.s32.totalorder %s38, 3
      %p143 = por %p141, %p142
      %p145 = scmp.ne.s32.totalorder %s130, %s144
      %p146 = scmp.eq.s32.totalorder %s38, 0
      %p147 = por %p145, %p146
      %s149 = sadd.s32 %s148, 1
      %p152 = scmp.eq.s32.totalorder %s32, 3
      %p153 = scmp.ne.s32.totalorder %s148, %s150
      %p154 = scmp.eq.s32.totalorder %s32, 0
      %p155 = por %p153, %p154
      %p156 = scmp.ne.s32.totalorder %s148, %s150
      %p157 = scmp.eq.s32.totalorder %s37, 3
      %p158 = por %p156, %p157
      %p159 = scmp.ne.s32.totalorder %s150, %s151
      %p160 = scmp.eq.s32.totalorder %s37, 0
      %p161 = por %p159, %p160
      %p162 = scmp.ne.s32.totalorder %s150, %s151
      %p163 = scmp.eq.s32.totalorder %s38, 3
      %p164 = por %p162, %p163
      %p166 = scmp.ne.s32.totalorder %s151, %s165
      %p167 = scmp.eq.s32.totalorder %s38, 0
      %p168 = por %p166, %p167
      %s170 = sadd.s32 %s169, 1
      %p173 = scmp.eq.s32.totalorder %s32, 3
      %p174 = scmp.ne.s32.totalorder %s169, %s171
      %p175 = scmp.eq.s32.totalorder %s32, 0
      %p176 = por %p174, %p175
      %p177 = scmp.ne.s32.totalorder %s169, %s171
      %p178 = scmp.eq.s32.totalorder %s37, 3
      %p179 = por %p177, %p178
      %p180 = scmp.ne.s32.totalorder %s171, %s172
      %p181 = scmp.eq.s32.totalorder %s37, 0
      %p182 = por %p180, %p181
      %p183 = scmp.ne.s32.totalorder %s171, %s172
      %p184 = scmp.eq.s32.totalorder %s38, 3
      %p185 = por %p183, %p184
      %p187 = scmp.ne.s32.totalorder %s172, %s186
      %p188 = scmp.eq.s32.totalorder %s38, 0
      %p189 = por %p187, %p188
      %s191 = sadd.s32 %s190, 1
      %p194 = scmp.eq.s32.totalorder %s32, 3
      %p195 = scmp.ne.s32.totalorder %s190, %s192
      %p196 = scmp.eq.s32.totalorder %s32, 0
      %p197 = por %p195, %p196
      %p198 = scmp.ne.s32.totalorder %s190, %s192
      %p199 = scmp.eq.s32.totalorder %s37, 3
      %p200 = por %p198, %p199
      %p201 = scmp.ne.s32.totalorder %s192, %s193
      %p202 = scmp.eq.s32.totalorder %s37, 0
      %p203 = por %p201, %p202
      %p204 = scmp.ne.s32.totalorder %s192, %s193
      %p205 = scmp.eq.s32.totalorder %s38, 3
      %p206 = por %p204, %p205
      %p208 = scmp.ne.s32.totalorder %s193, %s207
      %p209 = scmp.eq.s32.totalorder %s38, 0
      %p210 = por %p208, %p209
      %s212 = sadd.s32 %s211, 1
      %p215 = scmp.eq.s32.totalorder %s32, 3
      %p216 = scmp.ne.s32.totalorder %s211, %s213
      %p217 = scmp.eq.s32.totalorder %s32, 0
      %p218 = por %p216, %p217
      %p219 = scmp.ne.s32.totalorder %s211, %s213
      %p220 = scmp.eq.s32.totalorder %s37, 3
      %p221 = por %p219, %p220
      %p222 = scmp.ne.s32.totalorder %s213, %s214
      %p223 = scmp.eq.s32.totalorder %s37, 0
      %p224 = por %p222, %p223
      %p225 = scmp.ne.s32.totalorder %s213, %s214
      %p226 = scmp.eq.s32.totalorder %s38, 3
      %p227 = por %p225, %p226
      %p229 = scmp.ne.s32.totalorder %s214, %s228
      %p230 = scmp.eq.s32.totalorder %s38, 0
      %p231 = por %p229, %p230
      %s233 = sadd.s32 %s232, 1
      %p236 = scmp.eq.s32.totalorder %s32, 3
      %p237 = scmp.ne.s32.totalorder %s232, %s234
      %p238 = scmp.eq.s32.totalorder %s32, 0
      %p239 = por %p237, %p238
      %p240 = scmp.ne.s32.totalorder %s232, %s234
      %p241 = scmp.eq.s32.totalorder %s37, 3
      %p242 = por %p240, %p241
      %p243 = scmp.ne.s32.totalorder %s234, %s235
      %p244 = scmp.eq.s32.totalorder %s37, 0
      %p245 = por %p243, %p244
      %p246 = scmp.ne.s32.totalorder %s234, %s235
      %p247 = scmp.eq.s32.totalorder %s38, 3
      %p248 = por %p246, %p247
      %p250 = scmp.ne.s32.totalorder %s235, %s249
      %p251 = scmp.eq.s32.totalorder %s38, 0
      %p252 = por %p250, %p251
      %s254 = sadd.s32 %s253, 1
      %p257 = scmp.eq.s32.totalorder %s32, 3
      %p258 = scmp.ne.s32.totalorder %s253, %s255
      %p259 = scmp.eq.s32.totalorder %s32, 0
      %p260 = por %p258, %p259
      %p261 = scmp.ne.s32.totalorder %s253, %s255
      %p262 = scmp.eq.s32.totalorder %s37, 3
      %p263 = por %p261, %p262
      %p264 = scmp.ne.s32.totalorder %s255, %s256
      %p265 = scmp.eq.s32.totalorder %s37, 0
      %p266 = por %p264, %p265
      %p267 = scmp.ne.s32.totalorder %s255, %s256
      %p268 = scmp.eq.s32.totalorder %s38, 3
      %p269 = por %p267, %p268
      %p271 = scmp.ne.s32.totalorder %s256, %s270
      %p272 = scmp.eq.s32.totalorder %s38, 0
      %p273 = por %p271, %p272
      %s274 = ssub.s32 %s40, %s47
      %s275 = ssub.s32 %s39, %s51
      %s276 = sor.u32 %s274, %s275
      %p277 = scmp.eq.s32.totalorder %s276, 0
      %s279 = sadd.s32 %s278, 1
      %s280 = scalar_select %p277, %s278, %s279
      %p283 = pneg %p277
      %p284 = scmp.eq.s32.totalorder %s32, 3
      %p285 = por %p283, %p284
      %p286 = scmp.ne.s32.totalorder %s278, %s281
      %p287 = scmp.eq.s32.totalorder %s32, 0
      %p288 = por %p286, %p287
      %p289 = scmp.ne.s32.totalorder %s278, %s281
      %p290 = scmp.eq.s32.totalorder %s37, 3
      %p291 = por %p289, %p290
      %p292 = scmp.ne.s32.totalorder %s281, %s282
      %p293 = scmp.eq.s32.totalorder %s37, 0
      %p294 = por %p292, %p293
      %p295 = scmp.ne.s32.totalorder %s281, %s282
      %p296 = scmp.eq.s32.totalorder %s38, 3
      %p297 = por %p295, %p296
      %p299 = scmp.ne.s32.totalorder %s282, %s298
      %p300 = scmp.eq.s32.totalorder %s38, 0
      %p301 = por %p299, %p300
      %s302 = ssub.s32 %s39, %s51
      %p303 = scmp.eq.s32.totalorder %s302, 0
      %s305 = sadd.s32 %s304, 1
      %s306 = scalar_select %p303, %s304, %s305
      %p309 = pneg %p303
      %p310 = scmp.eq.s32.totalorder %s32, 3
      %p311 = por %p309, %p310
      %p312 = scmp.ne.s32.totalorder %s304, %s307
      %p313 = scmp.eq.s32.totalorder %s32, 0
      %p314 = por %p312, %p313
      %p315 = scmp.ne.s32.totalorder %s304, %s307
      %p316 = scmp.eq.s32.totalorder %s37, 3
      %p317 = por %p315, %p316
      %p318 = scmp.ne.s32.totalorder %s307, %s308
      %p319 = scmp.eq.s32.totalorder %s37, 0
      %p320 = por %p318, %p319
      %p321 = scmp.ne.s32.totalorder %s307, %s308
      %p322 = scmp.eq.s32.totalorder %s38, 3
      %p323 = por %p321, %p322
      %p325 = scmp.ne.s32.totalorder %s308, %s324
      %p326 = scmp.eq.s32.totalorder %s38, 0
      %p327 = por %p325, %p326
      %p328 = scmp.le.s32.totalorder 1, %s32
      %p329 = scmp.lt.s32.totalorder %s32, 5
      %p330 = pnand %p328, %p329
      %p331 = pneg %p330
      // Predicated region
      $region9: #{tpu_custom_call.1} parent=5 // pred_check
        _
      $region10: #{tpu_custom_call.1} parent=5 // pred_check_branch
        %333 = sbr.rel (%p330) target = $region12
      $region11: #{tpu_custom_call.1} parent=5 // pred_region
        %s334 = ssub.s32 %s32, 1
        // Predicated region
        $region13: #{tpu_custom_call.1} parent=11 // pred_check
          %p335 = pneg %p119
        $region14: #{tpu_custom_call.1} parent=11 // pred_check_branch
          %337 = sbr.rel (%p335) target = $region16
        $region15: #{tpu_custom_call.1} parent=11 // pred_region
          _
        $region16: #{tpu_custom_call.1} parent=11 // pred_fallthru
          _
        // Predicated region
        $region17: #{tpu_custom_call.1} parent=11 // pred_check
          %p338 = pneg %p140
        $region18: #{tpu_custom_call.1} parent=11 // pred_check_branch
          %340 = sbr.rel (%p338) target = $region20
        $region19: #{tpu_custom_call.1} parent=11 // pred_region
          _
        $region20: #{tpu_custom_call.1} parent=11 // pred_fallthru
          _
        // Predicated region
        $region21: #{tpu_custom_call.1} parent=11 // pred_check
          %p341 = pneg %p161
        $region22: #{tpu_custom_call.1} parent=11 // pred_check_branch
          %343 = sbr.rel (%p341) target = $region24
        $region23: #{tpu_custom_call.1} parent=11 // pred_region
          %s345 = ssub.s32 2048, 2048
          %346 = vsyncadd [#allocation7], %s345
          %s347 = sshll.u32 [#allocation8], 4
          %s348 = int_to_ptr.vmem [resolvable:$true] %s347
          %353 = dma.hbm_to_vmem [thread:$0]  %s4, 2048, %s348, [#allocation7], 128, 128, 8
        $region24: #{tpu_custom_call.1} parent=11 // pred_fallthru
          _
        // Predicated region
        $region25: #{tpu_custom_call.1} parent=11 // pred_check
          %p354 = pneg %p182
        $region26: #{tpu_custom_call.1} parent=11 // pred_check_branch
          %356 = sbr.rel (%p354) target = $region28
        $region27: #{tpu_custom_call.1} parent=11 // pred_region
          %s358 = ssub.s32 3072, 3072
          %359 = vsyncadd [#allocation10], %s358
          %s360 = sshll.u32 [#allocation9], 4
          %s361 = int_to_ptr.vmem [resolvable:$true] %s360
          %366 = dma.hbm_to_vmem [thread:$0]  %s5, 3072, %s361, [#allocation10], 192, 192, 12
        $region28: #{tpu_custom_call.1} parent=11 // pred_fallthru
          _
        // Predicated region
        $region29: #{tpu_custom_call.1} parent=11 // pred_check
          %p367 = pneg %p203
        $region30: #{tpu_custom_call.1} parent=11 // pred_check_branch
          %369 = sbr.rel (%p367) target = $region32
        $region31: #{tpu_custom_call.1} parent=11 // pred_region
          _
        $region32: #{tpu_custom_call.1} parent=11 // pred_fallthru
          _
        // Predicated region
        $region33: #{tpu_custom_call.1} parent=11 // pred_check
          %p370 = pneg %p224
        $region34: #{tpu_custom_call.1} parent=11 // pred_check_branch
          %372 = sbr.rel (%p370) target = $region36
        $region35: #{tpu_custom_call.1} parent=11 // pred_region
          %s374 = ssub.s32 1024, 1024
          %375 = vsyncadd [#allocation10], %s374
          %s376 = sshll.u32 [#allocation11], 4
          %s377 = int_to_ptr.vmem [resolvable:$true] %s376
          %382 = dma.hbm_to_vmem [thread:$0]  %s7, 1024, %s377, [#allocation10], 64, 64, 4
        $region36: #{tpu_custom_call.1} parent=11 // pred_fallthru
          _
        // Predicated region
        $region37: #{tpu_custom_call.1} parent=11 // pred_check
          %p383 = pneg %p245
        $region38: #{tpu_custom_call.1} parent=11 // pred_check_branch
          %385 = sbr.rel (%p383) target = $region40
        $region39: #{tpu_custom_call.1} parent=11 // pred_region
          %s387 = ssub.s32 1024, 1024
          %388 = vsyncadd [#allocation13], %s387
          %s389 = sshll.u32 [#allocation12], 4
          %s390 = int_to_ptr.vmem [resolvable:$true] %s389
          %395 = dma.hbm_to_vmem [thread:$0]  %s8, 1024, %s390, [#allocation13], 64, 64, 4
        $region40: #{tpu_custom_call.1} parent=11 // pred_fallthru
          _
        // Predicated region
        $region41: #{tpu_custom_call.1} parent=11 // pred_check
          %p396 = pneg %p266
        $region42: #{tpu_custom_call.1} parent=11 // pred_check_branch
          %398 = sbr.rel (%p396) target = $region44
        $region43: #{tpu_custom_call.1} parent=11 // pred_region
          _
        $region44: #{tpu_custom_call.1} parent=11 // pred_fallthru
          _
      $region12: #{tpu_custom_call.1} parent=5 // pred_fallthru
        _
      %p399 = scmp.lt.s32.totalorder %s32, 4
      // Predicated region
      $region45: #{tpu_custom_call.1} parent=5 // pred_check
        %p400 = pneg %p399
      $region46: #{tpu_custom_call.1} parent=5 // pred_check_branch
        %402 = sbr.rel (%p400) target = $region48
      $region47: #{tpu_custom_call.1} parent=5 // pred_region
        // Predicated region
        $region49: #{tpu_custom_call.1} parent=47 // pred_check
          %p403 = pneg %p66
        $region50: #{tpu_custom_call.1} parent=47 // pred_check_branch
          %405 = sbr.rel (%p403) target = $region52
        $region51: #{tpu_custom_call.1} parent=47 // pred_region
          %s406 = sand.u32 %s56, 1
          %s407 = scalar_lea.sflag [#allocation4], %s406
          %s408 = sand.u32 %s56, 1
          %s409 = smul.addr %s408, 64
          %s410 = scalar_lea.vmem [#allocation3], %s409
          %s411 = smul.u32 8, %s40
          %s413 = ssub.s32 1024, 1024
          %414 = vsyncadd %s407, %s413
          %s415 = smul.addr %s411, 2
          %s416 = sadd.s32 %s39, %s415
          %s417 = smul.addr %s416, 128
          %s418 = scalar_lea.hbm %s0, %s417
          %s419 = sshll.u32 %s410, 4
          %s420 = int_to_ptr.vmem [resolvable:$true] %s419
          %425 = dma.hbm_to_vmem [thread:$0]  %s418, 1024, %s420, %s407, 256, 128, 8
        $region52: #{tpu_custom_call.1} parent=47 // pred_fallthru
          _
        // Predicated region
        $region53: #{tpu_custom_call.1} parent=47 // pred_check
          %p426 = pneg %p92
        $region54: #{tpu_custom_call.1} parent=47 // pred_check_branch
          %428 = sbr.rel (%p426) target = $region56
        $region55: #{tpu_custom_call.1} parent=47 // pred_region
          %s429 = sand.u32 %s32, 1
          %s430 = scalar_lea.sflag [#allocation7], %s429
          %s431 = sand.u32 %s82, 1
          %s432 = smul.addr %s431, 8
          %s433 = scalar_lea.vmem [#allocation6], %s432
          %s435 = ssub.s32 128, 128
          %436 = vsyncadd %s430, %s435
          %s437 = smul.addr %s39, 128
          %s438 = scalar_lea.hbm %s1, %s437
          %s440 = sshll.u32 %s433, 4
          %s441 = int_to_ptr.vmem [resolvable:$true] %s440
          %443 = dma.hbm_to_vmem [thread:$0]  %s438, 128, %s441, %s430
        $region56: #{tpu_custom_call.1} parent=47 // pred_fallthru
          _
      $region48: #{tpu_custom_call.1} parent=5 // pred_fallthru
        _
      %p444 = scmp.le.s32.totalorder 1, %s32
      %p445 = scmp.lt.s32.totalorder %s32, 5
      %p446 = pnand %p444, %p445
      %p447 = pneg %p446
      // Predicated region
      $region57: #{tpu_custom_call.1} parent=5 // pred_check
        _
      $region58: #{tpu_custom_call.1} parent=5 // pred_check_branch
        %449 = sbr.rel (%p446) target = $region60
      $region59: #{tpu_custom_call.1} parent=5 // pred_region
        %s450 = ssub.s32 %s32, 1
        %s451 = sand.u32 %s59, 1
        %s452 = scalar_lea.sflag [#allocation4], %s451
        %s453 = sand.u32 %s59, 1
        %s454 = smul.addr %s453, 64
        %s455 = scalar_lea.vmem [#allocation3], %s454
        // Predicated region
        $region61: #{tpu_custom_call.1} parent=59 // pred_check
          %p456 = pneg %p72
        $region62: #{tpu_custom_call.1} parent=59 // pred_check_branch
          %458 = sbr.rel (%p456) target = $region64
        $region63: #{tpu_custom_call.1} parent=59 // pred_region
          %459 = dma.done %s452, 1024
        $region64: #{tpu_custom_call.1} parent=59 // pred_fallthru
          _
        %s460 = sand.u32 %s37, 1
        %s461 = scalar_lea.sflag [#allocation7], %s460
        %s462 = sand.u32 %s85, 1
        %s463 = smul.addr %s462, 8
        %s464 = scalar_lea.vmem [#allocation6], %s463
        // Predicated region
        $region65: #{tpu_custom_call.1} parent=59 // pred_check
          %p465 = pneg %p98
        $region66: #{tpu_custom_call.1} parent=59 // pred_check_branch
          %467 = sbr.rel (%p465) target = $region68
        $region67: #{tpu_custom_call.1} parent=59 // pred_region
          %468 = dma.done %s461, 128
        $region68: #{tpu_custom_call.1} parent=59 // pred_fallthru
          _
        // Predicated region
        $region69: #{tpu_custom_call.1} parent=59 // pred_check
          %p469 = pneg %p161
        $region70: #{tpu_custom_call.1} parent=59 // pred_check_branch
          %471 = sbr.rel (%p469) target = $region72
        $region71: #{tpu_custom_call.1} parent=59 // pred_region
          %472 = dma.done [#allocation7], 2048
        $region72: #{tpu_custom_call.1} parent=59 // pred_fallthru
          _
        // Predicated region
        $region73: #{tpu_custom_call.1} parent=59 // pred_check
          %p473 = pneg %p182
        $region74: #{tpu_custom_call.1} parent=59 // pred_check_branch
          %475 = sbr.rel (%p473) target = $region76
        $region75: #{tpu_custom_call.1} parent=59 // pred_region
          %476 = dma.done [#allocation10], 3072
        $region76: #{tpu_custom_call.1} parent=59 // pred_fallthru
          _
        // Predicated region
        $region77: #{tpu_custom_call.1} parent=59 // pred_check
          %p477 = pneg %p224
        $region78: #{tpu_custom_call.1} parent=59 // pred_check_branch
          %479 = sbr.rel (%p477) target = $region80
        $region79: #{tpu_custom_call.1} parent=59 // pred_region
          %480 = dma.done [#allocation10], 1024
        $region80: #{tpu_custom_call.1} parent=59 // pred_fallthru
          _
        // Predicated region
        $region81: #{tpu_custom_call.1} parent=59 // pred_check
          %p481 = pneg %p245
        $region82: #{tpu_custom_call.1} parent=59 // pred_check_branch
          %483 = sbr.rel (%p481) target = $region84
        $region83: #{tpu_custom_call.1} parent=59 // pred_region
          %484 = dma.done [#allocation13], 1024
        $region84: #{tpu_custom_call.1} parent=59 // pred_fallthru
          _
        %s485 = sand.u32 %s59, 1
        %s486 = scalar_lea.sflag [#allocation4], %s485
        %s487 = sand.u32 %s59, 1
        %s488 = smul.addr %s487, 64
        %s489 = scalar_lea.vmem [#allocation3], %s488
        %p490 = pneg %p72
        %p491 = pneg %p69
        %s492 = sand.u32 %s37, 1
        %s493 = scalar_lea.sflag [#allocation7], %s492
        %s494 = sand.u32 %s85, 1
        %s495 = smul.addr %s494, 8
        %s496 = scalar_lea.vmem [#allocation6], %s495
        %p497 = pneg %p98
        %p498 = pneg %p95
        %p499 = pneg %p119
        %p500 = pneg %p116
        %p501 = pneg %p140
        %p502 = pneg %p137
        %p503 = pneg %p161
        %p504 = pneg %p158
        %p505 = pneg %p182
        %p506 = pneg %p179
        %p507 = pneg %p203
        %p508 = pneg %p200
        %p509 = pneg %p224
        %p510 = pneg %p221
        %p511 = pneg %p245
        %p512 = pneg %p242
        %p513 = pneg %p266
        %p514 = pneg %p263
        %p515 = pneg %p294
        %p516 = pneg %p291
        %s517 = sand.u32 %s281, 1
        %s518 = scalar_lea.sflag [#allocation5], %s517
        %s519 = sand.u32 %s281, 1
        %s520 = smul.addr %s519, 64
        %s521 = scalar_lea.vmem [#allocation14], %s520
        %p522 = pneg %p320
        %p523 = pneg %p317
        %s524 = sand.u32 %s307, 1
        %s525 = scalar_lea.sflag [#allocation16], %s524
        %s526 = sand.u32 %s307, 1
        %s527 = smul.addr %s526, 8
        %s528 = scalar_lea.vmem [#allocation15], %s527
        %s529 = smul.u32 8, %s42
        %s530 = smul.u32 8, %s42
        %p532 = scmp.eq.s32.totalorder %s42, 0
        // Predicated region
        $region85: #{tpu_custom_call.1} parent=59 // pred_check
          %p533 = pneg %p532
        $region86: #{tpu_custom_call.1} parent=59 // pred_check_branch
          %535 = sbr.rel (%p533) target = $region88
        $region87: #{tpu_custom_call.1} parent=59 // pred_region
          %v536 = vld [vmem:[%s464] sm:$0xff]
          %537 = vst [vmem:[%s528] sm:$0xff] %v536
        $region88: #{tpu_custom_call.1} parent=59 // pred_fallthru
          _
        %v538 = vld [vmem:[%s528] sm:$0xff]
        %v539 = vld [vmem:[%s2] sm:$0x1]
        %v540 = vld [vmem:[%s2 + $0x1] sm:$0x1]
        %v541 = vld [vmem:[%s3] sm:$0x1]
        %v542 = vld [vmem:[%s3 + $0x1] sm:$0x1]
        %v543 = vld [vmem:[#allocation8] sm:$0xff]
        %v544 = vld [vmem:[#allocation8 + $0x8] sm:$0xff]
        %v545 = vld [vmem:[#allocation8 + $0x10] sm:$0xff]
        %v546 = vld [vmem:[#allocation8 + $0x18] sm:$0xff]
        %v547 = vld [vmem:[#allocation8 + $0x20] sm:$0xff]
        %v548 = vld [vmem:[#allocation8 + $0x28] sm:$0xff]
        %v549 = vld [vmem:[#allocation8 + $0x30] sm:$0xff]
        %v550 = vld [vmem:[#allocation8 + $0x38] sm:$0xff]
        %v551 = vld [vmem:[#allocation8 + $0x40] sm:$0xff]
        %v552 = vld [vmem:[#allocation8 + $0x48] sm:$0xff]
        %v553 = vld [vmem:[#allocation8 + $0x50] sm:$0xff]
        %v554 = vld [vmem:[#allocation8 + $0x58] sm:$0xff]
        %v555 = vld [vmem:[#allocation8 + $0x60] sm:$0xff]
        %v556 = vld [vmem:[#allocation8 + $0x68] sm:$0xff]
        %v557 = vld [vmem:[#allocation8 + $0x70] sm:$0xff]
        %v558 = vld [vmem:[#allocation8 + $0x78] sm:$0xff]
        %v559 = vld [vmem:[#allocation11] sm:$0xf]
        %v560 = vld [vmem:[#allocation11 + $0x4] sm:$0xf]
        %v561 = vld [vmem:[#allocation11 + $0x8] sm:$0xf]
        %v562 = vld [vmem:[#allocation11 + $0xc] sm:$0xf]
        %v563 = vld [vmem:[#allocation11 + $0x10] sm:$0xf]
        %v564 = vld [vmem:[#allocation11 + $0x14] sm:$0xf]
        %v565 = vld [vmem:[#allocation11 + $0x18] sm:$0xf]
        %v566 = vld [vmem:[#allocation11 + $0x1c] sm:$0xf]
        %v567 = vld [vmem:[#allocation11 + $0x20] sm:$0xf]
        %v568 = vld [vmem:[#allocation11 + $0x24] sm:$0xf]
        %v569 = vld [vmem:[#allocation11 + $0x28] sm:$0xf]
        %v570 = vld [vmem:[#allocation11 + $0x2c] sm:$0xf]
        %v571 = vld [vmem:[#allocation11 + $0x30] sm:$0xf]
        %v572 = vld [vmem:[#allocation11 + $0x34] sm:$0xf]
        %v573 = vld [vmem:[#allocation11 + $0x38] sm:$0xf]
        %v574 = vld [vmem:[#allocation11 + $0x3c] sm:$0xf]
        %v575 = vld [vmem:[%s455] sm:$0xff]
        %v576 = vld [vmem:[%s455 + $0x8] sm:$0xff]
        %v577 = vld [vmem:[%s455 + $0x10] sm:$0xff]
        %v578 = vld [vmem:[%s455 + $0x18] sm:$0xff]
        %v579 = vld [vmem:[%s455 + $0x20] sm:$0xff]
        %v580 = vld [vmem:[%s455 + $0x28] sm:$0xff]
        %v581 = vld [vmem:[%s455 + $0x30] sm:$0xff]
        %v582 = vld [vmem:[%s455 + $0x38] sm:$0xff]
        %583 = vadd.xlane.f32.xlu0 %v575
        %v584 = vpop.xlane.xlu0 %583
        %585 = vadd.xlane.f32.xlu0 %v576
        %v586 = vpop.xlane.xlu0 %585
        %587 = vadd.xlane.f32.xlu0 %v577
        %v588 = vpop.xlane.xlu0 %587
        %589 = vadd.xlane.f32.xlu0 %v578
        %v590 = vpop.xlane.xlu0 %589
        %591 = vadd.xlane.f32.xlu0 %v579
        %v592 = vpop.xlane.xlu0 %591
        %593 = vadd.xlane.f32.xlu0 %v580
        %v594 = vpop.xlane.xlu0 %593
        %595 = vadd.xlane.f32.xlu0 %v581
        %v596 = vpop.xlane.xlu0 %595
        %597 = vadd.xlane.f32.xlu0 %v582
        %v598 = vpop.xlane.xlu0 %597
        %v599 = vmul.f32 %v584, 0.0625
        %v600 = vmul.f32 %v586, 0.0625
        %v601 = vmul.f32 %v588, 0.0625
        %v602 = vmul.f32 %v590, 0.0625
        %v603 = vmul.f32 %v592, 0.0625
        %v604 = vmul.f32 %v594, 0.0625
        %v605 = vmul.f32 %v596, 0.0625
        %v606 = vmul.f32 %v598, 0.0625
        %v607 = vmul.f32 %v575, %v575
        %v608 = vmul.f32 %v576, %v576
        %v609 = vmul.f32 %v577, %v577
        %v610 = vmul.f32 %v578, %v578
        %v611 = vmul.f32 %v579, %v579
        %v612 = vmul.f32 %v580, %v580
        %v613 = vmul.f32 %v581, %v581
        %v614 = vmul.f32 %v582, %v582
        %615 = vadd.xlane.f32.xlu0 %v607
        %v616 = vpop.xlane.xlu0 %615
        %617 = vadd.xlane.f32.xlu0 %v608
        %v618 = vpop.xlane.xlu0 %617
        %619 = vadd.xlane.f32.xlu0 %v609
        %v620 = vpop.xlane.xlu0 %619
        %621 = vadd.xlane.f32.xlu0 %v610
        %v622 = vpop.xlane.xlu0 %621
        %623 = vadd.xlane.f32.xlu0 %v611
        %v624 = vpop.xlane.xlu0 %623
        %625 = vadd.xlane.f32.xlu0 %v612
        %v626 = vpop.xlane.xlu0 %625
        %627 = vadd.xlane.f32.xlu0 %v613
        %v628 = vpop.xlane.xlu0 %627
        %629 = vadd.xlane.f32.xlu0 %v614
        %v630 = vpop.xlane.xlu0 %629
        %v631 = vmul.f32 %v616, 0.0625
        %v632 = vmul.f32 %v618, 0.0625
        %v633 = vmul.f32 %v620, 0.0625
        %v634 = vmul.f32 %v622, 0.0625
        %v635 = vmul.f32 %v624, 0.0625
        %v636 = vmul.f32 %v626, 0.0625
        %v637 = vmul.f32 %v628, 0.0625
        %v638 = vmul.f32 %v630, 0.0625
        %v639 = vmul.f32 %v599, %v599
        %v640 = vmul.f32 %v600, %v600
        %v641 = vmul.f32 %v601, %v601
        %v642 = vmul.f32 %v602, %v602
        %v643 = vmul.f32 %v603, %v603
        %v644 = vmul.f32 %v604, %v604
        %v645 = vmul.f32 %v605, %v605
        %v646 = vmul.f32 %v606, %v606
        %v647 = vsub.f32 %v631, %v639
        %v648 = vsub.f32 %v632, %v640
        %v649 = vsub.f32 %v633, %v641
        %v650 = vsub.f32 %v634, %v642
        %v651 = vsub.f32 %v635, %v643
        %v652 = vsub.f32 %v636, %v644
        %v653 = vsub.f32 %v637, %v645
        %v654 = vsub.f32 %v638, %v646
        %v655 = vsub.f32 %v575, %v599
        %v656 = vsub.f32 %v576, %v600
        %v657 = vsub.f32 %v577, %v601
        %v658 = vsub.f32 %v578, %v602
        %v659 = vsub.f32 %v579, %v603
        %v660 = vsub.f32 %v580, %v604
        %v661 = vsub.f32 %v581, %v605
        %v662 = vsub.f32 %v582, %v606
        %v663 = vadd.f32 %v647, 1e-05
        %v664 = vadd.f32 %v648, 1e-05
        %v665 = vadd.f32 %v649, 1e-05
        %v666 = vadd.f32 %v650, 1e-05
        %v667 = vadd.f32 %v651, 1e-05
        %v668 = vadd.f32 %v652, 1e-05
        %v669 = vadd.f32 %v653, 1e-05
        %v670 = vadd.f32 %v654, 1e-05
        %v671 = vrsqrt.pop %v663
        %v672 = vrsqrt.pop %v664
        %v673 = vrsqrt.pop %v665
        %v674 = vrsqrt.pop %v666
        %v675 = vrsqrt.pop %v667
        %v676 = vrsqrt.pop %v668
        %v677 = vrsqrt.pop %v669
        %v678 = vrsqrt.pop %v670
        %v679 = vmul.f32 %v655, %v671
        %v680 = vmul.f32 %v656, %v672
        %v681 = vmul.f32 %v657, %v673
        %v682 = vmul.f32 %v658, %v674
        %v683 = vmul.f32 %v659, %v675
        %v684 = vmul.f32 %v660, %v676
        %v685 = vmul.f32 %v661, %v677
        %v686 = vmul.f32 %v662, %v678
        %v687 = vlaneseq
        %v688 = vshrl.u32 %v687, 7
        %v689 = vsub.s32 0, %v688
        %v690 = vrot.slane %v539, %v689
        %v691 = vmul.f32 %v679, %v690
        %v692 = vmul.f32 %v680, %v690
        %v693 = vmul.f32 %v681, %v690
        %v694 = vmul.f32 %v682, %v690
        %v695 = vmul.f32 %v683, %v690
        %v696 = vmul.f32 %v684, %v690
        %v697 = vmul.f32 %v685, %v690
        %v698 = vmul.f32 %v686, %v690
        %v699 = vlaneseq
        %v700 = vshrl.u32 %v699, 7
        %v701 = vsub.s32 0, %v700
        %v702 = vrot.slane %v540, %v701
        %v703 = vadd.f32 %v691, %v702
        %v704 = vadd.f32 %v692, %v702
        %v705 = vadd.f32 %v693, %v702
        %v706 = vadd.f32 %v694, %v702
        %v707 = vadd.f32 %v695, %v702
        %v708 = vadd.f32 %v696, %v702
        %v709 = vadd.f32 %v697, %v702
        %v710 = vadd.f32 %v698, %v702
        %v711 = vpack.c.bf16 %v704, %v703
        %v712 = vpack.c.bf16 %v706, %v705
        %v713 = vpack.c.bf16 %v708, %v707
        %v714 = vpack.c.bf16 %v710, %v709
        %v715 = vld [vmem:[#allocation9] sm:$0xff]
        %v716 = vld [vmem:[#allocation9 + $0x8] sm:$0xf]
        %v717 = vld [vmem:[#allocation9 + $0xc] sm:$0xff]
        %v718 = vld [vmem:[#allocation9 + $0x14] sm:$0xf]
        %v719 = vld [vmem:[#allocation9 + $0x18] sm:$0xff]
        %v720 = vld [vmem:[#allocation9 + $0x20] sm:$0xf]
        %v721 = vld [vmem:[#allocation9 + $0x24] sm:$0xff]
        %v722 = vld [vmem:[#allocation9 + $0x2c] sm:$0xf]
        %v723 = vld [vmem:[#allocation9 + $0x30] sm:$0xff]
        %v724 = vld [vmem:[#allocation9 + $0x38] sm:$0xf]
        %v725 = vld [vmem:[#allocation9 + $0x3c] sm:$0xff]
        %v726 = vld [vmem:[#allocation9 + $0x44] sm:$0xf]
        %v727 = vld [vmem:[#allocation9 + $0x48] sm:$0xff]
        %v728 = vld [vmem:[#allocation9 + $0x50] sm:$0xf]
        %v729 = vld [vmem:[#allocation9 + $0x54] sm:$0xff]
        %v730 = vld [vmem:[#allocation9 + $0x5c] sm:$0xf]
        %v731 = vld [vmem:[#allocation9 + $0x60] sm:$0xff]
        %v732 = vld [vmem:[#allocation9 + $0x68] sm:$0xf]
        %v733 = vld [vmem:[#allocation9 + $0x6c] sm:$0xff]
        %v734 = vld [vmem:[#allocation9 + $0x74] sm:$0xf]
        %v735 = vld [vmem:[#allocation9 + $0x78] sm:$0xff]
        %v736 = vld [vmem:[#allocation9 + $0x80] sm:$0xf]
        %v737 = vld [vmem:[#allocation9 + $0x84] sm:$0xff]
        %v738 = vld [vmem:[#allocation9 + $0x8c] sm:$0xf]
        %v739 = vld [vmem:[#allocation9 + $0x90] sm:$0xff]
        %v740 = vld [vmem:[#allocation9 + $0x98] sm:$0xf]
        %v741 = vld [vmem:[#allocation9 + $0x9c] sm:$0xff]
        %v742 = vld [vmem:[#allocation9 + $0xa4] sm:$0xf]
        %v743 = vld [vmem:[#allocation9 + $0xa8] sm:$0xff]
        %v744 = vld [vmem:[#allocation9 + $0xb0] sm:$0xf]
        %v745 = vld [vmem:[#allocation9 + $0xb4] sm:$0xff]
        %v746 = vld [vmem:[#allocation9 + $0xbc] sm:$0xf]
        %v747 = vld [vmem:[%s6] sm:$0x7]
        %v749 = vlaneseq
        %v750 = vshrl.u32 %v749, 7
        %v751 = vsub.s32 0, %v750
        %v752 = vrot.slane %v747, %v751
        %v753 = vlaneseq
        %v754 = vshrl.u32 %v753, 7
        %v755 = vsub.s32 1, %v754
        %v756 = vrot.slane %v747, %v755
        %v757 = vlaneseq
        %v758 = vshrl.u32 %v757, 7
        %v759 = vsub.s32 2, %v758
        %v760 = vrot.slane %v747, %v759
        %v796 = vunpack.c.l.b16 %v715
        %v797 = vunpack.c.h.b16 %v715
        %v798 = vunpack.c.l.b16 %v716
        %v799 = vunpack.c.l.b16 %v717
        %v800 = vunpack.c.h.b16 %v717
        %v801 = vunpack.c.l.b16 %v718
        %v802 = vunpack.c.l.b16 %v719
        %v803 = vunpack.c.h.b16 %v719
        %v804 = vunpack.c.l.b16 %v720
        %v805 = vunpack.c.l.b16 %v721
        %v806 = vunpack.c.h.b16 %v721
        %v807 = vunpack.c.l.b16 %v722
        %v808 = vunpack.c.l.b16 %v723
        %v809 = vunpack.c.h.b16 %v723
        %v810 = vunpack.c.l.b16 %v724
        %v811 = vunpack.c.l.b16 %v725
        %v812 = vunpack.c.h.b16 %v725
        %v813 = vunpack.c.l.b16 %v726
        %v814 = vunpack.c.l.b16 %v727
        %v815 = vunpack.c.h.b16 %v727
        %v816 = vunpack.c.l.b16 %v728
        %v817 = vunpack.c.l.b16 %v729
        %v818 = vunpack.c.h.b16 %v729
        %v819 = vunpack.c.l.b16 %v730
        %v820 = vunpack.c.l.b16 %v731
        %v821 = vunpack.c.h.b16 %v731
        %v822 = vunpack.c.l.b16 %v732
        %v823 = vunpack.c.l.b16 %v733
        %v824 = vunpack.c.h.b16 %v733
        %v825 = vunpack.c.l.b16 %v734
        %v826 = vunpack.c.l.b16 %v735
        %v827 = vunpack.c.h.b16 %v735
        %v828 = vunpack.c.l.b16 %v736
        %v829 = vunpack.c.l.b16 %v737
        %v830 = vunpack.c.h.b16 %v737
        %v831 = vunpack.c.l.b16 %v738
        %v832 = vunpack.c.l.b16 %v739
        %v833 = vunpack.c.h.b16 %v739
        %v834 = vunpack.c.l.b16 %v740
        %v835 = vunpack.c.l.b16 %v741
        %v836 = vunpack.c.h.b16 %v741
        %v837 = vunpack.c.l.b16 %v742
        %v838 = vunpack.c.l.b16 %v743
        %v839 = vunpack.c.h.b16 %v743
        %v840 = vunpack.c.l.b16 %v744
        %v841 = vunpack.c.l.b16 %v745
        %v842 = vunpack.c.h.b16 %v745
        %v843 = vunpack.c.l.b16 %v746
        %v844 = vpack.c.b16 %v799, %v796
        %v845 = vpack.c.b16 %v800, %v797
        %v846 = vpack.c.b16 %v801, %v798
        %v847 = vpack.c.b16 %v805, %v802
        %v848 = vpack.c.b16 %v806, %v803
        %v849 = vpack.c.b16 %v807, %v804
        %v850 = vpack.c.b16 %v811, %v808
        %v851 = vpack.c.b16 %v812, %v809
        %v852 = vpack.c.b16 %v813, %v810
        %v853 = vpack.c.b16 %v817, %v814
        %v854 = vpack.c.b16 %v818, %v815
        %v855 = vpack.c.b16 %v819, %v816
        %v856 = vpack.c.b16 %v823, %v820
        %v857 = vpack.c.b16 %v824, %v821
        %v858 = vpack.c.b16 %v825, %v822
        %v859 = vpack.c.b16 %v829, %v826
        %v860 = vpack.c.b16 %v830, %v827
        %v861 = vpack.c.b16 %v831, %v828
        %v862 = vpack.c.b16 %v835, %v832
        %v863 = vpack.c.b16 %v836, %v833
        %v864 = vpack.c.b16 %v837, %v834
        %v865 = vpack.c.b16 %v841, %v838
        %v866 = vpack.c.b16 %v842, %v839
        %v867 = vpack.c.b16 %v843, %v840
        %892 = vmatprep.subr.bf16.mxu0 %v845
        %893 = vmatpush1.bf16.msra.mxu0 %v844
        %894 = vmatprep.subr.bf16.mxu0 %v848
        %895 = vmatpush1.bf16.msra.mxu0 %v847
        %896 = vmatprep.subr.bf16.mxu0 %v851
        %897 = vmatpush1.bf16.msra.mxu0 %v850
        %898 = vmatprep.subr.bf16.mxu0 %v854
        %899 = vmatpush1.bf16.msra.mxu0 %v853
        %900 = vmatprep.subr.bf16.mxu0 %v857
        %901 = vmatpush1.bf16.msra.mxu0 %v856
        %902 = vmatprep.subr.bf16.mxu0 %v860
        %903 = vmatpush1.bf16.msra.mxu0 %v859
        %904 = vmatprep.subr.bf16.mxu0 %v863
        %905 = vmatpush1.bf16.msra.mxu0 %v862
        %906 = vmatprep.subr.bf16.mxu0 %v866
        %907 = vmatpush1.bf16.msra.mxu0 %v865
        %908 = vmatprep.subr.bf16.mxu0 0
        %909 = vmatpush1.bf16.msra.mxu0 0
        %910 = vmatprep.subr.bf16.mxu0 0
        %911 = vmatpush1.bf16.msra.mxu0 0
        %912 = vmatprep.subr.bf16.mxu0 0
        %913 = vmatpush1.bf16.msra.mxu0 0
        %914 = vmatprep.subr.bf16.mxu0 0
        %915 = vmatpush1.bf16.msra.mxu0 0
        %916 = vmatprep.subr.bf16.mxu0 0
        %917 = vmatpush1.bf16.msra.mxu0 0
        %918 = vmatprep.subr.bf16.mxu0 0
        %919 = vmatpush1.bf16.msra.mxu0 0
        %920 = vmatprep.subr.bf16.mxu0 0
        %921 = vmatpush1.bf16.msra.mxu0 0
        %922 = vmatprep.subr.bf16.mxu0 0
        %923 = vmatpush1.bf16.msra.mxu0 0
        %924 = vmatprep.mubr.bf16.mxu0 0
        %925 = vmatmul.mubr.bf16.gmra.mrb[0].mxu0 %v711
        %v926 = vpop.f32.mrb[0].mxu0
        %v927 = vadd.f32 %v752, %v926
        %v928 = vpop.f32.mrb[0].mxu0
        %v929 = vadd.f32 %v756, %v928
        %v930 = vpop.f32.mrb[0].mxu0
        %v931 = vadd.f32 %v752, %v930
        %v932 = vpop.f32.mrb[0].mxu0
        %v933 = vadd.f32 %v756, %v932
        %934 = vmatprep.mubr.bf16.mxu0 0
        %935 = vmatmul.mubr.bf16.gmra.mrb[0].mxu0 %v712
        %v936 = vpop.f32.mrb[0].mxu0
        %v937 = vadd.f32 %v752, %v936
        %v938 = vpop.f32.mrb[0].mxu0
        %v939 = vadd.f32 %v756, %v938
        %v940 = vpop.f32.mrb[0].mxu0
        %v941 = vadd.f32 %v752, %v940
        %v942 = vpop.f32.mrb[0].mxu0
        %v943 = vadd.f32 %v756, %v942
        %944 = vmatprep.mubr.bf16.mxu0 0
        %945 = vmatmul.mubr.bf16.gmra.mrb[0].mxu0 %v713
        %v946 = vpop.f32.mrb[0].mxu0
        %v947 = vadd.f32 %v752, %v946
        %v948 = vpop.f32.mrb[0].mxu0
        %v949 = vadd.f32 %v756, %v948
        %v950 = vpop.f32.mrb[0].mxu0
        %v951 = vadd.f32 %v752, %v950
        %v952 = vpop.f32.mrb[0].mxu0
        %v953 = vadd.f32 %v756, %v952
        %954 = vmatprep.mubr.bf16.mxu0 0
        %955 = vmatmul.mubr.bf16.gmra.mrb[0].mxu0 %v714
        %v956 = vpop.f32.mrb[0].mxu0
        %v957 = vadd.f32 %v752, %v956
        %v958 = vpop.f32.mrb[0].mxu0
        %v959 = vadd.f32 %v756, %v958
        %v960 = vpop.f32.mrb[0].mxu0
        %v961 = vadd.f32 %v752, %v960
        %v962 = vpop.f32.mrb[0].mxu0
        %v963 = vadd.f32 %v756, %v962
        %964 = vdwg.mxu0
        %965 = vmatprep.subr.bf16.mxu0 0
        %966 = vmatpush1.bf16.msra.mxu0 %v846
        %967 = vmatprep.subr.bf16.mxu0 0
        %968 = vmatpush1.bf16.msra.mxu0 %v849
        %969 = vmatprep.subr.bf16.mxu0 0
        %970 = vmatpush1.bf16.msra.mxu0 %v852
        %971 = vmatprep.subr.bf16.mxu0 0
        %972 = vmatpush1.bf16.msra.mxu0 %v855
        %973 = vmatprep.subr.bf16.mxu0 0
        %974 = vmatpush1.bf16.msra.mxu0 %v858
        %975 = vmatprep.subr.bf16.mxu0 0
        %976 = vmatpush1.bf16.msra.mxu0 %v861
        %977 = vmatprep.subr.bf16.mxu0 0
        %978 = vmatpush1.bf16.msra.mxu0 %v864
        %979 = vmatprep.subr.bf16.mxu0 0
        %980 = vmatpush1.bf16.msra.mxu0 %v867
        %981 = vmatprep.subr.bf16.mxu0 0
        %982 = vmatpush1.bf16.msra.mxu0 0
        %983 = vmatprep.subr.bf16.mxu0 0
        %984 = vmatpush1.bf16.msra.mxu0 0
        %985 = vmatprep.subr.bf16.mxu0 0
        %986 = vmatpush1.bf16.msra.mxu0 0
        %987 = vmatprep.subr.bf16.mxu0 0
        %988 = vmatpush1.bf16.msra.mxu0 0
        %989 = vmatprep.subr.bf16.mxu0 0
        %990 = vmatpush1.bf16.msra.mxu0 0
        %991 = vmatprep.subr.bf16.mxu0 0
        %992 = vmatpush1.bf16.msra.mxu0 0
        %993 = vmatprep.subr.bf16.mxu0 0
        %994 = vmatpush1.bf16.msra.mxu0 0
        %995 = vmatprep.subr.bf16.mxu0 0
        %996 = vmatpush1.bf16.msra.mxu0 0
        %997 = vmatprep.mubr.bf16.mxu0 0
        %998 = vmatmul.mubr.bf16.gmra.mrb[0].mxu0 %v711
        %v999 = vpop.f32.mrb[0].mxu0
        %v1000 = vadd.f32 %v760, %v999
        %v1001 = vpop.f32.mrb[0].mxu0
        %v1002 = vpop.f32.mrb[0].mxu0
        %v1003 = vadd.f32 %v760, %v1002
        %v1004 = vpop.f32.mrb[0].mxu0
        %1005 = vmatprep.mubr.bf16.mxu0 0
        %1006 = vmatmul.mubr.bf16.gmra.mrb[0].mxu0 %v712
        %v1007 = vpop.f32.mrb[0].mxu0
        %v1008 = vadd.f32 %v760, %v1007
        %v1009 = vpop.f32.mrb[0].mxu0
        %v1010 = vpop.f32.mrb[0].mxu0
        %v1011 = vadd.f32 %v760, %v1010
        %v1012 = vpop.f32.mrb[0].mxu0
        %1013 = vmatprep.mubr.bf16.mxu0 0
        %1014 = vmatmul.mubr.bf16.gmra.mrb[0].mxu0 %v713
        %v1015 = vpop.f32.mrb[0].mxu0
        %v1016 = vadd.f32 %v760, %v1015
        %v1017 = vpop.f32.mrb[0].mxu0
        %v1018 = vpop.f32.mrb[0].mxu0
        %v1019 = vadd.f32 %v760, %v1018
        %v1020 = vpop.f32.mrb[0].mxu0
        %1021 = vmatprep.mubr.bf16.mxu0 0
        %1022 = vmatmul.mubr.bf16.gmra.mrb[0].mxu0 %v714
        %v1023 = vpop.f32.mrb[0].mxu0
        %v1024 = vadd.f32 %v760, %v1023
        %v1025 = vpop.f32.mrb[0].mxu0
        %v1026 = vpop.f32.mrb[0].mxu0
        %v1027 = vadd.f32 %v760, %v1026
        %v1028 = vpop.f32.mrb[0].mxu0
        %1029 = vdwg.mxu0
        %1030 = vadd.xlane.f32.xlu0 %v538
        %v1031 = vpop.xlane.xlu0 %1030
        %v1032 = vmul.f32 %v1031, 0.03125
        %v1033 = vmul.f32 %v538, %v538
        %1034 = vadd.xlane.f32.xlu0 %v1033
        %v1035 = vpop.xlane.xlu0 %1034
        %v1036 = vmul.f32 %v1035, 0.03125
        %v1037 = vmul.f32 %v1032, %v1032
        %v1038 = vsub.f32 %v1036, %v1037
        %v1039 = vsub.f32 %v538, %v1032
        %v1040 = vadd.f32 %v1038, 1e-05
        %v1041 = vrsqrt.pop %v1040
        %v1042 = vmul.f32 %v1039, %v1041
        %v1043 = vlaneseq
        %v1044 = vshrl.u32 %v1043, 7
        %v1045 = vsub.s32 0, %v1044
        %v1046 = vrot.slane %v541, %v1045
        %v1047 = vmul.f32 %v1042, %v1046
        %v1048 = vlaneseq
        %v1049 = vshrl.u32 %v1048, 7
        %v1050 = vsub.s32 0, %v1049
        %v1051 = vrot.slane %v542, %v1050
        %v1052 = vadd.f32 %v1047, %v1051
        %v1053 = vpack.c.bf16 %v1052, %v1052
        %v1070 = vunpack.c.l.b16 %v543
        %v1071 = vunpack.c.h.b16 %v543
        %v1072 = vunpack.c.l.b16 %v544
        %v1073 = vunpack.c.h.b16 %v544
        %v1074 = vunpack.c.l.b16 %v545
        %v1075 = vunpack.c.h.b16 %v545
        %v1076 = vunpack.c.l.b16 %v546
        %v1077 = vunpack.c.h.b16 %v546
        %v1078 = vunpack.c.l.b16 %v547
        %v1079 = vunpack.c.h.b16 %v547
        %v1080 = vunpack.c.l.b16 %v548
        %v1081 = vunpack.c.h.b16 %v548
        %v1082 = vunpack.c.l.b16 %v549
        %v1083 = vunpack.c.h.b16 %v549
        %v1084 = vunpack.c.l.b16 %v550
        %v1085 = vunpack.c.h.b16 %v550
        %v1086 = vunpack.c.l.b16 %v551
        %v1087 = vunpack.c.h.b16 %v551
        %v1088 = vunpack.c.l.b16 %v552
        %v1089 = vunpack.c.h.b16 %v552
        %v1090 = vunpack.c.l.b16 %v553
        %v1091 = vunpack.c.h.b16 %v553
        %v1092 = vunpack.c.l.b16 %v554
        %v1093 = vunpack.c.h.b16 %v554
        %v1094 = vunpack.c.l.b16 %v555
        %v1095 = vunpack.c.h.b16 %v555
        %v1096 = vunpack.c.l.b16 %v556
        %v1097 = vunpack.c.h.b16 %v556
        %v1098 = vunpack.c.l.b16 %v557
        %v1099 = vunpack.c.h.b16 %v557
        %v1100 = vunpack.c.l.b16 %v558
        %v1101 = vunpack.c.h.b16 %v558
        %v1102 = vpack.c.b16 %v1072, %v1070
        %v1103 = vpack.c.b16 %v1073, %v1071
        %v1104 = vpack.c.b16 %v1076, %v1074
        %v1105 = vpack.c.b16 %v1077, %v1075
        %v1106 = vpack.c.b16 %v1080, %v1078
        %v1107 = vpack.c.b16 %v1081, %v1079
        %v1108 = vpack.c.b16 %v1084, %v1082
        %v1109 = vpack.c.b16 %v1085, %v1083
        %v1110 = vpack.c.b16 %v1088, %v1086
        %v1111 = vpack.c.b16 %v1089, %v1087
        %v1112 = vpack.c.b16 %v1092, %v1090
        %v1113 = vpack.c.b16 %v1093, %v1091
        %v1114 = vpack.c.b16 %v1096, %v1094
        %v1115 = vpack.c.b16 %v1097, %v1095
        %v1116 = vpack.c.b16 %v1100, %v1098
        %v1117 = vpack.c.b16 %v1101, %v1099
        %1134 = vmatprep.subr.bf16.mxu0 %v1103
        %1135 = vmatpush1.bf16.msra.mxu0 %v1102
        %1136 = vmatprep.subr.bf16.mxu0 %v1105
        %1137 = vmatpush1.bf16.msra.mxu0 %v1104
        %1138 = vmatprep.subr.bf16.mxu0 %v1107
        %1139 = vmatpush1.bf16.msra.mxu0 %v1106
        %1140 = vmatprep.subr.bf16.mxu0 %v1109
        %1141 = vmatpush1.bf16.msra.mxu0 %v1108
        %1142 = vmatprep.subr.bf16.mxu0 %v1111
        %1143 = vmatpush1.bf16.msra.mxu0 %v1110
        %1144 = vmatprep.subr.bf16.mxu0 %v1113
        %1145 = vmatpush1.bf16.msra.mxu0 %v1112
        %1146 = vmatprep.subr.bf16.mxu0 %v1115
        %1147 = vmatpush1.bf16.msra.mxu0 %v1114
        %1148 = vmatprep.subr.bf16.mxu0 %v1117
        %1149 = vmatpush1.bf16.msra.mxu0 %v1116
        %1150 = vmatprep.subr.bf16.mxu0 0
        %1151 = vmatpush1.bf16.msra.mxu0 0
        %1152 = vmatprep.subr.bf16.mxu0 0
        %1153 = vmatpush1.bf16.msra.mxu0 0
        %1154 = vmatprep.subr.bf16.mxu0 0
        %1155 = vmatpush1.bf16.msra.mxu0 0
        %1156 = vmatprep.subr.bf16.mxu0 0
        %1157 = vmatpush1.bf16.msra.mxu0 0
        %1158 = vmatprep.subr.bf16.mxu0 0
        %1159 = vmatpush1.bf16.msra.mxu0 0
        %1160 = vmatprep.subr.bf16.mxu0 0
        %1161 = vmatpush1.bf16.msra.mxu0 0
        %1162 = vmatprep.subr.bf16.mxu0 0
        %1163 = vmatpush1.bf16.msra.mxu0 0
        %1164 = vmatprep.subr.bf16.mxu0 0
        %1165 = vmatpush1.bf16.msra.mxu0 0
        %1166 = vmatprep.mubr.bf16.mxu0 0
        %1167 = vmatmul.mubr.bf16.gmra.mrb[0].mxu0 %v1053
        %v1168 = vpop.f32.mrb[0].mxu0
        %v1169 = vadd.f32 0.0, %v1168
        %v1170 = vpop.f32.mrb[0].mxu0
        %v1171 = vadd.f32 0.0, %v1170
        %v1172 = vpop.f32.mrb[0].mxu0
        %v1173 = vpop.f32.mrb[0].mxu0
        %1174 = vdwg.mxu0
        %v1175 = vadd.f32 %v927, %v1169
        %v1176 = vxor.u32 %v1175, 2147483648
        %v1177 = vmul.f32 %v1176, 1.442695
        %v1178 = vpow.pop %v1177
        %v1179 = vadd.f32 %v1178, 1.0
        %v1180 = vrcp.pop %v1179
        %v1181 = vmul.f32 1.0, %v1180
        %v1182 = vadd.f32 %v929, %v1171
        %v1183 = vxor.u32 %v1182, 2147483648
        %v1184 = vmul.f32 %v1183, 1.442695
        %v1185 = vpow.pop %v1184
        %v1186 = vadd.f32 %v1185, 1.0
        %v1187 = vrcp.pop %v1186
        %v1188 = vmul.f32 1.0, %v1187
        %v1189 = vmul.f32 %v1188, %v1052
        %v1190 = vpack.c.bf16 %v1189, %v1189
        %v1207 = vunpack.c.l.b16 %v559
        %v1208 = vunpack.c.l.b16 %v560
        %v1209 = vunpack.c.l.b16 %v561
        %v1210 = vunpack.c.l.b16 %v562
        %v1211 = vunpack.c.l.b16 %v563
        %v1212 = vunpack.c.l.b16 %v564
        %v1213 = vunpack.c.l.b16 %v565
        %v1214 = vunpack.c.l.b16 %v566
        %v1215 = vunpack.c.l.b16 %v567
        %v1216 = vunpack.c.l.b16 %v568
        %v1217 = vunpack.c.l.b16 %v569
        %v1218 = vunpack.c.l.b16 %v570
        %v1219 = vunpack.c.l.b16 %v571
        %v1220 = vunpack.c.l.b16 %v572
        %v1221 = vunpack.c.l.b16 %v573
        %v1222 = vunpack.c.l.b16 %v574
        %v1223 = vpack.c.b16 %v1208, %v1207
        %v1224 = vpack.c.b16 %v1210, %v1209
        %v1225 = vpack.c.b16 %v1212, %v1211
        %v1226 = vpack.c.b16 %v1214, %v1213
        %v1227 = vpack.c.b16 %v1216, %v1215
        %v1228 = vpack.c.b16 %v1218, %v1217
        %v1229 = vpack.c.b16 %v1220, %v1219
        %v1230 = vpack.c.b16 %v1222, %v1221
        %1239 = vmatprep.subr.bf16.mxu0 0
        %1240 = vmatpush1.bf16.msra.mxu0 %v1223
        %1241 = vmatprep.subr.bf16.mxu0 0
        %1242 = vmatpush1.bf16.msra.mxu0 %v1224
        %1243 = vmatprep.subr.bf16.mxu0 0
        %1244 = vmatpush1.bf16.msra.mxu0 %v1225
        %1245 = vmatprep.subr.bf16.mxu0 0
        %1246 = vmatpush1.bf16.msra.mxu0 %v1226
        %1247 = vmatprep.subr.bf16.mxu0 0
        %1248 = vmatpush1.bf16.msra.mxu0 %v1227
        %1249 = vmatprep.subr.bf16.mxu0 0
        %1250 = vmatpush1.bf16.msra.mxu0 %v1228
        %1251 = vmatprep.subr.bf16.mxu0 0
        %1252 = vmatpush1.bf16.msra.mxu0 %v1229
        %1253 = vmatprep.subr.bf16.mxu0 0
        %1254 = vmatpush1.bf16.msra.mxu0 %v1230
        %1255 = vmatprep.subr.bf16.mxu0 0
        %1256 = vmatpush1.bf16.msra.mxu0 0
        %1257 = vmatprep.subr.bf16.mxu0 0
        %1258 = vmatpush1.bf16.msra.mxu0 0
        %1259 = vmatprep.subr.bf16.mxu0 0
        %1260 = vmatpush1.bf16.msra.mxu0 0
        %1261 = vmatprep.subr.bf16.mxu0 0
        %1262 = vmatpush1.bf16.msra.mxu0 0
        %1263 = vmatprep.subr.bf16.mxu0 0
        %1264 = vmatpush1.bf16.msra.mxu0 0
        %1265 = vmatprep.subr.bf16.mxu0 0
        %1266 = vmatpush1.bf16.msra.mxu0 0
        %1267 = vmatprep.subr.bf16.mxu0 0
        %1268 = vmatpush1.bf16.msra.mxu0 0
        %1269 = vmatprep.subr.bf16.mxu0 0
        %1270 = vmatpush1.bf16.msra.mxu0 0
        %1271 = vmatprep.mubr.bf16.mxu0 0
        %1272 = vmatmul.mubr.bf16.gmra.mrb[0].mxu0 %v1190
        %v1273 = vpop.f32.mrb[0].mxu0
        %v1274 = vadd.f32 %v1000, %v1273
        %v1275 = vpop.f32.mrb[0].mxu0
        %v1276 = vpop.f32.mrb[0].mxu0
        %v1277 = vpop.f32.mrb[0].mxu0
        %1278 = vdwg.mxu0
        %v1279 = vtanh.pop %v1274
        %v1280 = vsub.f32 %v1279, %v1052
        %v1281 = vmul.f32 %v1181, %v1280
        %v1282 = vadd.f32 %v1052, %v1281
        %s1283 = smul.u32 %s42, 8
        %p1284 = scmp.lt.s32.totalorder %s1283, 10
        %s1285 = scalar_select %p1284, 1, 0
        %v1286 = vstv %s1285
        %vm1287 = vcmp.eq.s32.totalorder %v1286, 1
        %v1288 = vsel %vm1287, %v1282, %v538
        %1289 = vst [vmem:[#allocation2] sm:$0xff] %v1288
        %1290 = vadd.xlane.f32.xlu0 %v1288
        %v1291 = vpop.xlane.xlu0 %1290
        %v1292 = vmul.f32 %v1291, 0.03125
        %v1293 = vmul.f32 %v1288, %v1288
        %1294 = vadd.xlane.f32.xlu0 %v1293
        %v1295 = vpop.xlane.xlu0 %1294
        %v1296 = vmul.f32 %v1295, 0.03125
        %v1297 = vmul.f32 %v1292, %v1292
        %v1298 = vsub.f32 %v1296, %v1297
        %v1299 = vsub.f32 %v1288, %v1292
        %v1300 = vadd.f32 %v1298, 1e-05
        %v1301 = vrsqrt.pop %v1300
        %v1302 = vmul.f32 %v1299, %v1301
        %v1303 = vmul.f32 %v1302, %v1046
        %v1304 = vadd.f32 %v1303, %v1051
        %v1305 = vpack.c.bf16 %v1304, %v1304
        %1306 = vmatprep.subr.bf16.mxu0 %v1103
        %1307 = vmatpush1.bf16.msra.mxu0 %v1102
        %1308 = vmatprep.subr.bf16.mxu0 %v1105
        %1309 = vmatpush1.bf16.msra.mxu0 %v1104
        %1310 = vmatprep.subr.bf16.mxu0 %v1107
        %1311 = vmatpush1.bf16.msra.mxu0 %v1106
        %1312 = vmatprep.subr.bf16.mxu0 %v1109
        %1313 = vmatpush1.bf16.msra.mxu0 %v1108
        %1314 = vmatprep.subr.bf16.mxu0 %v1111
        %1315 = vmatpush1.bf16.msra.mxu0 %v1110
        %1316 = vmatprep.subr.bf16.mxu0 %v1113
        %1317 = vmatpush1.bf16.msra.mxu0 %v1112
        %1318 = vmatprep.subr.bf16.mxu0 %v1115
        %1319 = vmatpush1.bf16.msra.mxu0 %v1114
        %1320 = vmatprep.subr.bf16.mxu0 %v1117
        %1321 = vmatpush1.bf16.msra.mxu0 %v1116
        %1322 = vmatprep.subr.bf16.mxu0 0
        %1323 = vmatpush1.bf16.msra.mxu0 0
        %1324 = vmatprep.subr.bf16.mxu0 0
        %1325 = vmatpush1.bf16.msra.mxu0 0
        %1326 = vmatprep.subr.bf16.mxu0 0
        %1327 = vmatpush1.bf16.msra.mxu0 0
        %1328 = vmatprep.subr.bf16.mxu0 0
        %1329 = vmatpush1.bf16.msra.mxu0 0
        %1330 = vmatprep.subr.bf16.mxu0 0
        %1331 = vmatpush1.bf16.msra.mxu0 0
        %1332 = vmatprep.subr.bf16.mxu0 0
        %1333 = vmatpush1.bf16.msra.mxu0 0
        %1334 = vmatprep.subr.bf16.mxu0 0
        %1335 = vmatpush1.bf16.msra.mxu0 0
        %1336 = vmatprep.subr.bf16.mxu0 0
        %1337 = vmatpush1.bf16.msra.mxu0 0
        %1338 = vmatprep.mubr.bf16.mxu0 0
        %1339 = vmatmul.mubr.bf16.gmra.mrb[0].mxu0 %v1305
        %v1340 = vpop.f32.mrb[0].mxu0
        %v1341 = vadd.f32 0.0, %v1340
        %v1342 = vpop.f32.mrb[0].mxu0
        %v1343 = vadd.f32 0.0, %v1342
        %v1344 = vpop.f32.mrb[0].mxu0
        %v1345 = vpop.f32.mrb[0].mxu0
        %1346 = vdwg.mxu0
        %v1347 = vadd.f32 %v931, %v1341
        %v1348 = vxor.u32 %v1347, 2147483648
        %v1349 = vmul.f32 %v1348, 1.442695
        %v1350 = vpow.pop %v1349
        %v1351 = vadd.f32 %v1350, 1.0
        %v1352 = vrcp.pop %v1351
        %v1353 = vmul.f32 1.0, %v1352
        %v1354 = vadd.f32 %v933, %v1343
        %v1355 = vxor.u32 %v1354, 2147483648
        %v1356 = vmul.f32 %v1355, 1.442695
        %v1357 = vpow.pop %v1356
        %v1358 = vadd.f32 %v1357, 1.0
        %v1359 = vrcp.pop %v1358
        %v1360 = vmul.f32 1.0, %v1359
        %v1361 = vmul.f32 %v1360, %v1304
        %v1362 = vpack.c.bf16 %v1361, %v1361
        %1363 = vmatprep.subr.bf16.mxu0 0
        %1364 = vmatpush1.bf16.msra.mxu0 %v1223
        %1365 = vmatprep.subr.bf16.mxu0 0
        %1366 = vmatpush1.bf16.msra.mxu0 %v1224
        %1367 = vmatprep.subr.bf16.mxu0 0
        %1368 = vmatpush1.bf16.msra.mxu0 %v1225
        %1369 = vmatprep.subr.bf16.mxu0 0
        %1370 = vmatpush1.bf16.msra.mxu0 %v1226
        %1371 = vmatprep.subr.bf16.mxu0 0
        %1372 = vmatpush1.bf16.msra.mxu0 %v1227
        %1373 = vmatprep.subr.bf16.mxu0 0
        %1374 = vmatpush1.bf16.msra.mxu0 %v1228
        %1375 = vmatprep.subr.bf16.mxu0 0
        %1376 = vmatpush1.bf16.msra.mxu0 %v1229
        %1377 = vmatprep.subr.bf16.mxu0 0
        %1378 = vmatpush1.bf16.msra.mxu0 %v1230
        %1379 = vmatprep.subr.bf16.mxu0 0
        %1380 = vmatpush1.bf16.msra.mxu0 0
        %1381 = vmatprep.subr.bf16.mxu0 0
        %1382 = vmatpush1.bf16.msra.mxu0 0
        %1383 = vmatprep.subr.bf16.mxu0 0
        %1384 = vmatpush1.bf16.msra.mxu0 0
        %1385 = vmatprep.subr.bf16.mxu0 0
        %1386 = vmatpush1.bf16.msra.mxu0 0
        %1387 = vmatprep.subr.bf16.mxu0 0
        %1388 = vmatpush1.bf16.msra.mxu0 0
        %1389 = vmatprep.subr.bf16.mxu0 0
        %1390 = vmatpush1.bf16.msra.mxu0 0
        %1391 = vmatprep.subr.bf16.mxu0 0
        %1392 = vmatpush1.bf16.msra.mxu0 0
        %1393 = vmatprep.subr.bf16.mxu0 0
        %1394 = vmatpush1.bf16.msra.mxu0 0
        %1395 = vmatprep.mubr.bf16.mxu0 0
        %1396 = vmatmul.mubr.bf16.gmra.mrb[0].mxu0 %v1362
        %v1397 = vpop.f32.mrb[0].mxu0
        %v1398 = vadd.f32 %v1003, %v1397
        %v1399 = vpop.f32.mrb[0].mxu0
        %v1400 = vpop.f32.mrb[0].mxu0
        %v1401 = vpop.f32.mrb[0].mxu0
        %1402 = vdwg.mxu0
        %v1403 = vtanh.pop %v1398
        %v1404 = vsub.f32 %v1403, %v1304
        %v1405 = vmul.f32 %v1353, %v1404
        %v1406 = vadd.f32 %v1304, %v1405
        %s1407 = sadd.s32 %s1283, 1
        %p1408 = scmp.lt.s32.totalorder %s1407, 10
        %s1409 = scalar_select %p1408, 1, 0
        %v1410 = vstv %s1409
        %vm1411 = vcmp.eq.s32.totalorder %v1410, 1
        %v1412 = vsel %vm1411, %v1406, %v1288
        %1413 = vst [vmem:[#allocation2 + $0x8] sm:$0xff] %v1412
        %1414 = vadd.xlane.f32.xlu0 %v1412
        %v1415 = vpop.xlane.xlu0 %1414
        %v1416 = vmul.f32 %v1415, 0.03125
        %v1417 = vmul.f32 %v1412, %v1412
        %1418 = vadd.xlane.f32.xlu0 %v1417
        %v1419 = vpop.xlane.xlu0 %1418
        %v1420 = vmul.f32 %v1419, 0.03125
        %v1421 = vmul.f32 %v1416, %v1416
        %v1422 = vsub.f32 %v1420, %v1421
        %v1423 = vsub.f32 %v1412, %v1416
        %v1424 = vadd.f32 %v1422, 1e-05
        %v1425 = vrsqrt.pop %v1424
        %v1426 = vmul.f32 %v1423, %v1425
        %v1427 = vmul.f32 %v1426, %v1046
        %v1428 = vadd.f32 %v1427, %v1051
        %v1429 = vpack.c.bf16 %v1428, %v1428
        %1430 = vmatprep.subr.bf16.mxu0 %v1103
        %1431 = vmatpush1.bf16.msra.mxu0 %v1102
        %1432 = vmatprep.subr.bf16.mxu0 %v1105
        %1433 = vmatpush1.bf16.msra.mxu0 %v1104
        %1434 = vmatprep.subr.bf16.mxu0 %v1107
        %1435 = vmatpush1.bf16.msra.mxu0 %v1106
        %1436 = vmatprep.subr.bf16.mxu0 %v1109
        %1437 = vmatpush1.bf16.msra.mxu0 %v1108
        %1438 = vmatprep.subr.bf16.mxu0 %v1111
        %1439 = vmatpush1.bf16.msra.mxu0 %v1110
        %1440 = vmatprep.subr.bf16.mxu0 %v1113
        %1441 = vmatpush1.bf16.msra.mxu0 %v1112
        %1442 = vmatprep.subr.bf16.mxu0 %v1115
        %1443 = vmatpush1.bf16.msra.mxu0 %v1114
        %1444 = vmatprep.subr.bf16.mxu0 %v1117
        %1445 = vmatpush1.bf16.msra.mxu0 %v1116
        %1446 = vmatprep.subr.bf16.mxu0 0
        %1447 = vmatpush1.bf16.msra.mxu0 0
        %1448 = vmatprep.subr.bf16.mxu0 0
        %1449 = vmatpush1.bf16.msra.mxu0 0
        %1450 = vmatprep.subr.bf16.mxu0 0
        %1451 = vmatpush1.bf16.msra.mxu0 0
        %1452 = vmatprep.subr.bf16.mxu0 0
        %1453 = vmatpush1.bf16.msra.mxu0 0
        %1454 = vmatprep.subr.bf16.mxu0 0
        %1455 = vmatpush1.bf16.msra.mxu0 0
        %1456 = vmatprep.subr.bf16.mxu0 0
        %1457 = vmatpush1.bf16.msra.mxu0 0
        %1458 = vmatprep.subr.bf16.mxu0 0
        %1459 = vmatpush1.bf16.msra.mxu0 0
        %1460 = vmatprep.subr.bf16.mxu0 0
        %1461 = vmatpush1.bf16.msra.mxu0 0
        %1462 = vmatprep.mubr.bf16.mxu0 0
        %1463 = vmatmul.mubr.bf16.gmra.mrb[0].mxu0 %v1429
        %v1464 = vpop.f32.mrb[0].mxu0
        %v1465 = vadd.f32 0.0, %v1464
        %v1466 = vpop.f32.mrb[0].mxu0
        %v1467 = vadd.f32 0.0, %v1466
        %v1468 = vpop.f32.mrb[0].mxu0
        %v1469 = vpop.f32.mrb[0].mxu0
        %1470 = vdwg.mxu0
        %v1471 = vadd.f32 %v937, %v1465
        %v1472 = vxor.u32 %v1471, 2147483648
        %v1473 = vmul.f32 %v1472, 1.442695
        %v1474 = vpow.pop %v1473
        %v1475 = vadd.f32 %v1474, 1.0
        %v1476 = vrcp.pop %v1475
        %v1477 = vmul.f32 1.0, %v1476
        %v1478 = vadd.f32 %v939, %v1467
        %v1479 = vxor.u32 %v1478, 2147483648
        %v1480 = vmul.f32 %v1479, 1.442695
        %v1481 = vpow.pop %v1480
        %v1482 = vadd.f32 %v1481, 1.0
        %v1483 = vrcp.pop %v1482
        %v1484 = vmul.f32 1.0, %v1483
        %v1485 = vmul.f32 %v1484, %v1428
        %v1486 = vpack.c.bf16 %v1485, %v1485
        %1487 = vmatprep.subr.bf16.mxu0 0
        %1488 = vmatpush1.bf16.msra.mxu0 %v1223
        %1489 = vmatprep.subr.bf16.mxu0 0
        %1490 = vmatpush1.bf16.msra.mxu0 %v1224
        %1491 = vmatprep.subr.bf16.mxu0 0
        %1492 = vmatpush1.bf16.msra.mxu0 %v1225
        %1493 = vmatprep.subr.bf16.mxu0 0
        %1494 = vmatpush1.bf16.msra.mxu0 %v1226
        %1495 = vmatprep.subr.bf16.mxu0 0
        %1496 = vmatpush1.bf16.msra.mxu0 %v1227
        %1497 = vmatprep.subr.bf16.mxu0 0
        %1498 = vmatpush1.bf16.msra.mxu0 %v1228
        %1499 = vmatprep.subr.bf16.mxu0 0
        %1500 = vmatpush1.bf16.msra.mxu0 %v1229
        %1501 = vmatprep.subr.bf16.mxu0 0
        %1502 = vmatpush1.bf16.msra.mxu0 %v1230
        %1503 = vmatprep.subr.bf16.mxu0 0
        %1504 = vmatpush1.bf16.msra.mxu0 0
        %1505 = vmatprep.subr.bf16.mxu0 0
        %1506 = vmatpush1.bf16.msra.mxu0 0
        %1507 = vmatprep.subr.bf16.mxu0 0
        %1508 = vmatpush1.bf16.msra.mxu0 0
        %1509 = vmatprep.subr.bf16.mxu0 0
        %1510 = vmatpush1.bf16.msra.mxu0 0
        %1511 = vmatprep.subr.bf16.mxu0 0
        %1512 = vmatpush1.bf16.msra.mxu0 0
        %1513 = vmatprep.subr.bf16.mxu0 0
        %1514 = vmatpush1.bf16.msra.mxu0 0
        %1515 = vmatprep.subr.bf16.mxu0 0
        %1516 = vmatpush1.bf16.msra.mxu0 0
        %1517 = vmatprep.subr.bf16.mxu0 0
        %1518 = vmatpush1.bf16.msra.mxu0 0
        %1519 = vmatprep.mubr.bf16.mxu0 0
        %1520 = vmatmul.mubr.bf16.gmra.mrb[0].mxu0 %v1486
        %v1521 = vpop.f32.mrb[0].mxu0
        %v1522 = vadd.f32 %v1008, %v1521
        %v1523 = vpop.f32.mrb[0].mxu0
        %v1524 = vpop.f32.mrb[0].mxu0
        %v1525 = vpop.f32.mrb[0].mxu0
        %1526 = vdwg.mxu0
        %v1527 = vtanh.pop %v1522
        %v1528 = vsub.f32 %v1527, %v1428
        %v1529 = vmul.f32 %v1477, %v1528
        %v1530 = vadd.f32 %v1428, %v1529
        %s1531 = sadd.s32 %s1283, 2
        %p1532 = scmp.lt.s32.totalorder %s1531, 10
        %s1533 = scalar_select %p1532, 1, 0
        %v1534 = vstv %s1533
        %vm1535 = vcmp.eq.s32.totalorder %v1534, 1
        %v1536 = vsel %vm1535, %v1530, %v1412
        %1537 = vst [vmem:[#allocation2 + $0x10] sm:$0xff] %v1536
        %1538 = vadd.xlane.f32.xlu0 %v1536
        %v1539 = vpop.xlane.xlu0 %1538
        %v1540 = vmul.f32 %v1539, 0.03125
        %v1541 = vmul.f32 %v1536, %v1536
        %1542 = vadd.xlane.f32.xlu0 %v1541
        %v1543 = vpop.xlane.xlu0 %1542
        %v1544 = vmul.f32 %v1543, 0.03125
        %v1545 = vmul.f32 %v1540, %v1540
        %v1546 = vsub.f32 %v1544, %v1545
        %v1547 = vsub.f32 %v1536, %v1540
        %v1548 = vadd.f32 %v1546, 1e-05
        %v1549 = vrsqrt.pop %v1548
        %v1550 = vmul.f32 %v1547, %v1549
        %v1551 = vmul.f32 %v1550, %v1046
        %v1552 = vadd.f32 %v1551, %v1051
        %v1553 = vpack.c.bf16 %v1552, %v1552
        %1554 = vmatprep.subr.bf16.mxu0 %v1103
        %1555 = vmatpush1.bf16.msra.mxu0 %v1102
        %1556 = vmatprep.subr.bf16.mxu0 %v1105
        %1557 = vmatpush1.bf16.msra.mxu0 %v1104
        %1558 = vmatprep.subr.bf16.mxu0 %v1107
        %1559 = vmatpush1.bf16.msra.mxu0 %v1106
        %1560 = vmatprep.subr.bf16.mxu0 %v1109
        %1561 = vmatpush1.bf16.msra.mxu0 %v1108
        %1562 = vmatprep.subr.bf16.mxu0 %v1111
        %1563 = vmatpush1.bf16.msra.mxu0 %v1110
        %1564 = vmatprep.subr.bf16.mxu0 %v1113
        %1565 = vmatpush1.bf16.msra.mxu0 %v1112
        %1566 = vmatprep.subr.bf16.mxu0 %v1115
        %1567 = vmatpush1.bf16.msra.mxu0 %v1114
        %1568 = vmatprep.subr.bf16.mxu0 %v1117
        %1569 = vmatpush1.bf16.msra.mxu0 %v1116
        %1570 = vmatprep.subr.bf16.mxu0 0
        %1571 = vmatpush1.bf16.msra.mxu0 0
        %1572 = vmatprep.subr.bf16.mxu0 0
        %1573 = vmatpush1.bf16.msra.mxu0 0
        %1574 = vmatprep.subr.bf16.mxu0 0
        %1575 = vmatpush1.bf16.msra.mxu0 0
        %1576 = vmatprep.subr.bf16.mxu0 0
        %1577 = vmatpush1.bf16.msra.mxu0 0
        %1578 = vmatprep.subr.bf16.mxu0 0
        %1579 = vmatpush1.bf16.msra.mxu0 0
        %1580 = vmatprep.subr.bf16.mxu0 0
        %1581 = vmatpush1.bf16.msra.mxu0 0
        %1582 = vmatprep.subr.bf16.mxu0 0
        %1583 = vmatpush1.bf16.msra.mxu0 0
        %1584 = vmatprep.subr.bf16.mxu0 0
        %1585 = vmatpush1.bf16.msra.mxu0 0
        %1586 = vmatprep.mubr.bf16.mxu0 0
        %1587 = vmatmul.mubr.bf16.gmra.mrb[0].mxu0 %v1553
        %v1588 = vpop.f32.mrb[0].mxu0
        %v1589 = vadd.f32 0.0, %v1588
        %v1590 = vpop.f32.mrb[0].mxu0
        %v1591 = vadd.f32 0.0, %v1590
        %v1592 = vpop.f32.mrb[0].mxu0
        %v1593 = vpop.f32.mrb[0].mxu0
        %1594 = vdwg.mxu0
        %v1595 = vadd.f32 %v941, %v1589
        %v1596 = vxor.u32 %v1595, 2147483648
        %v1597 = vmul.f32 %v1596, 1.442695
        %v1598 = vpow.pop %v1597
        %v1599 = vadd.f32 %v1598, 1.0
        %v1600 = vrcp.pop %v1599
        %v1601 = vmul.f32 1.0, %v1600
        %v1602 = vadd.f32 %v943, %v1591
        %v1603 = vxor.u32 %v1602, 2147483648
        %v1604 = vmul.f32 %v1603, 1.442695
        %v1605 = vpow.pop %v1604
        %v1606 = vadd.f32 %v1605, 1.0
        %v1607 = vrcp.pop %v1606
        %v1608 = vmul.f32 1.0, %v1607
        %v1609 = vmul.f32 %v1608, %v1552
        %v1610 = vpack.c.bf16 %v1609, %v1609
        %1611 = vmatprep.subr.bf16.mxu0 0
        %1612 = vmatpush1.bf16.msra.mxu0 %v1223
        %1613 = vmatprep.subr.bf16.mxu0 0
        %1614 = vmatpush1.bf16.msra.mxu0 %v1224
        %1615 = vmatprep.subr.bf16.mxu0 0
        %1616 = vmatpush1.bf16.msra.mxu0 %v1225
        %1617 = vmatprep.subr.bf16.mxu0 0
        %1618 = vmatpush1.bf16.msra.mxu0 %v1226
        %1619 = vmatprep.subr.bf16.mxu0 0
        %1620 = vmatpush1.bf16.msra.mxu0 %v1227
        %1621 = vmatprep.subr.bf16.mxu0 0
        %1622 = vmatpush1.bf16.msra.mxu0 %v1228
        %1623 = vmatprep.subr.bf16.mxu0 0
        %1624 = vmatpush1.bf16.msra.mxu0 %v1229
        %1625 = vmatprep.subr.bf16.mxu0 0
        %1626 = vmatpush1.bf16.msra.mxu0 %v1230
        %1627 = vmatprep.subr.bf16.mxu0 0
        %1628 = vmatpush1.bf16.msra.mxu0 0
        %1629 = vmatprep.subr.bf16.mxu0 0
        %1630 = vmatpush1.bf16.msra.mxu0 0
        %1631 = vmatprep.subr.bf16.mxu0 0
        %1632 = vmatpush1.bf16.msra.mxu0 0
        %1633 = vmatprep.subr.bf16.mxu0 0
        %1634 = vmatpush1.bf16.msra.mxu0 0
        %1635 = vmatprep.subr.bf16.mxu0 0
        %1636 = vmatpush1.bf16.msra.mxu0 0
        %1637 = vmatprep.subr.bf16.mxu0 0
        %1638 = vmatpush1.bf16.msra.mxu0 0
        %1639 = vmatprep.subr.bf16.mxu0 0
        %1640 = vmatpush1.bf16.msra.mxu0 0
        %1641 = vmatprep.subr.bf16.mxu0 0
        %1642 = vmatpush1.bf16.msra.mxu0 0
        %1643 = vmatprep.mubr.bf16.mxu0 0
        %1644 = vmatmul.mubr.bf16.gmra.mrb[0].mxu0 %v1610
        %v1645 = vpop.f32.mrb[0].mxu0
        %v1646 = vadd.f32 %v1011, %v1645
        %v1647 = vpop.f32.mrb[0].mxu0
        %v1648 = vpop.f32.mrb[0].mxu0
        %v1649 = vpop.f32.mrb[0].mxu0
        %1650 = vdwg.mxu0
        %v1651 = vtanh.pop %v1646
        %v1652 = vsub.f32 %v1651, %v1552
        %v1653 = vmul.f32 %v1601, %v1652
        %v1654 = vadd.f32 %v1552, %v1653
        %s1655 = sadd.s32 %s1283, 3
        %p1656 = scmp.lt.s32.totalorder %s1655, 10
        %s1657 = scalar_select %p1656, 1, 0
        %v1658 = vstv %s1657
        %vm1659 = vcmp.eq.s32.totalorder %v1658, 1
        %v1660 = vsel %vm1659, %v1654, %v1536
        %1661 = vst [vmem:[#allocation2 + $0x18] sm:$0xff] %v1660
        %1662 = vadd.xlane.f32.xlu0 %v1660
        %v1663 = vpop.xlane.xlu0 %1662
        %v1664 = vmul.f32 %v1663, 0.03125
        %v1665 = vmul.f32 %v1660, %v1660
        %1666 = vadd.xlane.f32.xlu0 %v1665
        %v1667 = vpop.xlane.xlu0 %1666
        %v1668 = vmul.f32 %v1667, 0.03125
        %v1669 = vmul.f32 %v1664, %v1664
        %v1670 = vsub.f32 %v1668, %v1669
        %v1671 = vsub.f32 %v1660, %v1664
        %v1672 = vadd.f32 %v1670, 1e-05
        %v1673 = vrsqrt.pop %v1672
        %v1674 = vmul.f32 %v1671, %v1673
        %v1675 = vmul.f32 %v1674, %v1046
        %v1676 = vadd.f32 %v1675, %v1051
        %v1677 = vpack.c.bf16 %v1676, %v1676
        %1678 = vmatprep.subr.bf16.mxu0 %v1103
        %1679 = vmatpush1.bf16.msra.mxu0 %v1102
        %1680 = vmatprep.subr.bf16.mxu0 %v1105
        %1681 = vmatpush1.bf16.msra.mxu0 %v1104
        %1682 = vmatprep.subr.bf16.mxu0 %v1107
        %1683 = vmatpush1.bf16.msra.mxu0 %v1106
        %1684 = vmatprep.subr.bf16.mxu0 %v1109
        %1685 = vmatpush1.bf16.msra.mxu0 %v1108
        %1686 = vmatprep.subr.bf16.mxu0 %v1111
        %1687 = vmatpush1.bf16.msra.mxu0 %v1110
        %1688 = vmatprep.subr.bf16.mxu0 %v1113
        %1689 = vmatpush1.bf16.msra.mxu0 %v1112
        %1690 = vmatprep.subr.bf16.mxu0 %v1115
        %1691 = vmatpush1.bf16.msra.mxu0 %v1114
        %1692 = vmatprep.subr.bf16.mxu0 %v1117
        %1693 = vmatpush1.bf16.msra.mxu0 %v1116
        %1694 = vmatprep.subr.bf16.mxu0 0
        %1695 = vmatpush1.bf16.msra.mxu0 0
        %1696 = vmatprep.subr.bf16.mxu0 0
        %1697 = vmatpush1.bf16.msra.mxu0 0
        %1698 = vmatprep.subr.bf16.mxu0 0
        %1699 = vmatpush1.bf16.msra.mxu0 0
        %1700 = vmatprep.subr.bf16.mxu0 0
        %1701 = vmatpush1.bf16.msra.mxu0 0
        %1702 = vmatprep.subr.bf16.mxu0 0
        %1703 = vmatpush1.bf16.msra.mxu0 0
        %1704 = vmatprep.subr.bf16.mxu0 0
        %1705 = vmatpush1.bf16.msra.mxu0 0
        %1706 = vmatprep.subr.bf16.mxu0 0
        %1707 = vmatpush1.bf16.msra.mxu0 0
        %1708 = vmatprep.subr.bf16.mxu0 0
        %1709 = vmatpush1.bf16.msra.mxu0 0
        %1710 = vmatprep.mubr.bf16.mxu0 0
        %1711 = vmatmul.mubr.bf16.gmra.mrb[0].mxu0 %v1677
        %v1712 = vpop.f32.mrb[0].mxu0
        %v1713 = vadd.f32 0.0, %v1712
        %v1714 = vpop.f32.mrb[0].mxu0
        %v1715 = vadd.f32 0.0, %v1714
        %v1716 = vpop.f32.mrb[0].mxu0
        %v1717 = vpop.f32.mrb[0].mxu0
        %1718 = vdwg.mxu0
        %v1719 = vadd.f32 %v947, %v1713
        %v1720 = vxor.u32 %v1719, 2147483648
        %v1721 = vmul.f32 %v1720, 1.442695
        %v1722 = vpow.pop %v1721
        %v1723 = vadd.f32 %v1722, 1.0
        %v1724 = vrcp.pop %v1723
        %v1725 = vmul.f32 1.0, %v1724
        %v1726 = vadd.f32 %v949, %v1715
        %v1727 = vxor.u32 %v1726, 2147483648
        %v1728 = vmul.f32 %v1727, 1.442695
        %v1729 = vpow.pop %v1728
        %v1730 = vadd.f32 %v1729, 1.0
        %v1731 = vrcp.pop %v1730
        %v1732 = vmul.f32 1.0, %v1731
        %v1733 = vmul.f32 %v1732, %v1676
        %v1734 = vpack.c.bf16 %v1733, %v1733
        %1735 = vmatprep.subr.bf16.mxu0 0
        %1736 = vmatpush1.bf16.msra.mxu0 %v1223
        %1737 = vmatprep.subr.bf16.mxu0 0
        %1738 = vmatpush1.bf16.msra.mxu0 %v1224
        %1739 = vmatprep.subr.bf16.mxu0 0
        %1740 = vmatpush1.bf16.msra.mxu0 %v1225
        %1741 = vmatprep.subr.bf16.mxu0 0
        %1742 = vmatpush1.bf16.msra.mxu0 %v1226
        %1743 = vmatprep.subr.bf16.mxu0 0
        %1744 = vmatpush1.bf16.msra.mxu0 %v1227
        %1745 = vmatprep.subr.bf16.mxu0 0
        %1746 = vmatpush1.bf16.msra.mxu0 %v1228
        %1747 = vmatprep.subr.bf16.mxu0 0
        %1748 = vmatpush1.bf16.msra.mxu0 %v1229
        %1749 = vmatprep.subr.bf16.mxu0 0
        %1750 = vmatpush1.bf16.msra.mxu0 %v1230
        %1751 = vmatprep.subr.bf16.mxu0 0
        %1752 = vmatpush1.bf16.msra.mxu0 0
        %1753 = vmatprep.subr.bf16.mxu0 0
        %1754 = vmatpush1.bf16.msra.mxu0 0
        %1755 = vmatprep.subr.bf16.mxu0 0
        %1756 = vmatpush1.bf16.msra.mxu0 0
        %1757 = vmatprep.subr.bf16.mxu0 0
        %1758 = vmatpush1.bf16.msra.mxu0 0
        %1759 = vmatprep.subr.bf16.mxu0 0
        %1760 = vmatpush1.bf16.msra.mxu0 0
        %1761 = vmatprep.subr.bf16.mxu0 0
        %1762 = vmatpush1.bf16.msra.mxu0 0
        %1763 = vmatprep.subr.bf16.mxu0 0
        %1764 = vmatpush1.bf16.msra.mxu0 0
        %1765 = vmatprep.subr.bf16.mxu0 0
        %1766 = vmatpush1.bf16.msra.mxu0 0
        %1767 = vmatprep.mubr.bf16.mxu0 0
        %1768 = vmatmul.mubr.bf16.gmra.mrb[0].mxu0 %v1734
        %v1769 = vpop.f32.mrb[0].mxu0
        %v1770 = vadd.f32 %v1016, %v1769
        %v1771 = vpop.f32.mrb[0].mxu0
        %v1772 = vpop.f32.mrb[0].mxu0
        %v1773 = vpop.f32.mrb[0].mxu0
        %1774 = vdwg.mxu0
        %v1775 = vtanh.pop %v1770
        %v1776 = vsub.f32 %v1775, %v1676
        %v1777 = vmul.f32 %v1725, %v1776
        %v1778 = vadd.f32 %v1676, %v1777
        %s1779 = sadd.s32 %s1283, 4
        %p1780 = scmp.lt.s32.totalorder %s1779, 10
        %s1781 = scalar_select %p1780, 1, 0
        %v1782 = vstv %s1781
        %vm1783 = vcmp.eq.s32.totalorder %v1782, 1
        %v1784 = vsel %vm1783, %v1778, %v1660
        %1785 = vst [vmem:[#allocation2 + $0x20] sm:$0xff] %v1784
        %1786 = vadd.xlane.f32.xlu0 %v1784
        %v1787 = vpop.xlane.xlu0 %1786
        %v1788 = vmul.f32 %v1787, 0.03125
        %v1789 = vmul.f32 %v1784, %v1784
        %1790 = vadd.xlane.f32.xlu0 %v1789
        %v1791 = vpop.xlane.xlu0 %1790
        %v1792 = vmul.f32 %v1791, 0.03125
        %v1793 = vmul.f32 %v1788, %v1788
        %v1794 = vsub.f32 %v1792, %v1793
        %v1795 = vsub.f32 %v1784, %v1788
        %v1796 = vadd.f32 %v1794, 1e-05
        %v1797 = vrsqrt.pop %v1796
        %v1798 = vmul.f32 %v1795, %v1797
        %v1799 = vmul.f32 %v1798, %v1046
        %v1800 = vadd.f32 %v1799, %v1051
        %v1801 = vpack.c.bf16 %v1800, %v1800
        %1802 = vmatprep.subr.bf16.mxu0 %v1103
        %1803 = vmatpush1.bf16.msra.mxu0 %v1102
        %1804 = vmatprep.subr.bf16.mxu0 %v1105
        %1805 = vmatpush1.bf16.msra.mxu0 %v1104
        %1806 = vmatprep.subr.bf16.mxu0 %v1107
        %1807 = vmatpush1.bf16.msra.mxu0 %v1106
        %1808 = vmatprep.subr.bf16.mxu0 %v1109
        %1809 = vmatpush1.bf16.msra.mxu0 %v1108
        %1810 = vmatprep.subr.bf16.mxu0 %v1111
        %1811 = vmatpush1.bf16.msra.mxu0 %v1110
        %1812 = vmatprep.subr.bf16.mxu0 %v1113
        %1813 = vmatpush1.bf16.msra.mxu0 %v1112
        %1814 = vmatprep.subr.bf16.mxu0 %v1115
        %1815 = vmatpush1.bf16.msra.mxu0 %v1114
        %1816 = vmatprep.subr.bf16.mxu0 %v1117
        %1817 = vmatpush1.bf16.msra.mxu0 %v1116
        %1818 = vmatprep.subr.bf16.mxu0 0
        %1819 = vmatpush1.bf16.msra.mxu0 0
        %1820 = vmatprep.subr.bf16.mxu0 0
        %1821 = vmatpush1.bf16.msra.mxu0 0
        %1822 = vmatprep.subr.bf16.mxu0 0
        %1823 = vmatpush1.bf16.msra.mxu0 0
        %1824 = vmatprep.subr.bf16.mxu0 0
        %1825 = vmatpush1.bf16.msra.mxu0 0
        %1826 = vmatprep.subr.bf16.mxu0 0
        %1827 = vmatpush1.bf16.msra.mxu0 0
        %1828 = vmatprep.subr.bf16.mxu0 0
        %1829 = vmatpush1.bf16.msra.mxu0 0
        %1830 = vmatprep.subr.bf16.mxu0 0
        %1831 = vmatpush1.bf16.msra.mxu0 0
        %1832 = vmatprep.subr.bf16.mxu0 0
        %1833 = vmatpush1.bf16.msra.mxu0 0
        %1834 = vmatprep.mubr.bf16.mxu0 0
        %1835 = vmatmul.mubr.bf16.gmra.mrb[0].mxu0 %v1801
        %v1836 = vpop.f32.mrb[0].mxu0
        %v1837 = vadd.f32 0.0, %v1836
        %v1838 = vpop.f32.mrb[0].mxu0
        %v1839 = vadd.f32 0.0, %v1838
        %v1840 = vpop.f32.mrb[0].mxu0
        %v1841 = vpop.f32.mrb[0].mxu0
        %1842 = vdwg.mxu0
        %v1843 = vadd.f32 %v951, %v1837
        %v1844 = vxor.u32 %v1843, 2147483648
        %v1845 = vmul.f32 %v1844, 1.442695
        %v1846 = vpow.pop %v1845
        %v1847 = vadd.f32 %v1846, 1.0
        %v1848 = vrcp.pop %v1847
        %v1849 = vmul.f32 1.0, %v1848
        %v1850 = vadd.f32 %v953, %v1839
        %v1851 = vxor.u32 %v1850, 2147483648
        %v1852 = vmul.f32 %v1851, 1.442695
        %v1853 = vpow.pop %v1852
        %v1854 = vadd.f32 %v1853, 1.0
        %v1855 = vrcp.pop %v1854
        %v1856 = vmul.f32 1.0, %v1855
        %v1857 = vmul.f32 %v1856, %v1800
        %v1858 = vpack.c.bf16 %v1857, %v1857
        %1859 = vmatprep.subr.bf16.mxu0 0
        %1860 = vmatpush1.bf16.msra.mxu0 %v1223
        %1861 = vmatprep.subr.bf16.mxu0 0
        %1862 = vmatpush1.bf16.msra.mxu0 %v1224
        %1863 = vmatprep.subr.bf16.mxu0 0
        %1864 = vmatpush1.bf16.msra.mxu0 %v1225
        %1865 = vmatprep.subr.bf16.mxu0 0
        %1866 = vmatpush1.bf16.msra.mxu0 %v1226
        %1867 = vmatprep.subr.bf16.mxu0 0
        %1868 = vmatpush1.bf16.msra.mxu0 %v1227
        %1869 = vmatprep.subr.bf16.mxu0 0
        %1870 = vmatpush1.bf16.msra.mxu0 %v1228
        %1871 = vmatprep.subr.bf16.mxu0 0
        %1872 = vmatpush1.bf16.msra.mxu0 %v1229
        %1873 = vmatprep.subr.bf16.mxu0 0
        %1874 = vmatpush1.bf16.msra.mxu0 %v1230
        %1875 = vmatprep.subr.bf16.mxu0 0
        %1876 = vmatpush1.bf16.msra.mxu0 0
        %1877 = vmatprep.subr.bf16.mxu0 0
        %1878 = vmatpush1.bf16.msra.mxu0 0
        %1879 = vmatprep.subr.bf16.mxu0 0
        %1880 = vmatpush1.bf16.msra.mxu0 0
        %1881 = vmatprep.subr.bf16.mxu0 0
        %1882 = vmatpush1.bf16.msra.mxu0 0
        %1883 = vmatprep.subr.bf16.mxu0 0
        %1884 = vmatpush1.bf16.msra.mxu0 0
        %1885 = vmatprep.subr.bf16.mxu0 0
        %1886 = vmatpush1.bf16.msra.mxu0 0
        %1887 = vmatprep.subr.bf16.mxu0 0
        %1888 = vmatpush1.bf16.msra.mxu0 0
        %1889 = vmatprep.subr.bf16.mxu0 0
        %1890 = vmatpush1.bf16.msra.mxu0 0
        %1891 = vmatprep.mubr.bf16.mxu0 0
        %1892 = vmatmul.mubr.bf16.gmra.mrb[0].mxu0 %v1858
        %v1893 = vpop.f32.mrb[0].mxu0
        %v1894 = vadd.f32 %v1019, %v1893
        %v1895 = vpop.f32.mrb[0].mxu0
        %v1896 = vpop.f32.mrb[0].mxu0
        %v1897 = vpop.f32.mrb[0].mxu0
        %1898 = vdwg.mxu0
        %v1899 = vtanh.pop %v1894
        %v1900 = vsub.f32 %v1899, %v1800
        %v1901 = vmul.f32 %v1849, %v1900
        %v1902 = vadd.f32 %v1800, %v1901
        %s1903 = sadd.s32 %s1283, 5
        %p1904 = scmp.lt.s32.totalorder %s1903, 10
        %s1905 = scalar_select %p1904, 1, 0
        %v1906 = vstv %s1905
        %vm1907 = vcmp.eq.s32.totalorder %v1906, 1
        %v1908 = vsel %vm1907, %v1902, %v1784
        %1909 = vst [vmem:[#allocation2 + $0x28] sm:$0xff] %v1908
        %1910 = vadd.xlane.f32.xlu0 %v1908
        %v1911 = vpop.xlane.xlu0 %1910
        %v1912 = vmul.f32 %v1911, 0.03125
        %v1913 = vmul.f32 %v1908, %v1908
        %1914 = vadd.xlane.f32.xlu0 %v1913
        %v1915 = vpop.xlane.xlu0 %1914
        %v1916 = vmul.f32 %v1915, 0.03125
        %v1917 = vmul.f32 %v1912, %v1912
        %v1918 = vsub.f32 %v1916, %v1917
        %v1919 = vsub.f32 %v1908, %v1912
        %v1920 = vadd.f32 %v1918, 1e-05
        %v1921 = vrsqrt.pop %v1920
        %v1922 = vmul.f32 %v1919, %v1921
        %v1923 = vmul.f32 %v1922, %v1046
        %v1924 = vadd.f32 %v1923, %v1051
        %v1925 = vpack.c.bf16 %v1924, %v1924
        %1926 = vmatprep.subr.bf16.mxu0 %v1103
        %1927 = vmatpush1.bf16.msra.mxu0 %v1102
        %1928 = vmatprep.subr.bf16.mxu0 %v1105
        %1929 = vmatpush1.bf16.msra.mxu0 %v1104
        %1930 = vmatprep.subr.bf16.mxu0 %v1107
        %1931 = vmatpush1.bf16.msra.mxu0 %v1106
        %1932 = vmatprep.subr.bf16.mxu0 %v1109
        %1933 = vmatpush1.bf16.msra.mxu0 %v1108
        %1934 = vmatprep.subr.bf16.mxu0 %v1111
        %1935 = vmatpush1.bf16.msra.mxu0 %v1110
        %1936 = vmatprep.subr.bf16.mxu0 %v1113
        %1937 = vmatpush1.bf16.msra.mxu0 %v1112
        %1938 = vmatprep.subr.bf16.mxu0 %v1115
        %1939 = vmatpush1.bf16.msra.mxu0 %v1114
        %1940 = vmatprep.subr.bf16.mxu0 %v1117
        %1941 = vmatpush1.bf16.msra.mxu0 %v1116
        %1942 = vmatprep.subr.bf16.mxu0 0
        %1943 = vmatpush1.bf16.msra.mxu0 0
        %1944 = vmatprep.subr.bf16.mxu0 0
        %1945 = vmatpush1.bf16.msra.mxu0 0
        %1946 = vmatprep.subr.bf16.mxu0 0
        %1947 = vmatpush1.bf16.msra.mxu0 0
        %1948 = vmatprep.subr.bf16.mxu0 0
        %1949 = vmatpush1.bf16.msra.mxu0 0
        %1950 = vmatprep.subr.bf16.mxu0 0
        %1951 = vmatpush1.bf16.msra.mxu0 0
        %1952 = vmatprep.subr.bf16.mxu0 0
        %1953 = vmatpush1.bf16.msra.mxu0 0
        %1954 = vmatprep.subr.bf16.mxu0 0
        %1955 = vmatpush1.bf16.msra.mxu0 0
        %1956 = vmatprep.subr.bf16.mxu0 0
        %1957 = vmatpush1.bf16.msra.mxu0 0
        %1958 = vmatprep.mubr.bf16.mxu0 0
        %1959 = vmatmul.mubr.bf16.gmra.mrb[0].mxu0 %v1925
        %v1960 = vpop.f32.mrb[0].mxu0
        %v1961 = vadd.f32 0.0, %v1960
        %v1962 = vpop.f32.mrb[0].mxu0
        %v1963 = vadd.f32 0.0, %v1962
        %v1964 = vpop.f32.mrb[0].mxu0
        %v1965 = vpop.f32.mrb[0].mxu0
        %1966 = vdwg.mxu0
        %v1967 = vadd.f32 %v957, %v1961
        %v1968 = vxor.u32 %v1967, 2147483648
        %v1969 = vmul.f32 %v1968, 1.442695
        %v1970 = vpow.pop %v1969
        %v1971 = vadd.f32 %v1970, 1.0
        %v1972 = vrcp.pop %v1971
        %v1973 = vmul.f32 1.0, %v1972
        %v1974 = vadd.f32 %v959, %v1963
        %v1975 = vxor.u32 %v1974, 2147483648
        %v1976 = vmul.f32 %v1975, 1.442695
        %v1977 = vpow.pop %v1976
        %v1978 = vadd.f32 %v1977, 1.0
        %v1979 = vrcp.pop %v1978
        %v1980 = vmul.f32 1.0, %v1979
        %v1981 = vmul.f32 %v1980, %v1924
        %v1982 = vpack.c.bf16 %v1981, %v1981
        %1983 = vmatprep.subr.bf16.mxu0 0
        %1984 = vmatpush1.bf16.msra.mxu0 %v1223
        %1985 = vmatprep.subr.bf16.mxu0 0
        %1986 = vmatpush1.bf16.msra.mxu0 %v1224
        %1987 = vmatprep.subr.bf16.mxu0 0
        %1988 = vmatpush1.bf16.msra.mxu0 %v1225
        %1989 = vmatprep.subr.bf16.mxu0 0
        %1990 = vmatpush1.bf16.msra.mxu0 %v1226
        %1991 = vmatprep.subr.bf16.mxu0 0
        %1992 = vmatpush1.bf16.msra.mxu0 %v1227
        %1993 = vmatprep.subr.bf16.mxu0 0
        %1994 = vmatpush1.bf16.msra.mxu0 %v1228
        %1995 = vmatprep.subr.bf16.mxu0 0
        %1996 = vmatpush1.bf16.msra.mxu0 %v1229
        %1997 = vmatprep.subr.bf16.mxu0 0
        %1998 = vmatpush1.bf16.msra.mxu0 %v1230
        %1999 = vmatprep.subr.bf16.mxu0 0
        %2000 = vmatpush1.bf16.msra.mxu0 0
        %2001 = vmatprep.subr.bf16.mxu0 0
        %2002 = vmatpush1.bf16.msra.mxu0 0
        %2003 = vmatprep.subr.bf16.mxu0 0
        %2004 = vmatpush1.bf16.msra.mxu0 0
        %2005 = vmatprep.subr.bf16.mxu0 0
        %2006 = vmatpush1.bf16.msra.mxu0 0
        %2007 = vmatprep.subr.bf16.mxu0 0
        %2008 = vmatpush1.bf16.msra.mxu0 0
        %2009 = vmatprep.subr.bf16.mxu0 0
        %2010 = vmatpush1.bf16.msra.mxu0 0
        %2011 = vmatprep.subr.bf16.mxu0 0
        %2012 = vmatpush1.bf16.msra.mxu0 0
        %2013 = vmatprep.subr.bf16.mxu0 0
        %2014 = vmatpush1.bf16.msra.mxu0 0
        %2015 = vmatprep.mubr.bf16.mxu0 0
        %2016 = vmatmul.mubr.bf16.gmra.mrb[0].mxu0 %v1982
        %v2017 = vpop.f32.mrb[0].mxu0
        %v2018 = vadd.f32 %v1024, %v2017
        %v2019 = vpop.f32.mrb[0].mxu0
        %v2020 = vpop.f32.mrb[0].mxu0
        %v2021 = vpop.f32.mrb[0].mxu0
        %2022 = vdwg.mxu0
        %v2023 = vtanh.pop %v2018
        %v2024 = vsub.f32 %v2023, %v1924
        %v2025 = vmul.f32 %v1973, %v2024
        %v2026 = vadd.f32 %v1924, %v2025
        %s2027 = sadd.s32 %s1283, 6
        %p2028 = scmp.lt.s32.totalorder %s2027, 10
        %s2029 = scalar_select %p2028, 1, 0
        %v2030 = vstv %s2029
        %vm2031 = vcmp.eq.s32.totalorder %v2030, 1
        %v2032 = vsel %vm2031, %v2026, %v1908
        %2033 = vst [vmem:[#allocation2 + $0x30] sm:$0xff] %v2032
        %2034 = vadd.xlane.f32.xlu0 %v2032
        %v2035 = vpop.xlane.xlu0 %2034
        %v2036 = vmul.f32 %v2035, 0.03125
        %v2037 = vmul.f32 %v2032, %v2032
        %2038 = vadd.xlane.f32.xlu0 %v2037
        %v2039 = vpop.xlane.xlu0 %2038
        %v2040 = vmul.f32 %v2039, 0.03125
        %v2041 = vmul.f32 %v2036, %v2036
        %v2042 = vsub.f32 %v2040, %v2041
        %v2043 = vsub.f32 %v2032, %v2036
        %v2044 = vadd.f32 %v2042, 1e-05
        %v2045 = vrsqrt.pop %v2044
        %v2046 = vmul.f32 %v2043, %v2045
        %v2047 = vmul.f32 %v2046, %v1046
        %v2048 = vadd.f32 %v2047, %v1051
        %v2049 = vpack.c.bf16 %v2048, %v2048
        %2050 = vmatprep.subr.bf16.mxu0 %v1103
        %2051 = vmatpush1.bf16.msra.mxu0 %v1102
        %2052 = vmatprep.subr.bf16.mxu0 %v1105
        %2053 = vmatpush1.bf16.msra.mxu0 %v1104
        %2054 = vmatprep.subr.bf16.mxu0 %v1107
        %2055 = vmatpush1.bf16.msra.mxu0 %v1106
        %2056 = vmatprep.subr.bf16.mxu0 %v1109
        %2057 = vmatpush1.bf16.msra.mxu0 %v1108
        %2058 = vmatprep.subr.bf16.mxu0 %v1111
        %2059 = vmatpush1.bf16.msra.mxu0 %v1110
        %2060 = vmatprep.subr.bf16.mxu0 %v1113
        %2061 = vmatpush1.bf16.msra.mxu0 %v1112
        %2062 = vmatprep.subr.bf16.mxu0 %v1115
        %2063 = vmatpush1.bf16.msra.mxu0 %v1114
        %2064 = vmatprep.subr.bf16.mxu0 %v1117
        %2065 = vmatpush1.bf16.msra.mxu0 %v1116
        %2066 = vmatprep.subr.bf16.mxu0 0
        %2067 = vmatpush1.bf16.msra.mxu0 0
        %2068 = vmatprep.subr.bf16.mxu0 0
        %2069 = vmatpush1.bf16.msra.mxu0 0
        %2070 = vmatprep.subr.bf16.mxu0 0
        %2071 = vmatpush1.bf16.msra.mxu0 0
        %2072 = vmatprep.subr.bf16.mxu0 0
        %2073 = vmatpush1.bf16.msra.mxu0 0
        %2074 = vmatprep.subr.bf16.mxu0 0
        %2075 = vmatpush1.bf16.msra.mxu0 0
        %2076 = vmatprep.subr.bf16.mxu0 0
        %2077 = vmatpush1.bf16.msra.mxu0 0
        %2078 = vmatprep.subr.bf16.mxu0 0
        %2079 = vmatpush1.bf16.msra.mxu0 0
        %2080 = vmatprep.subr.bf16.mxu0 0
        %2081 = vmatpush1.bf16.msra.mxu0 0
        %2082 = vmatprep.mubr.bf16.mxu0 0
        %2083 = vmatmul.mubr.bf16.gmra.mrb[0].mxu0 %v2049
        %v2084 = vpop.f32.mrb[0].mxu0
        %v2085 = vadd.f32 0.0, %v2084
        %v2086 = vpop.f32.mrb[0].mxu0
        %v2087 = vadd.f32 0.0, %v2086
        %v2088 = vpop.f32.mrb[0].mxu0
        %v2089 = vpop.f32.mrb[0].mxu0
        %2090 = vdwg.mxu0
        %v2091 = vadd.f32 %v961, %v2085
        %v2092 = vxor.u32 %v2091, 2147483648
        %v2093 = vmul.f32 %v2092, 1.442695
        %v2094 = vpow.pop %v2093
        %v2095 = vadd.f32 %v2094, 1.0
        %v2096 = vrcp.pop %v2095
        %v2097 = vmul.f32 1.0, %v2096
        %v2098 = vadd.f32 %v963, %v2087
        %v2099 = vxor.u32 %v2098, 2147483648
        %v2100 = vmul.f32 %v2099, 1.442695
        %v2101 = vpow.pop %v2100
        %v2102 = vadd.f32 %v2101, 1.0
        %v2103 = vrcp.pop %v2102
        %v2104 = vmul.f32 1.0, %v2103
        %v2105 = vmul.f32 %v2104, %v2048
        %v2106 = vpack.c.bf16 %v2105, %v2105
        %2107 = vmatprep.subr.bf16.mxu0 0
        %2108 = vmatpush1.bf16.msra.mxu0 %v1223
        %2109 = vmatprep.subr.bf16.mxu0 0
        %2110 = vmatpush1.bf16.msra.mxu0 %v1224
        %2111 = vmatprep.subr.bf16.mxu0 0
        %2112 = vmatpush1.bf16.msra.mxu0 %v1225
        %2113 = vmatprep.subr.bf16.mxu0 0
        %2114 = vmatpush1.bf16.msra.mxu0 %v1226
        %2115 = vmatprep.subr.bf16.mxu0 0
        %2116 = vmatpush1.bf16.msra.mxu0 %v1227
        %2117 = vmatprep.subr.bf16.mxu0 0
        %2118 = vmatpush1.bf16.msra.mxu0 %v1228
        %2119 = vmatprep.subr.bf16.mxu0 0
        %2120 = vmatpush1.bf16.msra.mxu0 %v1229
        %2121 = vmatprep.subr.bf16.mxu0 0
        %2122 = vmatpush1.bf16.msra.mxu0 %v1230
        %2123 = vmatprep.subr.bf16.mxu0 0
        %2124 = vmatpush1.bf16.msra.mxu0 0
        %2125 = vmatprep.subr.bf16.mxu0 0
        %2126 = vmatpush1.bf16.msra.mxu0 0
        %2127 = vmatprep.subr.bf16.mxu0 0
        %2128 = vmatpush1.bf16.msra.mxu0 0
        %2129 = vmatprep.subr.bf16.mxu0 0
        %2130 = vmatpush1.bf16.msra.mxu0 0
        %2131 = vmatprep.subr.bf16.mxu0 0
        %2132 = vmatpush1.bf16.msra.mxu0 0
        %2133 = vmatprep.subr.bf16.mxu0 0
        %2134 = vmatpush1.bf16.msra.mxu0 0
        %2135 = vmatprep.subr.bf16.mxu0 0
        %2136 = vmatpush1.bf16.msra.mxu0 0
        %2137 = vmatprep.subr.bf16.mxu0 0
        %2138 = vmatpush1.bf16.msra.mxu0 0
        %2139 = vmatprep.mubr.bf16.mxu0 0
        %2140 = vmatmul.mubr.bf16.gmra.mrb[0].mxu0 %v2106
        %v2141 = vpop.f32.mrb[0].mxu0
        %v2142 = vadd.f32 %v1027, %v2141
        %v2143 = vpop.f32.mrb[0].mxu0
        %v2144 = vpop.f32.mrb[0].mxu0
        %v2145 = vpop.f32.mrb[0].mxu0
        %2146 = vdwg.mxu0
        %v2147 = vtanh.pop %v2142
        %v2148 = vsub.f32 %v2147, %v2048
        %v2149 = vmul.f32 %v2097, %v2148
        %v2150 = vadd.f32 %v2048, %v2149
        %s2151 = sadd.s32 %s1283, 7
        %p2152 = scmp.lt.s32.totalorder %s2151, 10
        %s2153 = scalar_select %p2152, 1, 0
        %v2154 = vstv %s2153
        %vm2155 = vcmp.eq.s32.totalorder %v2154, 1
        %v2156 = vsel %vm2155, %v2150, %v2032
        %2157 = vst [vmem:[#allocation2 + $0x38] sm:$0xff] %v2156
        %2158 = vst [vmem:[%s528] sm:$0xff] %v2156
        %v2159 = vld [vmem:[#allocation2] sm:$0xff]
        %v2160 = vld [vmem:[#allocation2 + $0x8] sm:$0xff]
        %v2161 = vld [vmem:[#allocation2 + $0x10] sm:$0xff]
        %v2162 = vld [vmem:[#allocation2 + $0x18] sm:$0xff]
        %v2163 = vld [vmem:[#allocation2 + $0x20] sm:$0xff]
        %v2164 = vld [vmem:[#allocation2 + $0x28] sm:$0xff]
        %v2165 = vld [vmem:[#allocation2 + $0x30] sm:$0xff]
        %v2166 = vld [vmem:[#allocation2 + $0x38] sm:$0xff]
        %v2167 = vpack.c.bf16 %v2160, %v2159
        %v2168 = vpack.c.bf16 %v2162, %v2161
        %v2169 = vpack.c.bf16 %v2164, %v2163
        %v2170 = vpack.c.bf16 %v2166, %v2165
        %v2171 = vld [vmem:[#allocation12] sm:$0xf]
        %v2172 = vld [vmem:[#allocation12 + $0x4] sm:$0xf]
        %v2173 = vld [vmem:[#allocation12 + $0x8] sm:$0xf]
        %v2174 = vld [vmem:[#allocation12 + $0xc] sm:$0xf]
        %v2175 = vld [vmem:[#allocation12 + $0x10] sm:$0xf]
        %v2176 = vld [vmem:[#allocation12 + $0x14] sm:$0xf]
        %v2177 = vld [vmem:[#allocation12 + $0x18] sm:$0xf]
        %v2178 = vld [vmem:[#allocation12 + $0x1c] sm:$0xf]
        %v2179 = vld [vmem:[#allocation12 + $0x20] sm:$0xf]
        %v2180 = vld [vmem:[#allocation12 + $0x24] sm:$0xf]
        %v2181 = vld [vmem:[#allocation12 + $0x28] sm:$0xf]
        %v2182 = vld [vmem:[#allocation12 + $0x2c] sm:$0xf]
        %v2183 = vld [vmem:[#allocation12 + $0x30] sm:$0xf]
        %v2184 = vld [vmem:[#allocation12 + $0x34] sm:$0xf]
        %v2185 = vld [vmem:[#allocation12 + $0x38] sm:$0xf]
        %v2186 = vld [vmem:[#allocation12 + $0x3c] sm:$0xf]
        %v2187 = vld [vmem:[%s9] sm:$0x1]
        %v2189 = vlaneseq
        %v2190 = vshrl.u32 %v2189, 7
        %v2191 = vsub.s32 0, %v2190
        %v2192 = vrot.slane %v2187, %v2191
        %v2210 = vunpack.c.l.b16 %v2171
        %v2211 = vunpack.c.l.b16 %v2172
        %v2212 = vunpack.c.l.b16 %v2173
        %v2213 = vunpack.c.l.b16 %v2174
        %v2214 = vunpack.c.l.b16 %v2175
        %v2215 = vunpack.c.l.b16 %v2176
        %v2216 = vunpack.c.l.b16 %v2177
        %v2217 = vunpack.c.l.b16 %v2178
        %v2218 = vunpack.c.l.b16 %v2179
        %v2219 = vunpack.c.l.b16 %v2180
        %v2220 = vunpack.c.l.b16 %v2181
        %v2221 = vunpack.c.l.b16 %v2182
        %v2222 = vunpack.c.l.b16 %v2183
        %v2223 = vunpack.c.l.b16 %v2184
        %v2224 = vunpack.c.l.b16 %v2185
        %v2225 = vunpack.c.l.b16 %v2186
        %v2226 = vpack.c.b16 %v2211, %v2210
        %v2227 = vpack.c.b16 %v2213, %v2212
        %v2228 = vpack.c.b16 %v2215, %v2214
        %v2229 = vpack.c.b16 %v2217, %v2216
        %v2230 = vpack.c.b16 %v2219, %v2218
        %v2231 = vpack.c.b16 %v2221, %v2220
        %v2232 = vpack.c.b16 %v2223, %v2222
        %v2233 = vpack.c.b16 %v2225, %v2224
        %2242 = vmatprep.subr.bf16.mxu0 0
        %2243 = vmatpush1.bf16.msra.mxu0 %v2226
        %2244 = vmatprep.subr.bf16.mxu0 0
        %2245 = vmatpush1.bf16.msra.mxu0 %v2227
        %2246 = vmatprep.subr.bf16.mxu0 0
        %2247 = vmatpush1.bf16.msra.mxu0 %v2228
        %2248 = vmatprep.subr.bf16.mxu0 0
        %2249 = vmatpush1.bf16.msra.mxu0 %v2229
        %2250 = vmatprep.subr.bf16.mxu0 0
        %2251 = vmatpush1.bf16.msra.mxu0 %v2230
        %2252 = vmatprep.subr.bf16.mxu0 0
        %2253 = vmatpush1.bf16.msra.mxu0 %v2231
        %2254 = vmatprep.subr.bf16.mxu0 0
        %2255 = vmatpush1.bf16.msra.mxu0 %v2232
        %2256 = vmatprep.subr.bf16.mxu0 0
        %2257 = vmatpush1.bf16.msra.mxu0 %v2233
        %2258 = vmatprep.subr.bf16.mxu0 0
        %2259 = vmatpush1.bf16.msra.mxu0 0
        %2260 = vmatprep.subr.bf16.mxu0 0
        %2261 = vmatpush1.bf16.msra.mxu0 0
        %2262 = vmatprep.subr.bf16.mxu0 0
        %2263 = vmatpush1.bf16.msra.mxu0 0
        %2264 = vmatprep.subr.bf16.mxu0 0
        %2265 = vmatpush1.bf16.msra.mxu0 0
        %2266 = vmatprep.subr.bf16.mxu0 0
        %2267 = vmatpush1.bf16.msra.mxu0 0
        %2268 = vmatprep.subr.bf16.mxu0 0
        %2269 = vmatpush1.bf16.msra.mxu0 0
        %2270 = vmatprep.subr.bf16.mxu0 0
        %2271 = vmatpush1.bf16.msra.mxu0 0
        %2272 = vmatprep.subr.bf16.mxu0 0
        %2273 = vmatpush1.bf16.msra.mxu0 0
        %2274 = vmatprep.mubr.bf16.mxu0 0
        %2275 = vmatmul.mubr.bf16.gmra.mrb[0].mxu0 %v2167
        %v2276 = vpop.f32.mrb[0].mxu0
        %v2277 = vadd.f32 %v2192, %v2276
        %v2278 = vpop.f32.mrb[0].mxu0
        %v2279 = vpop.f32.mrb[0].mxu0
        %v2280 = vadd.f32 %v2192, %v2279
        %v2281 = vpop.f32.mrb[0].mxu0
        %2282 = vmatprep.mubr.bf16.mxu0 0
        %2283 = vmatmul.mubr.bf16.gmra.mrb[0].mxu0 %v2168
        %v2284 = vpop.f32.mrb[0].mxu0
        %v2285 = vadd.f32 %v2192, %v2284
        %v2286 = vpop.f32.mrb[0].mxu0
        %v2287 = vpop.f32.mrb[0].mxu0
        %v2288 = vadd.f32 %v2192, %v2287
        %v2289 = vpop.f32.mrb[0].mxu0
        %2290 = vmatprep.mubr.bf16.mxu0 0
        %2291 = vmatmul.mubr.bf16.gmra.mrb[0].mxu0 %v2169
        %v2292 = vpop.f32.mrb[0].mxu0
        %v2293 = vadd.f32 %v2192, %v2292
        %v2294 = vpop.f32.mrb[0].mxu0
        %v2295 = vpop.f32.mrb[0].mxu0
        %v2296 = vadd.f32 %v2192, %v2295
        %v2297 = vpop.f32.mrb[0].mxu0
        %2298 = vmatprep.mubr.bf16.mxu0 0
        %2299 = vmatmul.mubr.bf16.gmra.mrb[0].mxu0 %v2170
        %v2300 = vpop.f32.mrb[0].mxu0
        %v2301 = vadd.f32 %v2192, %v2300
        %v2302 = vpop.f32.mrb[0].mxu0
        %v2303 = vpop.f32.mrb[0].mxu0
        %v2304 = vadd.f32 %v2192, %v2303
        %v2305 = vpop.f32.mrb[0].mxu0
        %2306 = vdwg.mxu0
        %2307 = vst [vmem:[%s521] sm:$0xff] %v2277
        %2308 = vst [vmem:[%s521 + $0x8] sm:$0xff] %v2280
        %2309 = vst [vmem:[%s521 + $0x10] sm:$0xff] %v2285
        %2310 = vst [vmem:[%s521 + $0x18] sm:$0xff] %v2288
        %2311 = vst [vmem:[%s521 + $0x20] sm:$0xff] %v2293
        %2312 = vst [vmem:[%s521 + $0x28] sm:$0xff] %v2296
        %2313 = vst [vmem:[%s521 + $0x30] sm:$0xff] %v2301
        %2314 = vst [vmem:[%s521 + $0x38] sm:$0xff] %v2304
        %s2315 = sand.u32 %s281, 1
        %s2316 = scalar_lea.sflag [#allocation5], %s2315
        %s2317 = sand.u32 %s281, 1
        %s2318 = smul.addr %s2317, 64
        %s2319 = scalar_lea.vmem [#allocation14], %s2318
        %s2320 = sand.u32 %s307, 1
        %s2321 = scalar_lea.sflag [#allocation16], %s2320
        %s2322 = sand.u32 %s307, 1
        %s2323 = smul.addr %s2322, 8
        %s2324 = scalar_lea.vmem [#allocation15], %s2323
        // Predicated region
        $region89: #{tpu_custom_call.1} parent=59 // pred_check
          %p2325 = pneg %p291
        $region90: #{tpu_custom_call.1} parent=59 // pred_check_branch
          %2327 = sbr.rel (%p2325) target = $region92
        $region91: #{tpu_custom_call.1} parent=59 // pred_region
          %s2328 = smul.u32 8, %s42
          %s2330 = ssub.s32 1024, 1024
          %2331 = vsyncadd %s2316, %s2330
          %s2332 = smul.addr %s2328, 2
          %s2333 = sadd.s32 %s41, %s2332
          %s2334 = smul.addr %s2333, 128
          %s2335 = scalar_lea.hbm %s10, %s2334
          %s2336 = sshll.u32 %s2319, 4
          %s2337 = int_to_ptr.vmem [resolvable:$true] %s2336
          %2342 = dma.vmem_to_hbm [thread:$0]  %s2337, 1024, %s2335, %s2316, 128, 256, 8
        $region92: #{tpu_custom_call.1} parent=59 // pred_fallthru
          _
        // Predicated region
        $region93: #{tpu_custom_call.1} parent=59 // pred_check
          %p2343 = pneg %p317
        $region94: #{tpu_custom_call.1} parent=59 // pred_check_branch
          %2345 = sbr.rel (%p2343) target = $region96
        $region95: #{tpu_custom_call.1} parent=59 // pred_region
          %s2347 = ssub.s32 128, 128
          %2348 = vsyncadd %s2321, %s2347
          %s2349 = smul.addr %s41, 128
          %s2350 = scalar_lea.hbm %s11, %s2349
          %s2352 = sshll.u32 %s2324, 4
          %s2353 = int_to_ptr.vmem [resolvable:$true] %s2352
          %2355 = dma.vmem_to_hbm [thread:$0]  %s2353, 128, %s2350, %s2321
        $region96: #{tpu_custom_call.1} parent=59 // pred_fallthru
          _
      $region60: #{tpu_custom_call.1} parent=5 // pred_fallthru
        _
      %p2356 = scmp.le.s32.totalorder 2, %s32
      // Predicated region
      $region97: #{tpu_custom_call.1} parent=5 // pred_check
        %p2357 = pneg %p2356
      $region98: #{tpu_custom_call.1} parent=5 // pred_check_branch
        %2359 = sbr.rel (%p2357) target = $region100
      $region99: #{tpu_custom_call.1} parent=5 // pred_region
        %s2360 = ssub.s32 %s32, 2
        // Predicated region
        $region101: #{tpu_custom_call.1} parent=99 // pred_check
          %p2361 = pneg %p297
        $region102: #{tpu_custom_call.1} parent=99 // pred_check_branch
          %2363 = sbr.rel (%p2361) target = $region104
        $region103: #{tpu_custom_call.1} parent=99 // pred_region
          %s2364 = sand.u32 %s282, 1
          %s2365 = scalar_lea.sflag [#allocation5], %s2364
          %s2366 = sand.u32 %s282, 1
          %s2367 = smul.addr %s2366, 64
          %s2368 = scalar_lea.vmem [#allocation14], %s2367
          %2369 = dma.done %s2365, 1024
        $region104: #{tpu_custom_call.1} parent=99 // pred_fallthru
          _
        // Predicated region
        $region105: #{tpu_custom_call.1} parent=99 // pred_check
          %p2370 = pneg %p323
        $region106: #{tpu_custom_call.1} parent=99 // pred_check_branch
          %2372 = sbr.rel (%p2370) target = $region108
        $region107: #{tpu_custom_call.1} parent=99 // pred_region
          %s2373 = sand.u32 %s308, 1
          %s2374 = scalar_lea.sflag [#allocation16], %s2373
          %s2375 = sand.u32 %s308, 1
          %s2376 = smul.addr %s2375, 8
          %s2377 = scalar_lea.vmem [#allocation15], %s2376
          %2378 = dma.done %s2374, 128
        $region108: #{tpu_custom_call.1} parent=99 // pred_fallthru
          _
      $region100: #{tpu_custom_call.1} parent=5 // pred_fallthru
        _
    $region6: #{tpu_custom_call.1} parent=1 // loop_footer
      %s36 = sadd.s32 1, %s32
    $region7: #{tpu_custom_call.1} parent=1 // loop_footer_branch
      %31 = sbr.rel target = $region3
    $region8: #{tpu_custom_call.1} parent=1 // loop_exit
      _
    %2379 = vsyncpa [#allocation4], 1
    %s2380 = scalar_lea.sflag [#allocation4], 1
    %2381 = vsyncpa %s2380, 1
    %2382 = vsyncpa [#allocation7], 1
    %s2383 = scalar_lea.sflag [#allocation7], 1
    %2384 = vsyncpa %s2383, 1
    %2385 = vsyncpa [#allocation10], 1
    %2386 = vsyncpa [#allocation13], 1
    %2387 = vsyncpa [#allocation5], 1
    %s2388 = scalar_lea.sflag [#allocation5], 1
    %2389 = vsyncpa %s2388, 1
    %2390 = vsyncpa [#allocation16], 1
    %s2391 = scalar_lea.sflag [#allocation16], 1
    %2392 = vsyncpa %s2391, 1

</llo_original>
